<compile_context>
chip_gen: v7x
topology: tpu7x:2x2x1
jax: 0.10.0
libtpu: 0.0.40
codegen_flags: <defaults>
</compile_context>

<pallas_src>
import math
import functools

import jax
import jax.numpy as jnp
from jax.experimental import pallas as pl
from jax.experimental.pallas import tpu as pltpu

EMBED = 32        # embedding_dim
NHEAD = 4
NLAYERS = 2
FF = 2048         # PyTorch TransformerEncoderLayer default dim_feedforward
LN_EPS = 1e-5
BATCH = 2
SEQ = 8
MASK_NEG = -1e30

# rows of the packed per-layer "vecs" operand
_BQ, _BK, _BV, _BO, _B2, _G1, _BN1, _G2, _BN2 = range(9)
NVEC = 9


def _layernorm(x, gamma, beta):
    mean = jnp.mean(x, axis=-1, keepdims=True)
    var = jnp.mean((x - mean) ** 2, axis=-1, keepdims=True)
    return (x - mean) * jax.lax.rsqrt(var + LN_EPS) * gamma + beta


# ------------------------------- fused kernel --------------------------------
def fused_encoder_kernel(
    x_ref, mask_ref, wqkv_ref, wo_ref, w1_ref, w2_ref, vecs_ref, b1_ref,
    out_ref, act_ref, *, nhead,
):
    """One grid step == one TransformerEncoderLayer applied to the whole
    (batch*seq, embed) activation slab. The slab lives in VMEM scratch across
    the layer grid axis; only the last step writes the output block."""
    l = pl.program_id(0)

    @pl.when(l == 0)
    def _():
        act_ref[...] = x_ref[...].astype(jnp.float32)

    x = act_ref[...]                       # (BS, E) f32
    bs, e = x.shape
    dh = e // nhead

    # bf16-stored weights, dequantized once to f32 (DMA is the bottleneck, not casts)
    wqkv = wqkv_ref[0].astype(jnp.float32)   # (E, 3E); Q cols pre-scaled by 1/sqrt(dh)
    wo = wo_ref[0].astype(jnp.float32)       # (E, E)
    w1 = w1_ref[0].astype(jnp.float32)       # (E, FF)
    w2 = w2_ref[0].astype(jnp.float32)       # (FF, E)
    vecs = vecs_ref[0]                       # (NVEC, E) f32, packed biases / LN params
    b1 = b1_ref[0]                           # (1, FF) f32
    mask = mask_ref[...]                     # (BS, BS) additive 0 / -1e30

    def row(i):                              # (1, E) row of the packed vectors
        return vecs[i:i + 1, :]

    # --- self attention (MultiheadAttention, packed in-proj) ---
    qkv = jnp.dot(x, wqkv, preferred_element_type=jnp.float32)   # (BS, 3E)
    q = qkv[:, 0:e] + row(_BQ)               # already includes the 1/sqrt(dh) scale
    k = qkv[:, e:2 * e] + row(_BK)
    v = qkv[:, 2 * e:3 * e] + row(_BV)

    # single reshape-based head split (no per-head lane slicing / stacking)
    qh = q.reshape(bs, nhead, dh).transpose(1, 0, 2)   # (H, BS, dh)
    kh = k.reshape(bs, nhead, dh).transpose(1, 0, 2)
    vh = v.reshape(bs, nhead, dh).transpose(1, 0, 2)

    s = jnp.einsum("hqd,hkd->hqk", qh, kh,
                   preferred_element_type=jnp.float32)           # (H, BS, BS)
    s = s + mask                                                  # block-diagonal mask
    s = s - jnp.max(s, axis=-1, keepdims=True)
    p = jnp.exp(s)
    p = p * pl.reciprocal(jnp.sum(p, axis=-1, keepdims=True), approx=True)

    ctx = jnp.einsum("hqk,hkd->hqd", p, vh,
                     preferred_element_type=jnp.float32)          # (H, BS, dh)
    ctx = ctx.transpose(1, 0, 2).reshape(bs, e)                   # (BS, E)

    attn = jnp.dot(ctx, wo, preferred_element_type=jnp.float32) + row(_BO)

    # residual + norm1 (post-norm)
    x1 = _layernorm(x + attn, row(_G1), row(_BN1))

    # --- feed forward: linear1 -> relu -> linear2 ---
    h1 = jnp.maximum(
        jnp.dot(x1, w1, preferred_element_type=jnp.float32) + b1, 0.0)    # (BS, FF)
    ff = jnp.dot(h1, w2, preferred_element_type=jnp.float32) + row(_B2)   # (BS, E)

    # residual + norm2
    y = _layernorm(x1 + ff, row(_G2), row(_BN2))
    act_ref[...] = y

    @pl.when(l == pl.num_programs(0) - 1)
    def _():
        out_ref[...] = y.astype(out_ref.dtype)


# ------------------------------- packing --------------------------------------
def quantize_params_bf16(params):
    """Round the large matmul weights to bf16 (the kernel's storage format).
    The same rounded values are used by the reference, so the correctness check
    validates the kernel math itself."""
    out = []
    for p in params:
        q = dict(p)
        for name in ("wqkv", "wo", "w1", "w2"):
            q[name] = p[name].astype(jnp.bfloat16).astype(jnp.float32)
        out.append(q)
    return out


def pack_params(params, *, nhead=NHEAD):
    """PyTorch-layout per-layer params -> stacked / pre-transposed / packed kernel
    params. Big weights stored in bf16 (halves weight DMA); the 1/sqrt(dh) softmax
    scale is folded into the Q projection."""
    E = params[0]["wo"].shape[0]
    scale = 1.0 / math.sqrt(E // nhead)

    def wqkv_t(p):
        w = p["wqkv"].T                                    # (E, 3E)
        return jnp.concatenate([w[:, 0:E] * scale, w[:, E:]], axis=1)

    def vec_rows(p):
        bqkv = p["bqkv"][0]
        return jnp.stack([
            bqkv[0:E] * scale, bqkv[E:2 * E], bqkv[2 * E:3 * E],  # q/k/v biases
            p["bo"][0], p["b2"][0],                               # out-proj, linear2
            p["g1"][0], p["bn1"][0], p["g2"][0], p["bn2"][0],     # LayerNorm params
        ], axis=0)                                                # (NVEC, E)

    return {
        "wqkv_t": jnp.stack([wqkv_t(p) for p in params]).astype(jnp.bfloat16),   # (L,E,3E)
        "wo_t":   jnp.stack([p["wo"].T for p in params]).astype(jnp.bfloat16),   # (L,E,E)
        "w1_t":   jnp.stack([p["w1"].T for p in params]).astype(jnp.bfloat16),   # (L,E,FF)
        "w2_t":   jnp.stack([p["w2"].T for p in params]).astype(jnp.bfloat16),   # (L,FF,E)
        "vecs":   jnp.stack([vec_rows(p) for p in params]),                      # (L,NVEC,E)
        "b1":     jnp.stack([p["b1"] for p in params]),                          # (L,1,FF)
    }


def make_attn_mask(batch, seq, dtype=jnp.float32):
    """Additive block-diagonal mask: tokens attend only within their own batch elem."""
    bs = batch * seq
    row_b = jnp.arange(bs)[:, None] // seq
    col_b = jnp.arange(bs)[None, :] // seq
    return jnp.where(row_b == col_b, 0.0, MASK_NEG).astype(dtype)


# ------------------------------- wrapper --------------------------------------
def transformer_memory_update(memory_states, packed, *, nhead=NHEAD):
    """memory_states: (batch, seq, embed) -> (batch, seq, embed). Single fused pallas_call."""
    B, S, E = memory_states.shape
    L = packed["wqkv_t"].shape[0]
    ffd = packed["w1_t"].shape[-1]
    BS = B * S
    x2d = memory_states.reshape(BS, E)
    mask = make_attn_mask(B, S)

    kernel = functools.partial(fused_encoder_kernel, nhead=nhead)

    grid_spec = pltpu.PrefetchScalarGridSpec(
        num_scalar_prefetch=0,
        grid=(L,),
        in_specs=[
            pl.BlockSpec((BS, E), lambda l: (0, 0)),            # x (fetched once)
            pl.BlockSpec((BS, BS), lambda l: (0, 0)),           # additive mask (once)
            pl.BlockSpec((1, E, 3 * E), lambda l: (l, 0, 0)),   # W_qkv^T (bf16)
            pl.BlockSpec((1, E, E), lambda l: (l, 0, 0)),       # W_o^T   (bf16)
            pl.BlockSpec((1, E, ffd), lambda l: (l, 0, 0)),     # W_1^T   (bf16)
            pl.BlockSpec((1, ffd, E), lambda l: (l, 0, 0)),     # W_2^T   (bf16)
            pl.BlockSpec((1, NVEC, E), lambda l: (l, 0, 0)),    # packed small vectors
            pl.BlockSpec((1, 1, ffd), lambda l: (l, 0, 0)),     # b1
        ],
        out_specs=pl.BlockSpec((BS, E), lambda l: (0, 0)),      # resident across layers
        scratch_shapes=[pltpu.VMEM((BS, E), jnp.float32)],
    )

    out2d = pl.pallas_call(
        kernel,
        out_shape=jax.ShapeDtypeStruct((BS, E), memory_states.dtype),
        grid_spec=grid_spec,
        compiler_params=pltpu.CompilerParams(
            dimension_semantics=("arbitrary",)),   # layer axis carries the activation
    )(x2d, mask, packed["wqkv_t"], packed["wo_t"], packed["w1_t"],
      packed["w2_t"], packed["vecs"], packed["b1"])

    return out2d.reshape(B, S, E)


# ----------------------- pure-JAX reference (for sanity check) ----------------
def encoder_layer_ref(x, p):
    B, S, E = x.shape
    dh = E // NHEAD
    scale = 1.0 / math.sqrt(dh)
    wqkv, bqkv = p["wqkv"], p["bqkv"][0]
    q = x @ wqkv[0:E].T + bqkv[0:E]
    k = x @ wqkv[E:2 * E].T + bqkv[E:2 * E]
    v = x @ wqkv[2 * E:].T + bqkv[2 * E:]

    def heads(t):  # (B,S,E) -> (B,H,S,dh)
        return t.reshape(B, S, NHEAD, dh).transpose(0, 2, 1, 3)
    qh, kh, vh = heads(q), heads(k), heads(v)
    s = jnp.einsum("bhqd,bhkd->bhqk", qh, kh) * scale
    s = s - jnp.max(s, axis=-1, keepdims=True)
    a = jnp.exp(s)
    a = a / jnp.sum(a, axis=-1, keepdims=True)
    ctx = jnp.einsum("bhqk,bhkd->bhqd", a, vh).transpose(0, 2, 1, 3).reshape(B, S, E)
    attn = ctx @ p["wo"].T + p["bo"][0]
    x = _layernorm(x + attn, p["g1"][0], p["bn1"][0])
    ff = jnp.maximum(x @ p["w1"].T + p["b1"][0], 0.0) @ p["w2"].T + p["b2"][0]
    return _layernorm(x + ff, p["g2"][0], p["bn2"][0])


def ref_forward(x, params):
    for p in params:
        x = encoder_layer_ref(x, p)
    return x


# ----------------------- deterministic parameter init -------------------------
def init_layer_params(key, E, ff):
    ks = jax.random.split(key, 8)
    sc = 0.05
    return {
        "wqkv": sc * jax.random.normal(ks[0], (3 * E, E), jnp.float32),
        "bqkv": sc * jax.random.normal(ks[1], (1, 3 * E), jnp.float32),
        "wo":   sc * jax.random.normal(ks[2], (E, E), jnp.float32),
        "bo":   sc * jax.random.normal(ks[3], (1, E), jnp.float32),
        "w1":   sc * jax.random.normal(ks[4], (ff, E), jnp.float32),
        "b1":   sc * jax.random.normal(ks[5], (1, ff), jnp.float32),
        "w2":   sc * jax.random.normal(ks[6], (E, ff), jnp.float32),
        "b2":   sc * jax.random.normal(ks[7], (1, E), jnp.float32),
        "g1":   jnp.ones((1, E), jnp.float32),
        "bn1":  jnp.zeros((1, E), jnp.float32),
        "g2":   jnp.ones((1, E), jnp.float32),
        "bn2":  jnp.zeros((1, E), jnp.float32),
    }


if __name__ == "__main__":
    key = jax.random.PRNGKey(0)
    kx, k0, k1 = jax.random.split(key, 3)

    memory_states = jax.random.normal(kx, (BATCH, SEQ, EMBED), jnp.float32)
    params = [init_layer_params(k0, EMBED, FF),
              init_layer_params(k1, EMBED, FF)]

    # bf16 weight storage is the kernel's numerical contract: quantize once and use the
    # same (dequantized) values in both the kernel packing and the pure-JAX reference.
    params_q = quantize_params_bf16(params)
    packed = pack_params(params_q)

    out = transformer_memory_update(memory_states, packed)
    out = jax.block_until_ready(out)

    expected = jax.block_until_ready(ref_forward(memory_states, params_q))
    assert out.shape == (BATCH, SEQ, EMBED)
    max_err = float(jnp.max(jnp.abs(out - expected)))
    assert jnp.allclose(out, expected, rtol=1e-3, atol=1e-3), max_err

    print("KERNEL_OK")
</pallas_src>

<mosaic_0001>
module attributes {stable_mosaic.version = 11 : i64} {
  func.func @fused_encoder_kernel(%arg0: i32, %arg1: memref<16x32xf32, #tpu.memory_space<vmem>>, %arg2: memref<16x16xf32, #tpu.memory_space<vmem>>, %arg3: memref<1x32x96xbf16, #tpu.memory_space<vmem>>, %arg4: memref<1x32x32xbf16, #tpu.memory_space<vmem>>, %arg5: memref<1x32x2048xbf16, #tpu.memory_space<vmem>>, %arg6: memref<1x2048x32xbf16, #tpu.memory_space<vmem>>, %arg7: memref<1x9x32xf32, #tpu.memory_space<vmem>>, %arg8: memref<1x1x2048xf32, #tpu.memory_space<vmem>>, %arg9: memref<16x32xf32, #tpu.memory_space<vmem>>, %arg10: memref<16x32xf32, #tpu.memory_space<vmem>>) attributes {dimension_semantics = [#tpu.dimension_semantics<arbitrary>], iteration_bounds = array<i64: 2>, scalar_prefetch = 0 : i64, scratch_operands = 1 : i64, tpu.core_type = #tpu.core_type<tc>, window_params = [{pipeline_mode = #tpu.pipeline_mode<synchronous>, transform_indices = @transform_0, window_bounds = array<i64: 16, 32>}, {pipeline_mode = #tpu.pipeline_mode<synchronous>, transform_indices = @transform_1, window_bounds = array<i64: 16, 16>}, {transform_indices = @transform_2, window_bounds = array<i64: 1, 32, 96>}, {transform_indices = @transform_3, window_bounds = array<i64: 1, 32, 32>}, {transform_indices = @transform_4, window_bounds = array<i64: 1, 32, 2048>}, {transform_indices = @transform_5, window_bounds = array<i64: 1, 2048, 32>}, {transform_indices = @transform_6, window_bounds = array<i64: 1, 9, 32>}, {transform_indices = @transform_7, window_bounds = array<i64: 1, 1, 2048>}, {pipeline_mode = #tpu.pipeline_mode<synchronous>, transform_indices = @transform_8, window_bounds = array<i64: 16, 32>}]} {
    %c0_i32 = arith.constant 0 : i32
    %0 = arith.cmpi eq, %arg0, %c0_i32 : i32
    %1 = arith.extui %0 : i1 to i32
    %c0_i32_0 = arith.constant 0 : i32
    %2 = arith.cmpi ne, %1, %c0_i32_0 : i32
    scf.if %2 {
      %c0_43 = arith.constant 0 : index
      %c0_44 = arith.constant 0 : index
      %124 = vector.load %arg1[%c0_43, %c0_44] : memref<16x32xf32, #tpu.memory_space<vmem>>, vector<16x32xf32>
      %c0_45 = arith.constant 0 : index
      %c0_46 = arith.constant 0 : index
      %125 = vector.load %arg10[%c0_45, %c0_46] : memref<16x32xf32, #tpu.memory_space<vmem>>, vector<16x32xf32>
      tpu.vector_store %arg10[%c0_45, %c0_46], %124 {strides = array<i32>} : memref<16x32xf32, #tpu.memory_space<vmem>>, vector<16x32xf32>,
    } else {
    }
    %c0 = arith.constant 0 : index
    %c0_1 = arith.constant 0 : index
    %3 = vector.load %arg10[%c0, %c0_1] : memref<16x32xf32, #tpu.memory_space<vmem>>, vector<16x32xf32>
    %c0_2 = arith.constant 0 : index
    %c0_3 = arith.constant 0 : index
    %c0_4 = arith.constant 0 : index
    %4 = vector.load %arg3[%c0_2, %c0_3, %c0_4] : memref<1x32x96xbf16, #tpu.memory_space<vmem>>, vector<1x32x96xbf16>
    %5 = vector.shape_cast %4 : vector<1x32x96xbf16> to vector<32x96xbf16>
    %6 = arith.extf %5 : vector<32x96xbf16> to vector<32x96xf32>
    %c0_5 = arith.constant 0 : index
    %c0_6 = arith.constant 0 : index
    %c0_7 = arith.constant 0 : index
    %7 = vector.load %arg4[%c0_5, %c0_6, %c0_7] : memref<1x32x32xbf16, #tpu.memory_space<vmem>>, vector<1x32x32xbf16>
    %8 = vector.shape_cast %7 : vector<1x32x32xbf16> to vector<32x32xbf16>
    %9 = arith.extf %8 : vector<32x32xbf16> to vector<32x32xf32>
    %c0_8 = arith.constant 0 : index
    %c0_9 = arith.constant 0 : index
    %c0_10 = arith.constant 0 : index
    %10 = vector.load %arg5[%c0_8, %c0_9, %c0_10] : memref<1x32x2048xbf16, #tpu.memory_space<vmem>>, vector<1x32x2048xbf16>
    %11 = vector.shape_cast %10 : vector<1x32x2048xbf16> to vector<32x2048xbf16>
    %12 = arith.extf %11 : vector<32x2048xbf16> to vector<32x2048xf32>
    %c0_11 = arith.constant 0 : index
    %c0_12 = arith.constant 0 : index
    %c0_13 = arith.constant 0 : index
    %13 = vector.load %arg6[%c0_11, %c0_12, %c0_13] : memref<1x2048x32xbf16, #tpu.memory_space<vmem>>, vector<1x2048x32xbf16>
    %14 = vector.shape_cast %13 : vector<1x2048x32xbf16> to vector<2048x32xbf16>
    %15 = arith.extf %14 : vector<2048x32xbf16> to vector<2048x32xf32>
    %c0_14 = arith.constant 0 : index
    %c0_15 = arith.constant 0 : index
    %c0_16 = arith.constant 0 : index
    %16 = vector.load %arg7[%c0_14, %c0_15, %c0_16] : memref<1x9x32xf32, #tpu.memory_space<vmem>>, vector<1x9x32xf32>
    %17 = vector.shape_cast %16 : vector<1x9x32xf32> to vector<9x32xf32>
    %c0_17 = arith.constant 0 : index
    %c0_18 = arith.constant 0 : index
    %c0_19 = arith.constant 0 : index
    %18 = vector.load %arg8[%c0_17, %c0_18, %c0_19] : memref<1x1x2048xf32, #tpu.memory_space<vmem>>, vector<1x1x2048xf32>
    %19 = vector.shape_cast %18 : vector<1x1x2048xf32> to vector<1x2048xf32>
    %c0_20 = arith.constant 0 : index
    %c0_21 = arith.constant 0 : index
    %20 = vector.load %arg2[%c0_20, %c0_21] : memref<16x16xf32, #tpu.memory_space<vmem>>, vector<16x16xf32>
    %cst = arith.constant dense<0.000000e+00> : vector<16x96xf32>
    %21 = tpu.matmul %3, %6, %cst {dimension_numbers = #tpu.dot_dimension_numbers<[1], [0], [0], [1], [0, 0, 1, 1], [], []>} : vector<16x32xf32>, vector<32x96xf32>, vector<16x96xf32> -> vector<16x96xf32>
    %22 = vector.extract_strided_slice %21 {offsets = [0, 0], sizes = [16, 32], strides = [1, 1]} : vector<16x96xf32> to vector<16x32xf32>
    %23 = vector.extract_strided_slice %17 {offsets = [0, 0], sizes = [1, 32], strides = [1, 1]} : vector<9x32xf32> to vector<1x32xf32>
    %24 = vector.broadcast %23 : vector<1x32xf32> to vector<16x32xf32>
    %25 = arith.addf %22, %24 : vector<16x32xf32>
    %26 = vector.extract_strided_slice %21 {offsets = [0, 32], sizes = [16, 32], strides = [1, 1]} : vector<16x96xf32> to vector<16x32xf32>
    %27 = vector.extract_strided_slice %17 {offsets = [1, 0], sizes = [1, 32], strides = [1, 1]} : vector<9x32xf32> to vector<1x32xf32>
    %28 = vector.broadcast %27 : vector<1x32xf32> to vector<16x32xf32>
    %29 = arith.addf %26, %28 : vector<16x32xf32>
    %30 = vector.extract_strided_slice %21 {offsets = [0, 64], sizes = [16, 32], strides = [1, 1]} : vector<16x96xf32> to vector<16x32xf32>
    %31 = vector.extract_strided_slice %17 {offsets = [2, 0], sizes = [1, 32], strides = [1, 1]} : vector<9x32xf32> to vector<1x32xf32>
    %32 = vector.broadcast %31 : vector<1x32xf32> to vector<16x32xf32>
    %33 = arith.addf %30, %32 : vector<16x32xf32>
    %34 = vector.shape_cast %25 : vector<16x32xf32> to vector<16x4x8xf32>
    %35 = tpu.transpose %34, [1, 0, 2] : vector<16x4x8xf32> -> vector<4x16x8xf32>
    %36 = vector.shape_cast %29 : vector<16x32xf32> to vector<16x4x8xf32>
    %37 = tpu.transpose %36, [1, 0, 2] : vector<16x4x8xf32> -> vector<4x16x8xf32>
    %38 = vector.shape_cast %33 : vector<16x32xf32> to vector<16x4x8xf32>
    %39 = tpu.transpose %38, [1, 0, 2] : vector<16x4x8xf32> -> vector<4x16x8xf32>
    "tpu.trace_start"() <{level = 10 : i32, message = "hqd,hkd->hqk"}> : () -> ()
    %cst_22 = arith.constant dense<0.000000e+00> : vector<4x16x16xf32>
    %40 = tpu.matmul %35, %37, %cst_22 {dimension_numbers = #tpu.dot_dimension_numbers<[2], [2], [1], [1], [0, 0, 0, 1, 1, 1], [0], [0]>} : vector<4x16x8xf32>, vector<4x16x8xf32>, vector<4x16x16xf32> -> vector<4x16x16xf32>
    "tpu.trace_stop"() : () -> ()
    %41 = vector.shape_cast %20 : vector<16x16xf32> to vector<1x16x16xf32>
    %42 = vector.broadcast %41 : vector<1x16x16xf32> to vector<4x16x16xf32>
    %43 = arith.addf %40, %42 : vector<4x16x16xf32>
    %cst_23 = arith.constant dense<0xFF800000> : vector<4x16xf32>
    %44 = vector.multi_reduction <maximumf>, %43, %cst_23 [2] : vector<4x16x16xf32> to vector<4x16xf32>
    %45 = vector.shape_cast %44 : vector<4x16xf32> to vector<4x16x1xf32>
    %46 = vector.broadcast %45 : vector<4x16x1xf32> to vector<4x16x16xf32>
    %47 = arith.subf %43, %46 : vector<4x16x16xf32>
    %48 = math.exp %47 : vector<4x16x16xf32>
    %cst_24 = arith.constant dense<0.000000e+00> : vector<4x16xf32>
    %49 = vector.multi_reduction <add>, %48, %cst_24 [2] : vector<4x16x16xf32> to vector<4x16xf32>
    %50 = vector.shape_cast %49 : vector<4x16xf32> to vector<4x16x1xf32>
    %51 = tpu.reciprocal %50 {approx = true} : vector<4x16x1xf32> -> vector<4x16x1xf32>
    %52 = vector.broadcast %51 : vector<4x16x1xf32> to vector<4x16x16xf32>
    %53 = arith.mulf %48, %52 : vector<4x16x16xf32>
    "tpu.trace_start"() <{level = 10 : i32, message = "hqk,hkd->hqd"}> : () -> ()
    %cst_25 = arith.constant dense<0.000000e+00> : vector<4x16x8xf32>
    %54 = tpu.matmul %53, %39, %cst_25 {dimension_numbers = #tpu.dot_dimension_numbers<[2], [1], [1], [2], [0, 0, 0, 1, 1, 2], [0], [0]>} : vector<4x16x16xf32>, vector<4x16x8xf32>, vector<4x16x8xf32> -> vector<4x16x8xf32>
    "tpu.trace_stop"() : () -> ()
    %55 = tpu.transpose %54, [1, 0, 2] : vector<4x16x8xf32> -> vector<16x4x8xf32>
    %56 = vector.shape_cast %55 : vector<16x4x8xf32> to vector<16x32xf32>
    %cst_26 = arith.constant dense<0.000000e+00> : vector<16x32xf32>
    %57 = tpu.matmul %56, %9, %cst_26 {dimension_numbers = #tpu.dot_dimension_numbers<[1], [0], [0], [1], [0, 0, 1, 1], [], []>} : vector<16x32xf32>, vector<32x32xf32>, vector<16x32xf32> -> vector<16x32xf32>
    %58 = vector.extract_strided_slice %17 {offsets = [3, 0], sizes = [1, 32], strides = [1, 1]} : vector<9x32xf32> to vector<1x32xf32>
    %59 = vector.broadcast %58 : vector<1x32xf32> to vector<16x32xf32>
    %60 = arith.addf %57, %59 : vector<16x32xf32>
    %61 = arith.addf %3, %60 : vector<16x32xf32>
    %62 = vector.extract_strided_slice %17 {offsets = [5, 0], sizes = [1, 32], strides = [1, 1]} : vector<9x32xf32> to vector<1x32xf32>
    %63 = vector.extract_strided_slice %17 {offsets = [6, 0], sizes = [1, 32], strides = [1, 1]} : vector<9x32xf32> to vector<1x32xf32>
    %cst_27 = arith.constant dense<0.000000e+00> : vector<16xf32>
    %64 = vector.multi_reduction <add>, %61, %cst_27 [1] : vector<16x32xf32> to vector<16xf32>
    %65 = vector.shape_cast %64 : vector<16xf32> to vector<16x1xf32>
    %cst_28 = arith.constant 3.200000e+01 : f32
    %66 = vector.broadcast %cst_28 : f32 to vector<16x1xf32>
    %67 = arith.divf %65, %66 : vector<16x1xf32>
    %68 = vector.broadcast %67 : vector<16x1xf32> to vector<16x32xf32>
    %69 = arith.subf %61, %68 : vector<16x32xf32>
    %70 = arith.mulf %69, %69 : vector<16x32xf32>
    %cst_29 = arith.constant dense<0.000000e+00> : vector<16xf32>
    %71 = vector.multi_reduction <add>, %70, %cst_29 [1] : vector<16x32xf32> to vector<16xf32>
    %72 = vector.shape_cast %71 : vector<16xf32> to vector<16x1xf32>
    %cst_30 = arith.constant 3.200000e+01 : f32
    %73 = vector.broadcast %cst_30 : f32 to vector<16x1xf32>
    %74 = arith.divf %72, %73 : vector<16x1xf32>
    %75 = vector.broadcast %67 : vector<16x1xf32> to vector<16x32xf32>
    %76 = arith.subf %61, %75 : vector<16x32xf32>
    %cst_31 = arith.constant 9.99999974E-6 : f32
    %77 = vector.broadcast %cst_31 : f32 to vector<16x1xf32>
    %78 = arith.addf %74, %77 : vector<16x1xf32>
    %79 = math.rsqrt %78 : vector<16x1xf32>
    %80 = vector.broadcast %79 : vector<16x1xf32> to vector<16x32xf32>
    %81 = arith.mulf %76, %80 : vector<16x32xf32>
    %82 = vector.broadcast %62 : vector<1x32xf32> to vector<16x32xf32>
    %83 = arith.mulf %81, %82 : vector<16x32xf32>
    %84 = vector.broadcast %63 : vector<1x32xf32> to vector<16x32xf32>
    %85 = arith.addf %83, %84 : vector<16x32xf32>
    %cst_32 = arith.constant dense<0.000000e+00> : vector<16x2048xf32>
    %86 = tpu.matmul %85, %12, %cst_32 {dimension_numbers = #tpu.dot_dimension_numbers<[1], [0], [0], [1], [0, 0, 1, 1], [], []>} : vector<16x32xf32>, vector<32x2048xf32>, vector<16x2048xf32> -> vector<16x2048xf32>
    %87 = vector.broadcast %19 : vector<1x2048xf32> to vector<16x2048xf32>
    %88 = arith.addf %86, %87 : vector<16x2048xf32>
    %cst_33 = arith.constant 0.000000e+00 : f32
    %89 = vector.broadcast %cst_33 : f32 to vector<16x2048xf32>
    %90 = arith.maximumf %88, %89 : vector<16x2048xf32>
    %cst_34 = arith.constant dense<0.000000e+00> : vector<16x32xf32>
    %91 = tpu.matmul %90, %15, %cst_34 {dimension_numbers = #tpu.dot_dimension_numbers<[1], [0], [0], [1], [0, 0, 1, 1], [], []>} : vector<16x2048xf32>, vector<2048x32xf32>, vector<16x32xf32> -> vector<16x32xf32>
    %92 = vector.extract_strided_slice %17 {offsets = [4, 0], sizes = [1, 32], strides = [1, 1]} : vector<9x32xf32> to vector<1x32xf32>
    %93 = vector.broadcast %92 : vector<1x32xf32> to vector<16x32xf32>
    %94 = arith.addf %91, %93 : vector<16x32xf32>
    %95 = arith.addf %85, %94 : vector<16x32xf32>
    %96 = vector.extract_strided_slice %17 {offsets = [7, 0], sizes = [1, 32], strides = [1, 1]} : vector<9x32xf32> to vector<1x32xf32>
    %97 = vector.extract_strided_slice %17 {offsets = [8, 0], sizes = [1, 32], strides = [1, 1]} : vector<9x32xf32> to vector<1x32xf32>
    %cst_35 = arith.constant dense<0.000000e+00> : vector<16xf32>
    %98 = vector.multi_reduction <add>, %95, %cst_35 [1] : vector<16x32xf32> to vector<16xf32>
    %99 = vector.shape_cast %98 : vector<16xf32> to vector<16x1xf32>
    %cst_36 = arith.constant 3.200000e+01 : f32
    %100 = vector.broadcast %cst_36 : f32 to vector<16x1xf32>
    %101 = arith.divf %99, %100 : vector<16x1xf32>
    %102 = vector.broadcast %101 : vector<16x1xf32> to vector<16x32xf32>
    %103 = arith.subf %95, %102 : vector<16x32xf32>
    %104 = arith.mulf %103, %103 : vector<16x32xf32>
    %cst_37 = arith.constant dense<0.000000e+00> : vector<16xf32>
    %105 = vector.multi_reduction <add>, %104, %cst_37 [1] : vector<16x32xf32> to vector<16xf32>
    %106 = vector.shape_cast %105 : vector<16xf32> to vector<16x1xf32>
    %cst_38 = arith.constant 3.200000e+01 : f32
    %107 = vector.broadcast %cst_38 : f32 to vector<16x1xf32>
    %108 = arith.divf %106, %107 : vector<16x1xf32>
    %109 = vector.broadcast %101 : vector<16x1xf32> to vector<16x32xf32>
    %110 = arith.subf %95, %109 : vector<16x32xf32>
    %cst_39 = arith.constant 9.99999974E-6 : f32
    %111 = vector.broadcast %cst_39 : f32 to vector<16x1xf32>
    %112 = arith.addf %108, %111 : vector<16x1xf32>
    %113 = math.rsqrt %112 : vector<16x1xf32>
    %114 = vector.broadcast %113 : vector<16x1xf32> to vector<16x32xf32>
    %115 = arith.mulf %110, %114 : vector<16x32xf32>
    %116 = vector.broadcast %96 : vector<1x32xf32> to vector<16x32xf32>
    %117 = arith.mulf %115, %116 : vector<16x32xf32>
    %118 = vector.broadcast %97 : vector<1x32xf32> to vector<16x32xf32>
    %119 = arith.addf %117, %118 : vector<16x32xf32>
    %c0_40 = arith.constant 0 : index
    %c0_41 = arith.constant 0 : index
    %120 = vector.load %arg10[%c0_40, %c0_41] : memref<16x32xf32, #tpu.memory_space<vmem>>, vector<16x32xf32>
    tpu.vector_store %arg10[%c0_40, %c0_41], %119 {strides = array<i32>} : memref<16x32xf32, #tpu.memory_space<vmem>>, vector<16x32xf32>,
    %c1_i32 = arith.constant 1 : i32
    %121 = arith.cmpi eq, %arg0, %c1_i32 : i32
    %122 = arith.extui %121 : i1 to i32
    %c0_i32_42 = arith.constant 0 : i32
    %123 = arith.cmpi ne, %122, %c0_i32_42 : i32
    scf.if %123 {
      %c0_43 = arith.constant 0 : index
      %c0_44 = arith.constant 0 : index
      %124 = vector.load %arg9[%c0_43, %c0_44] : memref<16x32xf32, #tpu.memory_space<vmem>>, vector<16x32xf32>
      tpu.vector_store %arg9[%c0_43, %c0_44], %119 {strides = array<i32>} : memref<16x32xf32, #tpu.memory_space<vmem>>, vector<16x32xf32>,
    } else {
    }
    return
  }
  func.func @transform_0(%arg0: i32) -> (i32, i32) {
    %c0_i32 = arith.constant 0 : i32
    %c0_i32_0 = arith.constant 0 : i32
    %c0_i32_1 = arith.constant 0 : i32
    return %c0_i32, %c0_i32_0 : i32, i32
  }
  func.func @transform_1(%arg0: i32) -> (i32, i32) {
    %c0_i32 = arith.constant 0 : i32
    %c0_i32_0 = arith.constant 0 : i32
    %c0_i32_1 = arith.constant 0 : i32
    return %c0_i32, %c0_i32_0 : i32, i32
  }
  func.func @transform_2(%arg0: i32) -> (i32, i32, i32) {
    %c0_i32 = arith.constant 0 : i32
    %c0_i32_0 = arith.constant 0 : i32
    %c0_i32_1 = arith.constant 0 : i32
    return %arg0, %c0_i32, %c0_i32_0 : i32, i32, i32
  }
  func.func @transform_3(%arg0: i32) -> (i32, i32, i32) {
    %c0_i32 = arith.constant 0 : i32
    %c0_i32_0 = arith.constant 0 : i32
    %c0_i32_1 = arith.constant 0 : i32
    return %arg0, %c0_i32, %c0_i32_0 : i32, i32, i32
  }
  func.func @transform_4(%arg0: i32) -> (i32, i32, i32) {
    %c0_i32 = arith.constant 0 : i32
    %c0_i32_0 = arith.constant 0 : i32
    %c0_i32_1 = arith.constant 0 : i32
    return %arg0, %c0_i32, %c0_i32_0 : i32, i32, i32
  }
  func.func @transform_5(%arg0: i32) -> (i32, i32, i32) {
    %c0_i32 = arith.constant 0 : i32
    %c0_i32_0 = arith.constant 0 : i32
    %c0_i32_1 = arith.constant 0 : i32
    return %arg0, %c0_i32, %c0_i32_0 : i32, i32, i32
  }
  func.func @transform_6(%arg0: i32) -> (i32, i32, i32) {
    %c0_i32 = arith.constant 0 : i32
    %c0_i32_0 = arith.constant 0 : i32
    %c0_i32_1 = arith.constant 0 : i32
    return %arg0, %c0_i32, %c0_i32_0 : i32, i32, i32
  }
  func.func @transform_7(%arg0: i32) -> (i32, i32, i32) {
    %c0_i32 = arith.constant 0 : i32
    %c0_i32_0 = arith.constant 0 : i32
    %c0_i32_1 = arith.constant 0 : i32
    return %arg0, %c0_i32, %c0_i32_0 : i32, i32, i32
  }
  func.func @transform_8(%arg0: i32) -> (i32, i32) {
    %c0_i32 = arith.constant 0 : i32
    %c0_i32_0 = arith.constant 0 : i32
    %c0_i32_1 = arith.constant 0 : i32
    return %c0_i32, %c0_i32_0 : i32, i32
  }
}

</mosaic_0001>

<llo_original>
// kernel: tpu_custom_call.1
$region0: #{tpu_custom_call.1}
  #allocation0 [shape = 'u32[]', space=smem, size = 0x4, offset = 0x4, fixed_abs, tag = 'smem constant byte address 0x4 - core index']
  #allocation1 [shape = 'u32[144,128]{1,0:T(1,128)}', space=vmem, size = 0x12000, scoped, tag = 'internal scratch']
  #allocation2 [shape = 'f32[16,32]{1,0:T(8,128)}', space=vmem, size = 0x2000, scoped, tag = 'scratch operand']
  %s0 = inlined_call_operand.vmem [shape: f32[16,32], index: 0, kind: input, shape index: {}]
  %s1 = inlined_call_operand.vmem [shape: f32[16,16], index: 1, kind: input, shape index: {}]
  %s2 = inlined_call_operand.vmem [shape: bf16[2,32,96], index: 2, kind: input, shape index: {}]
  %s3 = inlined_call_operand.vmem [shape: bf16[2,32,32], index: 3, kind: input, shape index: {}]
  %s4 = inlined_call_operand.vmem [shape: bf16[2,32,2048], index: 4, kind: input, shape index: {}]
  %s5 = inlined_call_operand.vmem [shape: bf16[2,2048,32], index: 5, kind: input, shape index: {}]
  %s6 = inlined_call_operand.vmem [shape: f32[2,9,32], index: 6, kind: input, shape index: {}]
  %s7 = inlined_call_operand.vmem [shape: f32[2,1,2048], index: 7, kind: input, shape index: {}]
  %s8 = inlined_call_operand.hbm [shape: f32[16,32], index: 8, kind: output, shape index: {}]
  %s9 = sld [smem:[#allocation0]]
  $region73: #{tpu_custom_call.1} parent=0
    _
  %s11 = ssub.s32 1, %s9
  %s12 = scalar_select 0, %s11, %s9
  $region1: #{tpu_custom_call.1} parent=0
    #allocation3 [shape = 'u8[8192]{0}', space=vmem, size = 0x2000, scoped, tag = 'output window, operand 0, single buffered']
    #allocation4 [shape = 's32[2]{0}', space=sflag, size = 0x8, scoped, tag = 'scoped memory for tpu_custom_call.1']
    %13 = vsyncpa [#allocation4], 0
    loop: start=0, step=1, limit=4
    $region2: #{tpu_custom_call.1} parent=1 // loop_pre_header
      _
    $region3: #{tpu_custom_call.1} parent=1 // loop_header
      %s15 = sphi 0, %s19
      %p16 = scmp.ge.s32.totalorder %s15, 4
      %s23 = sphi 0, %s23
      %s25 = sphi 0, %s23
      %s26 = sphi 0, %s25
      %s40 = sphi 0, %s26
      %s44 = sphi 0, %s44
      %s46 = sphi 0, %s44
      %s47 = sphi 0, %s46
      %s61 = sphi 0, %s47
      %s67 = sphi 0, %s69
      %s70 = sphi 0, %s67
      %s71 = sphi 0, %s70
      %s87 = sphi 0, %s71
      %s93 = sphi 0, %s95
      %s96 = sphi 0, %s93
      %s97 = sphi 0, %s96
      %s113 = sphi 0, %s97
      %s119 = sphi 0, %s121
      %s122 = sphi 0, %s119
      %s123 = sphi 0, %s122
      %s139 = sphi 0, %s123
      %s145 = sphi 0, %s147
      %s148 = sphi 0, %s145
      %s149 = sphi 0, %s148
      %s165 = sphi 0, %s149
      %s171 = sphi 0, %s173
      %s174 = sphi 0, %s171
      %s175 = sphi 0, %s174
      %s191 = sphi 0, %s175
      %s197 = sphi 0, %s199
      %s200 = sphi 0, %s197
      %s201 = sphi 0, %s200
      %s217 = sphi 0, %s201
      %s221 = sphi 0, %s221
      %s223 = sphi 0, %s221
      %s224 = sphi 0, %s223
      %s238 = sphi 0, %s224
    $region4: #{tpu_custom_call.1} parent=1 // loop_header_branch
      %18 = sbr.rel (%p16) target = $region8
    $region5: #{tpu_custom_call.1} parent=1 // loop_body
      %s20 = ssub.s32 %s15, 1
      %s21 = ssub.s32 %s15, 2
      %s22 = sadd.s32 %s15, 1
      %s24 = sadd.s32 %s23, 1
      %p27 = scmp.eq.s32.totalorder %s15, 1
      %p28 = scmp.ne.s32.totalorder %s23, %s25
      %p29 = scmp.eq.s32.totalorder %s15, 0
      %p30 = por %p28, %p29
      %p31 = scmp.ne.s32.totalorder %s23, %s25
      %p32 = scmp.eq.s32.totalorder %s20, 1
      %p33 = por %p31, %p32
      %p34 = scmp.ne.s32.totalorder %s25, %s26
      %p35 = scmp.eq.s32.totalorder %s20, 0
      %p36 = por %p34, %p35
      %p37 = scmp.ne.s32.totalorder %s25, %s26
      %p38 = scmp.eq.s32.totalorder %s21, 1
      %p39 = por %p37, %p38
      %p41 = scmp.ne.s32.totalorder %s26, %s40
      %p42 = scmp.eq.s32.totalorder %s21, 0
      %p43 = por %p41, %p42
      %s45 = sadd.s32 %s44, 1
      %p48 = scmp.eq.s32.totalorder %s15, 1
      %p49 = scmp.ne.s32.totalorder %s44, %s46
      %p50 = scmp.eq.s32.totalorder %s15, 0
      %p51 = por %p49, %p50
      %p52 = scmp.ne.s32.totalorder %s44, %s46
      %p53 = scmp.eq.s32.totalorder %s20, 1
      %p54 = por %p52, %p53
      %p55 = scmp.ne.s32.totalorder %s46, %s47
      %p56 = scmp.eq.s32.totalorder %s20, 0
      %p57 = por %p55, %p56
      %p58 = scmp.ne.s32.totalorder %s46, %s47
      %p59 = scmp.eq.s32.totalorder %s21, 1
      %p60 = por %p58, %p59
      %p62 = scmp.ne.s32.totalorder %s47, %s61
      %p63 = scmp.eq.s32.totalorder %s21, 0
      %p64 = por %p62, %p63
      %s65 = ssub.s32 %s15, %s22
      %p66 = scmp.eq.s32.totalorder %s65, 0
      %s68 = sadd.s32 %s67, 1
      %s69 = scalar_select %p66, %s67, %s68
      %p72 = pneg %p66
      %p73 = scmp.eq.s32.totalorder %s15, 1
      %p74 = por %p72, %p73
      %p75 = scmp.ne.s32.totalorder %s67, %s70
      %p76 = scmp.eq.s32.totalorder %s15, 0
      %p77 = por %p75, %p76
      %p78 = scmp.ne.s32.totalorder %s67, %s70
      %p79 = scmp.eq.s32.totalorder %s20, 1
      %p80 = por %p78, %p79
      %p81 = scmp.ne.s32.totalorder %s70, %s71
      %p82 = scmp.eq.s32.totalorder %s20, 0
      %p83 = por %p81, %p82
      %p84 = scmp.ne.s32.totalorder %s70, %s71
      %p85 = scmp.eq.s32.totalorder %s21, 1
      %p86 = por %p84, %p85
      %p88 = scmp.ne.s32.totalorder %s71, %s87
      %p89 = scmp.eq.s32.totalorder %s21, 0
      %p90 = por %p88, %p89
      %s91 = ssub.s32 %s15, %s22
      %p92 = scmp.eq.s32.totalorder %s91, 0
      %s94 = sadd.s32 %s93, 1
      %s95 = scalar_select %p92, %s93, %s94
      %p98 = pneg %p92
      %p99 = scmp.eq.s32.totalorder %s15, 1
      %p100 = por %p98, %p99
      %p101 = scmp.ne.s32.totalorder %s93, %s96
      %p102 = scmp.eq.s32.totalorder %s15, 0
      %p103 = por %p101, %p102
      %p104 = scmp.ne.s32.totalorder %s93, %s96
      %p105 = scmp.eq.s32.totalorder %s20, 1
      %p106 = por %p104, %p105
      %p107 = scmp.ne.s32.totalorder %s96, %s97
      %p108 = scmp.eq.s32.totalorder %s20, 0
      %p109 = por %p107, %p108
      %p110 = scmp.ne.s32.totalorder %s96, %s97
      %p111 = scmp.eq.s32.totalorder %s21, 1
      %p112 = por %p110, %p111
      %p114 = scmp.ne.s32.totalorder %s97, %s113
      %p115 = scmp.eq.s32.totalorder %s21, 0
      %p116 = por %p114, %p115
      %s117 = ssub.s32 %s15, %s22
      %p118 = scmp.eq.s32.totalorder %s117, 0
      %s120 = sadd.s32 %s119, 1
      %s121 = scalar_select %p118, %s119, %s120
      %p124 = pneg %p118
      %p125 = scmp.eq.s32.totalorder %s15, 1
      %p126 = por %p124, %p125
      %p127 = scmp.ne.s32.totalorder %s119, %s122
      %p128 = scmp.eq.s32.totalorder %s15, 0
      %p129 = por %p127, %p128
      %p130 = scmp.ne.s32.totalorder %s119, %s122
      %p131 = scmp.eq.s32.totalorder %s20, 1
      %p132 = por %p130, %p131
      %p133 = scmp.ne.s32.totalorder %s122, %s123
      %p134 = scmp.eq.s32.totalorder %s20, 0
      %p135 = por %p133, %p134
      %p136 = scmp.ne.s32.totalorder %s122, %s123
      %p137 = scmp.eq.s32.totalorder %s21, 1
      %p138 = por %p136, %p137
      %p140 = scmp.ne.s32.totalorder %s123, %s139
      %p141 = scmp.eq.s32.totalorder %s21, 0
      %p142 = por %p140, %p141
      %s143 = ssub.s32 %s15, %s22
      %p144 = scmp.eq.s32.totalorder %s143, 0
      %s146 = sadd.s32 %s145, 1
      %s147 = scalar_select %p144, %s145, %s146
      %p150 = pneg %p144
      %p151 = scmp.eq.s32.totalorder %s15, 1
      %p152 = por %p150, %p151
      %p153 = scmp.ne.s32.totalorder %s145, %s148
      %p154 = scmp.eq.s32.totalorder %s15, 0
      %p155 = por %p153, %p154
      %p156 = scmp.ne.s32.totalorder %s145, %s148
      %p157 = scmp.eq.s32.totalorder %s20, 1
      %p158 = por %p156, %p157
      %p159 = scmp.ne.s32.totalorder %s148, %s149
      %p160 = scmp.eq.s32.totalorder %s20, 0
      %p161 = por %p159, %p160
      %p162 = scmp.ne.s32.totalorder %s148, %s149
      %p163 = scmp.eq.s32.totalorder %s21, 1
      %p164 = por %p162, %p163
      %p166 = scmp.ne.s32.totalorder %s149, %s165
      %p167 = scmp.eq.s32.totalorder %s21, 0
      %p168 = por %p166, %p167
      %s169 = ssub.s32 %s15, %s22
      %p170 = scmp.eq.s32.totalorder %s169, 0
      %s172 = sadd.s32 %s171, 1
      %s173 = scalar_select %p170, %s171, %s172
      %p176 = pneg %p170
      %p177 = scmp.eq.s32.totalorder %s15, 1
      %p178 = por %p176, %p177
      %p179 = scmp.ne.s32.totalorder %s171, %s174
      %p180 = scmp.eq.s32.totalorder %s15, 0
      %p181 = por %p179, %p180
      %p182 = scmp.ne.s32.totalorder %s171, %s174
      %p183 = scmp.eq.s32.totalorder %s20, 1
      %p184 = por %p182, %p183
      %p185 = scmp.ne.s32.totalorder %s174, %s175
      %p186 = scmp.eq.s32.totalorder %s20, 0
      %p187 = por %p185, %p186
      %p188 = scmp.ne.s32.totalorder %s174, %s175
      %p189 = scmp.eq.s32.totalorder %s21, 1
      %p190 = por %p188, %p189
      %p192 = scmp.ne.s32.totalorder %s175, %s191
      %p193 = scmp.eq.s32.totalorder %s21, 0
      %p194 = por %p192, %p193
      %s195 = ssub.s32 %s15, %s22
      %p196 = scmp.eq.s32.totalorder %s195, 0
      %s198 = sadd.s32 %s197, 1
      %s199 = scalar_select %p196, %s197, %s198
      %p202 = pneg %p196
      %p203 = scmp.eq.s32.totalorder %s15, 1
      %p204 = por %p202, %p203
      %p205 = scmp.ne.s32.totalorder %s197, %s200
      %p206 = scmp.eq.s32.totalorder %s15, 0
      %p207 = por %p205, %p206
      %p208 = scmp.ne.s32.totalorder %s197, %s200
      %p209 = scmp.eq.s32.totalorder %s20, 1
      %p210 = por %p208, %p209
      %p211 = scmp.ne.s32.totalorder %s200, %s201
      %p212 = scmp.eq.s32.totalorder %s20, 0
      %p213 = por %p211, %p212
      %p214 = scmp.ne.s32.totalorder %s200, %s201
      %p215 = scmp.eq.s32.totalorder %s21, 1
      %p216 = por %p214, %p215
      %p218 = scmp.ne.s32.totalorder %s201, %s217
      %p219 = scmp.eq.s32.totalorder %s21, 0
      %p220 = por %p218, %p219
      %s222 = sadd.s32 %s221, 1
      %p225 = scmp.eq.s32.totalorder %s15, 1
      %p226 = scmp.ne.s32.totalorder %s221, %s223
      %p227 = scmp.eq.s32.totalorder %s15, 0
      %p228 = por %p226, %p227
      %p229 = scmp.ne.s32.totalorder %s221, %s223
      %p230 = scmp.eq.s32.totalorder %s20, 1
      %p231 = por %p229, %p230
      %p232 = scmp.ne.s32.totalorder %s223, %s224
      %p233 = scmp.eq.s32.totalorder %s20, 0
      %p234 = por %p232, %p233
      %p235 = scmp.ne.s32.totalorder %s223, %s224
      %p236 = scmp.eq.s32.totalorder %s21, 1
      %p237 = por %p235, %p236
      %p239 = scmp.ne.s32.totalorder %s224, %s238
      %p240 = scmp.eq.s32.totalorder %s21, 0
      %p241 = por %p239, %p240
      %p242 = scmp.le.s32.totalorder 1, %s15
      %p243 = scmp.lt.s32.totalorder %s15, 3
      %p244 = pnand %p242, %p243
      %p245 = pneg %p244
      // Predicated region
      $region9: #{tpu_custom_call.1} parent=5 // pred_check
        _
      $region10: #{tpu_custom_call.1} parent=5 // pred_check_branch
        %247 = sbr.rel (%p244) target = $region12
      $region11: #{tpu_custom_call.1} parent=5 // pred_region
        %s248 = ssub.s32 %s15, 1
        // Predicated region
        $region13: #{tpu_custom_call.1} parent=11 // pred_check
          %p249 = pneg %p36
        $region14: #{tpu_custom_call.1} parent=11 // pred_check_branch
          %251 = sbr.rel (%p249) target = $region16
        $region15: #{tpu_custom_call.1} parent=11 // pred_region
          _
        $region16: #{tpu_custom_call.1} parent=11 // pred_fallthru
          _
        // Predicated region
        $region17: #{tpu_custom_call.1} parent=11 // pred_check
          %p252 = pneg %p57
        $region18: #{tpu_custom_call.1} parent=11 // pred_check_branch
          %254 = sbr.rel (%p252) target = $region20
        $region19: #{tpu_custom_call.1} parent=11 // pred_region
          _
        $region20: #{tpu_custom_call.1} parent=11 // pred_fallthru
          _
      $region12: #{tpu_custom_call.1} parent=5 // pred_fallthru
        _
      %p255 = scmp.lt.s32.totalorder %s15, 2
      // Predicated region
      $region21: #{tpu_custom_call.1} parent=5 // pred_check
        %p256 = pneg %p255
      $region22: #{tpu_custom_call.1} parent=5 // pred_check_branch
        %258 = sbr.rel (%p256) target = $region24
      $region23: #{tpu_custom_call.1} parent=5 // pred_region
        // Predicated region
        $region25: #{tpu_custom_call.1} parent=23 // pred_check
          %p259 = pneg %p77
        $region26: #{tpu_custom_call.1} parent=23 // pred_check_branch
          %261 = sbr.rel (%p259) target = $region28
        $region27: #{tpu_custom_call.1} parent=23 // pred_region
          %p262 = scmp.lt.s32.totalorder %s15, 1
          %s263 = scalar_select %p262, %s15, 1
          %s264 = smul.addr %s263, 4
          %s265 = smul.addr %s264, 4
          %s266 = scalar_lea.vmem %s2, %s265
        $region28: #{tpu_custom_call.1} parent=23 // pred_fallthru
          _
        // Predicated region
        $region29: #{tpu_custom_call.1} parent=23 // pred_check
          %p267 = pneg %p103
        $region30: #{tpu_custom_call.1} parent=23 // pred_check_branch
          %269 = sbr.rel (%p267) target = $region32
        $region31: #{tpu_custom_call.1} parent=23 // pred_region
          %p270 = scmp.lt.s32.totalorder %s15, 1
          %s271 = scalar_select %p270, %s15, 1
          %s272 = smul.addr %s271, 4
          %s273 = smul.addr %s272, 4
          %s274 = scalar_lea.vmem %s3, %s273
        $region32: #{tpu_custom_call.1} parent=23 // pred_fallthru
          _
        // Predicated region
        $region33: #{tpu_custom_call.1} parent=23 // pred_check
          %p275 = pneg %p129
        $region34: #{tpu_custom_call.1} parent=23 // pred_check_branch
          %277 = sbr.rel (%p275) target = $region36
        $region35: #{tpu_custom_call.1} parent=23 // pred_region
          %p278 = scmp.lt.s32.totalorder %s15, 1
          %s279 = scalar_select %p278, %s15, 1
          %s280 = smul.addr %s279, 64
          %s281 = smul.addr %s280, 4
          %s282 = scalar_lea.vmem %s4, %s281
        $region36: #{tpu_custom_call.1} parent=23 // pred_fallthru
          _
        // Predicated region
        $region37: #{tpu_custom_call.1} parent=23 // pred_check
          %p283 = pneg %p155
        $region38: #{tpu_custom_call.1} parent=23 // pred_check_branch
          %285 = sbr.rel (%p283) target = $region40
        $region39: #{tpu_custom_call.1} parent=23 // pred_region
          %p286 = scmp.lt.s32.totalorder %s15, 1
          %s287 = scalar_select %p286, %s15, 1
          %s288 = smul.addr %s287, 256
          %s289 = smul.addr %s288, 4
          %s290 = scalar_lea.vmem %s5, %s289
        $region40: #{tpu_custom_call.1} parent=23 // pred_fallthru
          _
        // Predicated region
        $region41: #{tpu_custom_call.1} parent=23 // pred_check
          %p291 = pneg %p181
        $region42: #{tpu_custom_call.1} parent=23 // pred_check_branch
          %293 = sbr.rel (%p291) target = $region44
        $region43: #{tpu_custom_call.1} parent=23 // pred_region
          %p294 = scmp.lt.s32.totalorder %s15, 1
          %s295 = scalar_select %p294, %s15, 1
          %s296 = smul.addr %s295, 2
          %s297 = smul.addr %s296, 8
          %s298 = scalar_lea.vmem %s6, %s297
        $region44: #{tpu_custom_call.1} parent=23 // pred_fallthru
          _
        // Predicated region
        $region45: #{tpu_custom_call.1} parent=23 // pred_check
          %p299 = pneg %p207
        $region46: #{tpu_custom_call.1} parent=23 // pred_check_branch
          %301 = sbr.rel (%p299) target = $region48
        $region47: #{tpu_custom_call.1} parent=23 // pred_region
          %p302 = scmp.lt.s32.totalorder %s15, 1
          %s303 = scalar_select %p302, %s15, 1
          %s304 = smul.addr %s303, 16
          %s305 = scalar_lea.vmem %s7, %s304
        $region48: #{tpu_custom_call.1} parent=23 // pred_fallthru
          _
      $region24: #{tpu_custom_call.1} parent=5 // pred_fallthru
        _
      %p306 = scmp.le.s32.totalorder 1, %s15
      %p307 = scmp.lt.s32.totalorder %s15, 3
      %p308 = pnand %p306, %p307
      %p309 = pneg %p308
      // Predicated region
      $region49: #{tpu_custom_call.1} parent=5 // pred_check
        _
      $region50: #{tpu_custom_call.1} parent=5 // pred_check_branch
        %311 = sbr.rel (%p308) target = $region52
      $region51: #{tpu_custom_call.1} parent=5 // pred_region
        %s312 = ssub.s32 %s15, 1
        %p313 = pneg %p36
        %p314 = pneg %p33
        %p315 = pneg %p57
        %p316 = pneg %p54
        %p317 = scmp.lt.s32.totalorder %s20, 1
        %s318 = scalar_select %p317, %s20, 1
        %s319 = smul.addr %s318, 4
        %s320 = smul.addr %s319, 4
        %s321 = scalar_lea.vmem %s2, %s320
        %p322 = pneg %p83
        %p323 = pneg %p80
        %p324 = scmp.lt.s32.totalorder %s20, 1
        %s325 = scalar_select %p324, %s20, 1
        %s326 = smul.addr %s325, 4
        %s327 = smul.addr %s326, 4
        %s328 = scalar_lea.vmem %s3, %s327
        %p329 = pneg %p109
        %p330 = pneg %p106
        %p331 = scmp.lt.s32.totalorder %s20, 1
        %s332 = scalar_select %p331, %s20, 1
        %s333 = smul.addr %s332, 64
        %s334 = smul.addr %s333, 4
        %s335 = scalar_lea.vmem %s4, %s334
        %p336 = pneg %p135
        %p337 = pneg %p132
        %p338 = scmp.lt.s32.totalorder %s20, 1
        %s339 = scalar_select %p338, %s20, 1
        %s340 = smul.addr %s339, 256
        %s341 = smul.addr %s340, 4
        %s342 = scalar_lea.vmem %s5, %s341
        %p343 = pneg %p161
        %p344 = pneg %p158
        %p345 = scmp.lt.s32.totalorder %s20, 1
        %s346 = scalar_select %p345, %s20, 1
        %s347 = smul.addr %s346, 2
        %s348 = smul.addr %s347, 8
        %s349 = scalar_lea.vmem %s6, %s348
        %p350 = pneg %p187
        %p351 = pneg %p184
        %p352 = scmp.lt.s32.totalorder %s20, 1
        %s353 = scalar_select %p352, %s20, 1
        %s354 = smul.addr %s353, 16
        %s355 = scalar_lea.vmem %s7, %s354
        %p356 = pneg %p213
        %p357 = pneg %p210
        %p358 = pneg %p234
        %p359 = pneg %p231
        %p360 = scmp.lt.s32.totalorder %s20, 1
        %s361 = scalar_select %p360, %s20, 1
        %s362 = smul.addr %s361, 4
        %s363 = smul.addr %s362, 4
        %s364 = scalar_lea.vmem %s2, %s363
        %p365 = scmp.lt.s32.totalorder %s20, 1
        %s366 = scalar_select %p365, %s20, 1
        %s367 = smul.addr %s366, 4
        %s368 = smul.addr %s367, 4
        %s369 = scalar_lea.vmem %s3, %s368
        %p370 = scmp.lt.s32.totalorder %s20, 1
        %s371 = scalar_select %p370, %s20, 1
        %s372 = smul.addr %s371, 64
        %s373 = smul.addr %s372, 4
        %s374 = scalar_lea.vmem %s4, %s373
        %p375 = scmp.lt.s32.totalorder %s20, 1
        %s376 = scalar_select %p375, %s20, 1
        %s377 = smul.addr %s376, 256
        %s378 = smul.addr %s377, 4
        %s379 = scalar_lea.vmem %s5, %s378
        %p380 = scmp.lt.s32.totalorder %s20, 1
        %s381 = scalar_select %p380, %s20, 1
        %s382 = smul.addr %s381, 2
        %s383 = smul.addr %s382, 8
        %s384 = scalar_lea.vmem %s6, %s383
        %p385 = scmp.lt.s32.totalorder %s20, 1
        %s386 = scalar_select %p385, %s20, 1
        %s387 = smul.addr %s386, 16
        %s388 = scalar_lea.vmem %s7, %s387
        %p389 = scmp.eq.s32.totalorder %s20, 0
        // Predicated region
        $region53: #{tpu_custom_call.1} parent=51 // pred_check
          %p390 = pneg %p389
        $region54: #{tpu_custom_call.1} parent=51 // pred_check_branch
          %392 = sbr.rel (%p390) target = $region56
        $region55: #{tpu_custom_call.1} parent=51 // pred_region
          %v393 = vld [vmem:[%s0] sm:$0xff]
          %v394 = vld [vmem:[%s0 + $0x8] sm:$0xff]
          %vm395 = vcmask 261120
          %396 = vst.msk [vmem:[#allocation2] sm:$0xff] %vm395, %v393
          %397 = vst.msk [vmem:[#allocation2 + $0x8] sm:$0xff] %vm395, %v394
        $region56: #{tpu_custom_call.1} parent=51 // pred_fallthru
          _
        %v398 = vld [vmem:[#allocation2] sm:$0xff]
        %v399 = vld [vmem:[#allocation2 + $0x8] sm:$0xff]
        %v400 = vld [vmem:[%s364] sm:$0xf]
        %v401 = vld [vmem:[%s364 + $0x4] sm:$0xf]
        %v402 = vld [vmem:[%s364 + $0x8] sm:$0xf]
        %v403 = vld [vmem:[%s364 + $0xc] sm:$0xf]
        %v404 = vunpack.c.l.bf16 %v400
        %v405 = vunpack.c.l.bf16 %v401
        %v406 = vunpack.c.l.bf16 %v402
        %v407 = vunpack.c.l.bf16 %v403
        %v408 = vld [vmem:[%s369] sm:$0xf]
        %v409 = vld [vmem:[%s369 + $0x4] sm:$0xf]
        %v410 = vld [vmem:[%s369 + $0x8] sm:$0xf]
        %v411 = vld [vmem:[%s369 + $0xc] sm:$0xf]
        %v412 = vunpack.c.l.bf16 %v408
        %v413 = vunpack.c.l.bf16 %v409
        %v414 = vunpack.c.l.bf16 %v410
        %v415 = vunpack.c.l.bf16 %v411
        %v416 = vld [vmem:[%s374] sm:$0xff]
        %v417 = vld [vmem:[%s374 + $0x8] sm:$0xff]
        %v418 = vld [vmem:[%s374 + $0x10] sm:$0xff]
        %v419 = vld [vmem:[%s374 + $0x18] sm:$0xff]
        %v420 = vld [vmem:[%s374 + $0x20] sm:$0xff]
        %v421 = vld [vmem:[%s374 + $0x28] sm:$0xff]
        %v422 = vld [vmem:[%s374 + $0x30] sm:$0xff]
        %v423 = vld [vmem:[%s374 + $0x38] sm:$0xff]
        %v424 = vld [vmem:[%s374 + $0x40] sm:$0xff]
        %v425 = vld [vmem:[%s374 + $0x48] sm:$0xff]
        %v426 = vld [vmem:[%s374 + $0x50] sm:$0xff]
        %v427 = vld [vmem:[%s374 + $0x58] sm:$0xff]
        %v428 = vld [vmem:[%s374 + $0x60] sm:$0xff]
        %v429 = vld [vmem:[%s374 + $0x68] sm:$0xff]
        %v430 = vld [vmem:[%s374 + $0x70] sm:$0xff]
        %v431 = vld [vmem:[%s374 + $0x78] sm:$0xff]
        %v432 = vld [vmem:[%s374 + $0x80] sm:$0xff]
        %v433 = vld [vmem:[%s374 + $0x88] sm:$0xff]
        %v434 = vld [vmem:[%s374 + $0x90] sm:$0xff]
        %v435 = vld [vmem:[%s374 + $0x98] sm:$0xff]
        %v436 = vld [vmem:[%s374 + $0xa0] sm:$0xff]
        %v437 = vld [vmem:[%s374 + $0xa8] sm:$0xff]
        %v438 = vld [vmem:[%s374 + $0xb0] sm:$0xff]
        %v439 = vld [vmem:[%s374 + $0xb8] sm:$0xff]
        %v440 = vld [vmem:[%s374 + $0xc0] sm:$0xff]
        %v441 = vld [vmem:[%s374 + $0xc8] sm:$0xff]
        %v442 = vld [vmem:[%s374 + $0xd0] sm:$0xff]
        %v443 = vld [vmem:[%s374 + $0xd8] sm:$0xff]
        %v444 = vld [vmem:[%s374 + $0xe0] sm:$0xff]
        %v445 = vld [vmem:[%s374 + $0xe8] sm:$0xff]
        %v446 = vld [vmem:[%s374 + $0xf0] sm:$0xff]
        %v447 = vld [vmem:[%s374 + $0xf8] sm:$0xff]
        %v448 = vunpack.c.l.bf16 %v416
        %v449 = vunpack.c.h.bf16 %v416
        %v450 = vunpack.c.l.bf16 %v417
        %v451 = vunpack.c.h.bf16 %v417
        %v452 = vunpack.c.l.bf16 %v418
        %v453 = vunpack.c.h.bf16 %v418
        %v454 = vunpack.c.l.bf16 %v419
        %v455 = vunpack.c.h.bf16 %v419
        %v456 = vunpack.c.l.bf16 %v420
        %v457 = vunpack.c.h.bf16 %v420
        %v458 = vunpack.c.l.bf16 %v421
        %v459 = vunpack.c.h.bf16 %v421
        %v460 = vunpack.c.l.bf16 %v422
        %v461 = vunpack.c.h.bf16 %v422
        %v462 = vunpack.c.l.bf16 %v423
        %v463 = vunpack.c.h.bf16 %v423
        %v464 = vunpack.c.l.bf16 %v424
        %v465 = vunpack.c.h.bf16 %v424
        %v466 = vunpack.c.l.bf16 %v425
        %v467 = vunpack.c.h.bf16 %v425
        %v468 = vunpack.c.l.bf16 %v426
        %v469 = vunpack.c.h.bf16 %v426
        %v470 = vunpack.c.l.bf16 %v427
        %v471 = vunpack.c.h.bf16 %v427
        %v472 = vunpack.c.l.bf16 %v428
        %v473 = vunpack.c.h.bf16 %v428
        %v474 = vunpack.c.l.bf16 %v429
        %v475 = vunpack.c.h.bf16 %v429
        %v476 = vunpack.c.l.bf16 %v430
        %v477 = vunpack.c.h.bf16 %v430
        %v478 = vunpack.c.l.bf16 %v431
        %v479 = vunpack.c.h.bf16 %v431
        %v480 = vunpack.c.l.bf16 %v432
        %v481 = vunpack.c.h.bf16 %v432
        %v482 = vunpack.c.l.bf16 %v433
        %v483 = vunpack.c.h.bf16 %v433
        %v484 = vunpack.c.l.bf16 %v434
        %v485 = vunpack.c.h.bf16 %v434
        %v486 = vunpack.c.l.bf16 %v435
        %v487 = vunpack.c.h.bf16 %v435
        %v488 = vunpack.c.l.bf16 %v436
        %v489 = vunpack.c.h.bf16 %v436
        %v490 = vunpack.c.l.bf16 %v437
        %v491 = vunpack.c.h.bf16 %v437
        %v492 = vunpack.c.l.bf16 %v438
        %v493 = vunpack.c.h.bf16 %v438
        %v494 = vunpack.c.l.bf16 %v439
        %v495 = vunpack.c.h.bf16 %v439
        %v496 = vunpack.c.l.bf16 %v440
        %v497 = vunpack.c.h.bf16 %v440
        %v498 = vunpack.c.l.bf16 %v441
        %v499 = vunpack.c.h.bf16 %v441
        %v500 = vunpack.c.l.bf16 %v442
        %v501 = vunpack.c.h.bf16 %v442
        %v502 = vunpack.c.l.bf16 %v443
        %v503 = vunpack.c.h.bf16 %v443
        %v504 = vunpack.c.l.bf16 %v444
        %v505 = vunpack.c.h.bf16 %v444
        %v506 = vunpack.c.l.bf16 %v445
        %v507 = vunpack.c.h.bf16 %v445
        %v508 = vunpack.c.l.bf16 %v446
        %v509 = vunpack.c.h.bf16 %v446
        %v510 = vunpack.c.l.bf16 %v447
        %v511 = vunpack.c.h.bf16 %v447
        %v512 = vld [vmem:[%s379] sm:$0xf]
        %v513 = vld [vmem:[%s379 + $0x4] sm:$0xf]
        %v514 = vld [vmem:[%s379 + $0x8] sm:$0xf]
        %v515 = vld [vmem:[%s379 + $0xc] sm:$0xf]
        %v516 = vld [vmem:[%s379 + $0x10] sm:$0xf]
        %v517 = vld [vmem:[%s379 + $0x14] sm:$0xf]
        %v518 = vld [vmem:[%s379 + $0x18] sm:$0xf]
        %v519 = vld [vmem:[%s379 + $0x1c] sm:$0xf]
        %v520 = vld [vmem:[%s379 + $0x20] sm:$0xf]
        %v521 = vld [vmem:[%s379 + $0x24] sm:$0xf]
        %v522 = vld [vmem:[%s379 + $0x28] sm:$0xf]
        %v523 = vld [vmem:[%s379 + $0x2c] sm:$0xf]
        %v524 = vld [vmem:[%s379 + $0x30] sm:$0xf]
        %v525 = vld [vmem:[%s379 + $0x34] sm:$0xf]
        %v526 = vld [vmem:[%s379 + $0x38] sm:$0xf]
        %v527 = vld [vmem:[%s379 + $0x3c] sm:$0xf]
        %v528 = vld [vmem:[%s379 + $0x40] sm:$0xf]
        %v529 = vld [vmem:[%s379 + $0x44] sm:$0xf]
        %v530 = vld [vmem:[%s379 + $0x48] sm:$0xf]
        %v531 = vld [vmem:[%s379 + $0x4c] sm:$0xf]
        %v532 = vld [vmem:[%s379 + $0x50] sm:$0xf]
        %v533 = vld [vmem:[%s379 + $0x54] sm:$0xf]
        %v534 = vld [vmem:[%s379 + $0x58] sm:$0xf]
        %v535 = vld [vmem:[%s379 + $0x5c] sm:$0xf]
        %v536 = vld [vmem:[%s379 + $0x60] sm:$0xf]
        %v537 = vld [vmem:[%s379 + $0x64] sm:$0xf]
        %v538 = vld [vmem:[%s379 + $0x68] sm:$0xf]
        %v539 = vld [vmem:[%s379 + $0x6c] sm:$0xf]
        %v540 = vld [vmem:[%s379 + $0x70] sm:$0xf]
        %v541 = vld [vmem:[%s379 + $0x74] sm:$0xf]
        %v542 = vld [vmem:[%s379 + $0x78] sm:$0xf]
        %v543 = vld [vmem:[%s379 + $0x7c] sm:$0xf]
        %v544 = vld [vmem:[%s379 + $0x80] sm:$0xf]
        %v545 = vld [vmem:[%s379 + $0x84] sm:$0xf]
        %v546 = vld [vmem:[%s379 + $0x88] sm:$0xf]
        %v547 = vld [vmem:[%s379 + $0x8c] sm:$0xf]
        %v548 = vld [vmem:[%s379 + $0x90] sm:$0xf]
        %v549 = vld [vmem:[%s379 + $0x94] sm:$0xf]
        %v550 = vld [vmem:[%s379 + $0x98] sm:$0xf]
        %v551 = vld [vmem:[%s379 + $0x9c] sm:$0xf]
        %v552 = vld [vmem:[%s379 + $0xa0] sm:$0xf]
        %v553 = vld [vmem:[%s379 + $0xa4] sm:$0xf]
        %v554 = vld [vmem:[%s379 + $0xa8] sm:$0xf]
        %v555 = vld [vmem:[%s379 + $0xac] sm:$0xf]
        %v556 = vld [vmem:[%s379 + $0xb0] sm:$0xf]
        %v557 = vld [vmem:[%s379 + $0xb4] sm:$0xf]
        %v558 = vld [vmem:[%s379 + $0xb8] sm:$0xf]
        %v559 = vld [vmem:[%s379 + $0xbc] sm:$0xf]
        %v560 = vld [vmem:[%s379 + $0xc0] sm:$0xf]
        %v561 = vld [vmem:[%s379 + $0xc4] sm:$0xf]
        %v562 = vld [vmem:[%s379 + $0xc8] sm:$0xf]
        %v563 = vld [vmem:[%s379 + $0xcc] sm:$0xf]
        %v564 = vld [vmem:[%s379 + $0xd0] sm:$0xf]
        %v565 = vld [vmem:[%s379 + $0xd4] sm:$0xf]
        %v566 = vld [vmem:[%s379 + $0xd8] sm:$0xf]
        %v567 = vld [vmem:[%s379 + $0xdc] sm:$0xf]
        %v568 = vld [vmem:[%s379 + $0xe0] sm:$0xf]
        %v569 = vld [vmem:[%s379 + $0xe4] sm:$0xf]
        %v570 = vld [vmem:[%s379 + $0xe8] sm:$0xf]
        %v571 = vld [vmem:[%s379 + $0xec] sm:$0xf]
        %v572 = vld [vmem:[%s379 + $0xf0] sm:$0xf]
        %v573 = vld [vmem:[%s379 + $0xf4] sm:$0xf]
        %v574 = vld [vmem:[%s379 + $0xf8] sm:$0xf]
        %v575 = vld [vmem:[%s379 + $0xfc] sm:$0xf]
        %v576 = vld [vmem:[%s379 + $0x100] sm:$0xf]
        %v577 = vld [vmem:[%s379 + $0x104] sm:$0xf]
        %v578 = vld [vmem:[%s379 + $0x108] sm:$0xf]
        %v579 = vld [vmem:[%s379 + $0x10c] sm:$0xf]
        %v580 = vld [vmem:[%s379 + $0x110] sm:$0xf]
        %v581 = vld [vmem:[%s379 + $0x114] sm:$0xf]
        %v582 = vld [vmem:[%s379 + $0x118] sm:$0xf]
        %v583 = vld [vmem:[%s379 + $0x11c] sm:$0xf]
        %v584 = vld [vmem:[%s379 + $0x120] sm:$0xf]
        %v585 = vld [vmem:[%s379 + $0x124] sm:$0xf]
        %v586 = vld [vmem:[%s379 + $0x128] sm:$0xf]
        %v587 = vld [vmem:[%s379 + $0x12c] sm:$0xf]
        %v588 = vld [vmem:[%s379 + $0x130] sm:$0xf]
        %v589 = vld [vmem:[%s379 + $0x134] sm:$0xf]
        %v590 = vld [vmem:[%s379 + $0x138] sm:$0xf]
        %v591 = vld [vmem:[%s379 + $0x13c] sm:$0xf]
        %v592 = vld [vmem:[%s379 + $0x140] sm:$0xf]
        %v593 = vld [vmem:[%s379 + $0x144] sm:$0xf]
        %v594 = vld [vmem:[%s379 + $0x148] sm:$0xf]
        %v595 = vld [vmem:[%s379 + $0x14c] sm:$0xf]
        %v596 = vld [vmem:[%s379 + $0x150] sm:$0xf]
        %v597 = vld [vmem:[%s379 + $0x154] sm:$0xf]
        %v598 = vld [vmem:[%s379 + $0x158] sm:$0xf]
        %v599 = vld [vmem:[%s379 + $0x15c] sm:$0xf]
        %v600 = vld [vmem:[%s379 + $0x160] sm:$0xf]
        %v601 = vld [vmem:[%s379 + $0x164] sm:$0xf]
        %v602 = vld [vmem:[%s379 + $0x168] sm:$0xf]
        %v603 = vld [vmem:[%s379 + $0x16c] sm:$0xf]
        %v604 = vld [vmem:[%s379 + $0x170] sm:$0xf]
        %v605 = vld [vmem:[%s379 + $0x174] sm:$0xf]
        %v606 = vld [vmem:[%s379 + $0x178] sm:$0xf]
        %v607 = vld [vmem:[%s379 + $0x17c] sm:$0xf]
        %v608 = vld [vmem:[%s379 + $0x180] sm:$0xf]
        %v609 = vld [vmem:[%s379 + $0x184] sm:$0xf]
        %v610 = vld [vmem:[%s379 + $0x188] sm:$0xf]
        %v611 = vld [vmem:[%s379 + $0x18c] sm:$0xf]
        %v612 = vld [vmem:[%s379 + $0x190] sm:$0xf]
        %v613 = vld [vmem:[%s379 + $0x194] sm:$0xf]
        %v614 = vld [vmem:[%s379 + $0x198] sm:$0xf]
        %v615 = vld [vmem:[%s379 + $0x19c] sm:$0xf]
        %v616 = vld [vmem:[%s379 + $0x1a0] sm:$0xf]
        %v617 = vld [vmem:[%s379 + $0x1a4] sm:$0xf]
        %v618 = vld [vmem:[%s379 + $0x1a8] sm:$0xf]
        %v619 = vld [vmem:[%s379 + $0x1ac] sm:$0xf]
        %v620 = vld [vmem:[%s379 + $0x1b0] sm:$0xf]
        %v621 = vld [vmem:[%s379 + $0x1b4] sm:$0xf]
        %v622 = vld [vmem:[%s379 + $0x1b8] sm:$0xf]
        %v623 = vld [vmem:[%s379 + $0x1bc] sm:$0xf]
        %v624 = vld [vmem:[%s379 + $0x1c0] sm:$0xf]
        %v625 = vld [vmem:[%s379 + $0x1c4] sm:$0xf]
        %v626 = vld [vmem:[%s379 + $0x1c8] sm:$0xf]
        %v627 = vld [vmem:[%s379 + $0x1cc] sm:$0xf]
        %v628 = vld [vmem:[%s379 + $0x1d0] sm:$0xf]
        %v629 = vld [vmem:[%s379 + $0x1d4] sm:$0xf]
        %v630 = vld [vmem:[%s379 + $0x1d8] sm:$0xf]
        %v631 = vld [vmem:[%s379 + $0x1dc] sm:$0xf]
        %v632 = vld [vmem:[%s379 + $0x1e0] sm:$0xf]
        %v633 = vld [vmem:[%s379 + $0x1e4] sm:$0xf]
        %v634 = vld [vmem:[%s379 + $0x1e8] sm:$0xf]
        %v635 = vld [vmem:[%s379 + $0x1ec] sm:$0xf]
        %v636 = vld [vmem:[%s379 + $0x1f0] sm:$0xf]
        %v637 = vld [vmem:[%s379 + $0x1f4] sm:$0xf]
        %v638 = vld [vmem:[%s379 + $0x1f8] sm:$0xf]
        %v639 = vld [vmem:[%s379 + $0x1fc] sm:$0xf]
        %v640 = vld [vmem:[%s379 + $0x200] sm:$0xf]
        %v641 = vld [vmem:[%s379 + $0x204] sm:$0xf]
        %v642 = vld [vmem:[%s379 + $0x208] sm:$0xf]
        %v643 = vld [vmem:[%s379 + $0x20c] sm:$0xf]
        %v644 = vld [vmem:[%s379 + $0x210] sm:$0xf]
        %v645 = vld [vmem:[%s379 + $0x214] sm:$0xf]
        %v646 = vld [vmem:[%s379 + $0x218] sm:$0xf]
        %v647 = vld [vmem:[%s379 + $0x21c] sm:$0xf]
        %v648 = vld [vmem:[%s379 + $0x220] sm:$0xf]
        %v649 = vld [vmem:[%s379 + $0x224] sm:$0xf]
        %v650 = vld [vmem:[%s379 + $0x228] sm:$0xf]
        %v651 = vld [vmem:[%s379 + $0x22c] sm:$0xf]
        %v652 = vld [vmem:[%s379 + $0x230] sm:$0xf]
        %v653 = vld [vmem:[%s379 + $0x234] sm:$0xf]
        %v654 = vld [vmem:[%s379 + $0x238] sm:$0xf]
        %v655 = vld [vmem:[%s379 + $0x23c] sm:$0xf]
        %v656 = vld [vmem:[%s379 + $0x240] sm:$0xf]
        %v657 = vld [vmem:[%s379 + $0x244] sm:$0xf]
        %v658 = vld [vmem:[%s379 + $0x248] sm:$0xf]
        %v659 = vld [vmem:[%s379 + $0x24c] sm:$0xf]
        %v660 = vld [vmem:[%s379 + $0x250] sm:$0xf]
        %v661 = vld [vmem:[%s379 + $0x254] sm:$0xf]
        %v662 = vld [vmem:[%s379 + $0x258] sm:$0xf]
        %v663 = vld [vmem:[%s379 + $0x25c] sm:$0xf]
        %v664 = vld [vmem:[%s379 + $0x260] sm:$0xf]
        %v665 = vld [vmem:[%s379 + $0x264] sm:$0xf]
        %v666 = vld [vmem:[%s379 + $0x268] sm:$0xf]
        %v667 = vld [vmem:[%s379 + $0x26c] sm:$0xf]
        %v668 = vld [vmem:[%s379 + $0x270] sm:$0xf]
        %v669 = vld [vmem:[%s379 + $0x274] sm:$0xf]
        %v670 = vld [vmem:[%s379 + $0x278] sm:$0xf]
        %v671 = vld [vmem:[%s379 + $0x27c] sm:$0xf]
        %v672 = vld [vmem:[%s379 + $0x280] sm:$0xf]
        %v673 = vld [vmem:[%s379 + $0x284] sm:$0xf]
        %v674 = vld [vmem:[%s379 + $0x288] sm:$0xf]
        %v675 = vld [vmem:[%s379 + $0x28c] sm:$0xf]
        %v676 = vld [vmem:[%s379 + $0x290] sm:$0xf]
        %v677 = vld [vmem:[%s379 + $0x294] sm:$0xf]
        %v678 = vld [vmem:[%s379 + $0x298] sm:$0xf]
        %v679 = vld [vmem:[%s379 + $0x29c] sm:$0xf]
        %v680 = vld [vmem:[%s379 + $0x2a0] sm:$0xf]
        %v681 = vld [vmem:[%s379 + $0x2a4] sm:$0xf]
        %v682 = vld [vmem:[%s379 + $0x2a8] sm:$0xf]
        %v683 = vld [vmem:[%s379 + $0x2ac] sm:$0xf]
        %v684 = vld [vmem:[%s379 + $0x2b0] sm:$0xf]
        %v685 = vld [vmem:[%s379 + $0x2b4] sm:$0xf]
        %v686 = vld [vmem:[%s379 + $0x2b8] sm:$0xf]
        %v687 = vld [vmem:[%s379 + $0x2bc] sm:$0xf]
        %v688 = vld [vmem:[%s379 + $0x2c0] sm:$0xf]
        %v689 = vld [vmem:[%s379 + $0x2c4] sm:$0xf]
        %v690 = vld [vmem:[%s379 + $0x2c8] sm:$0xf]
        %v691 = vld [vmem:[%s379 + $0x2cc] sm:$0xf]
        %v692 = vld [vmem:[%s379 + $0x2d0] sm:$0xf]
        %v693 = vld [vmem:[%s379 + $0x2d4] sm:$0xf]
        %v694 = vld [vmem:[%s379 + $0x2d8] sm:$0xf]
        %v695 = vld [vmem:[%s379 + $0x2dc] sm:$0xf]
        %v696 = vld [vmem:[%s379 + $0x2e0] sm:$0xf]
        %v697 = vld [vmem:[%s379 + $0x2e4] sm:$0xf]
        %v698 = vld [vmem:[%s379 + $0x2e8] sm:$0xf]
        %v699 = vld [vmem:[%s379 + $0x2ec] sm:$0xf]
        %v700 = vld [vmem:[%s379 + $0x2f0] sm:$0xf]
        %v701 = vld [vmem:[%s379 + $0x2f4] sm:$0xf]
        %v702 = vld [vmem:[%s379 + $0x2f8] sm:$0xf]
        %v703 = vld [vmem:[%s379 + $0x2fc] sm:$0xf]
        %v704 = vld [vmem:[%s379 + $0x300] sm:$0xf]
        %v705 = vld [vmem:[%s379 + $0x304] sm:$0xf]
        %v706 = vld [vmem:[%s379 + $0x308] sm:$0xf]
        %v707 = vld [vmem:[%s379 + $0x30c] sm:$0xf]
        %v708 = vld [vmem:[%s379 + $0x310] sm:$0xf]
        %v709 = vld [vmem:[%s379 + $0x314] sm:$0xf]
        %v710 = vld [vmem:[%s379 + $0x318] sm:$0xf]
        %v711 = vld [vmem:[%s379 + $0x31c] sm:$0xf]
        %v712 = vld [vmem:[%s379 + $0x320] sm:$0xf]
        %v713 = vld [vmem:[%s379 + $0x324] sm:$0xf]
        %v714 = vld [vmem:[%s379 + $0x328] sm:$0xf]
        %v715 = vld [vmem:[%s379 + $0x32c] sm:$0xf]
        %v716 = vld [vmem:[%s379 + $0x330] sm:$0xf]
        %v717 = vld [vmem:[%s379 + $0x334] sm:$0xf]
        %v718 = vld [vmem:[%s379 + $0x338] sm:$0xf]
        %v719 = vld [vmem:[%s379 + $0x33c] sm:$0xf]
        %v720 = vld [vmem:[%s379 + $0x340] sm:$0xf]
        %v721 = vld [vmem:[%s379 + $0x344] sm:$0xf]
        %v722 = vld [vmem:[%s379 + $0x348] sm:$0xf]
        %v723 = vld [vmem:[%s379 + $0x34c] sm:$0xf]
        %v724 = vld [vmem:[%s379 + $0x350] sm:$0xf]
        %v725 = vld [vmem:[%s379 + $0x354] sm:$0xf]
        %v726 = vld [vmem:[%s379 + $0x358] sm:$0xf]
        %v727 = vld [vmem:[%s379 + $0x35c] sm:$0xf]
        %v728 = vld [vmem:[%s379 + $0x360] sm:$0xf]
        %v729 = vld [vmem:[%s379 + $0x364] sm:$0xf]
        %v730 = vld [vmem:[%s379 + $0x368] sm:$0xf]
        %v731 = vld [vmem:[%s379 + $0x36c] sm:$0xf]
        %v732 = vld [vmem:[%s379 + $0x370] sm:$0xf]
        %v733 = vld [vmem:[%s379 + $0x374] sm:$0xf]
        %v734 = vld [vmem:[%s379 + $0x378] sm:$0xf]
        %v735 = vld [vmem:[%s379 + $0x37c] sm:$0xf]
        %v736 = vld [vmem:[%s379 + $0x380] sm:$0xf]
        %v737 = vld [vmem:[%s379 + $0x384] sm:$0xf]
        %v738 = vld [vmem:[%s379 + $0x388] sm:$0xf]
        %v739 = vld [vmem:[%s379 + $0x38c] sm:$0xf]
        %v740 = vld [vmem:[%s379 + $0x390] sm:$0xf]
        %v741 = vld [vmem:[%s379 + $0x394] sm:$0xf]
        %v742 = vld [vmem:[%s379 + $0x398] sm:$0xf]
        %v743 = vld [vmem:[%s379 + $0x39c] sm:$0xf]
        %v744 = vld [vmem:[%s379 + $0x3a0] sm:$0xf]
        %v745 = vld [vmem:[%s379 + $0x3a4] sm:$0xf]
        %v746 = vld [vmem:[%s379 + $0x3a8] sm:$0xf]
        %v747 = vld [vmem:[%s379 + $0x3ac] sm:$0xf]
        %v748 = vld [vmem:[%s379 + $0x3b0] sm:$0xf]
        %v749 = vld [vmem:[%s379 + $0x3b4] sm:$0xf]
        %v750 = vld [vmem:[%s379 + $0x3b8] sm:$0xf]
        %v751 = vld [vmem:[%s379 + $0x3bc] sm:$0xf]
        %v752 = vld [vmem:[%s379 + $0x3c0] sm:$0xf]
        %v753 = vld [vmem:[%s379 + $0x3c4] sm:$0xf]
        %v754 = vld [vmem:[%s379 + $0x3c8] sm:$0xf]
        %v755 = vld [vmem:[%s379 + $0x3cc] sm:$0xf]
        %v756 = vld [vmem:[%s379 + $0x3d0] sm:$0xf]
        %v757 = vld [vmem:[%s379 + $0x3d4] sm:$0xf]
        %v758 = vld [vmem:[%s379 + $0x3d8] sm:$0xf]
        %v759 = vld [vmem:[%s379 + $0x3dc] sm:$0xf]
        %v760 = vld [vmem:[%s379 + $0x3e0] sm:$0xf]
        %v761 = vld [vmem:[%s379 + $0x3e4] sm:$0xf]
        %v762 = vld [vmem:[%s379 + $0x3e8] sm:$0xf]
        %v763 = vld [vmem:[%s379 + $0x3ec] sm:$0xf]
        %v764 = vld [vmem:[%s379 + $0x3f0] sm:$0xf]
        %v765 = vld [vmem:[%s379 + $0x3f4] sm:$0xf]
        %v766 = vld [vmem:[%s379 + $0x3f8] sm:$0xf]
        %v767 = vld [vmem:[%s379 + $0x3fc] sm:$0xf]
        %v768 = vunpack.c.l.bf16 %v512
        %v769 = vunpack.c.l.bf16 %v513
        %v770 = vunpack.c.l.bf16 %v514
        %v771 = vunpack.c.l.bf16 %v515
        %v772 = vunpack.c.l.bf16 %v516
        %v773 = vunpack.c.l.bf16 %v517
        %v774 = vunpack.c.l.bf16 %v518
        %v775 = vunpack.c.l.bf16 %v519
        %v776 = vunpack.c.l.bf16 %v520
        %v777 = vunpack.c.l.bf16 %v521
        %v778 = vunpack.c.l.bf16 %v522
        %v779 = vunpack.c.l.bf16 %v523
        %v780 = vunpack.c.l.bf16 %v524
        %v781 = vunpack.c.l.bf16 %v525
        %v782 = vunpack.c.l.bf16 %v526
        %v783 = vunpack.c.l.bf16 %v527
        %v784 = vunpack.c.l.bf16 %v528
        %v785 = vunpack.c.l.bf16 %v529
        %v786 = vunpack.c.l.bf16 %v530
        %v787 = vunpack.c.l.bf16 %v531
        %v788 = vunpack.c.l.bf16 %v532
        %v789 = vunpack.c.l.bf16 %v533
        %v790 = vunpack.c.l.bf16 %v534
        %v791 = vunpack.c.l.bf16 %v535
        %v792 = vunpack.c.l.bf16 %v536
        %v793 = vunpack.c.l.bf16 %v537
        %v794 = vunpack.c.l.bf16 %v538
        %v795 = vunpack.c.l.bf16 %v539
        %v796 = vunpack.c.l.bf16 %v540
        %v797 = vunpack.c.l.bf16 %v541
        %v798 = vunpack.c.l.bf16 %v542
        %v799 = vunpack.c.l.bf16 %v543
        %v800 = vunpack.c.l.bf16 %v544
        %v801 = vunpack.c.l.bf16 %v545
        %v802 = vunpack.c.l.bf16 %v546
        %v803 = vunpack.c.l.bf16 %v547
        %v804 = vunpack.c.l.bf16 %v548
        %v805 = vunpack.c.l.bf16 %v549
        %v806 = vunpack.c.l.bf16 %v550
        %v807 = vunpack.c.l.bf16 %v551
        %v808 = vunpack.c.l.bf16 %v552
        %v809 = vunpack.c.l.bf16 %v553
        %v810 = vunpack.c.l.bf16 %v554
        %v811 = vunpack.c.l.bf16 %v555
        %v812 = vunpack.c.l.bf16 %v556
        %v813 = vunpack.c.l.bf16 %v557
        %v814 = vunpack.c.l.bf16 %v558
        %v815 = vunpack.c.l.bf16 %v559
        %v816 = vunpack.c.l.bf16 %v560
        %v817 = vunpack.c.l.bf16 %v561
        %v818 = vunpack.c.l.bf16 %v562
        %v819 = vunpack.c.l.bf16 %v563
        %v820 = vunpack.c.l.bf16 %v564
        %v821 = vunpack.c.l.bf16 %v565
        %v822 = vunpack.c.l.bf16 %v566
        %v823 = vunpack.c.l.bf16 %v567
        %v824 = vunpack.c.l.bf16 %v568
        %v825 = vunpack.c.l.bf16 %v569
        %v826 = vunpack.c.l.bf16 %v570
        %v827 = vunpack.c.l.bf16 %v571
        %v828 = vunpack.c.l.bf16 %v572
        %v829 = vunpack.c.l.bf16 %v573
        %v830 = vunpack.c.l.bf16 %v574
        %v831 = vunpack.c.l.bf16 %v575
        %v832 = vunpack.c.l.bf16 %v576
        %v833 = vunpack.c.l.bf16 %v577
        %v834 = vunpack.c.l.bf16 %v578
        %v835 = vunpack.c.l.bf16 %v579
        %v836 = vunpack.c.l.bf16 %v580
        %v837 = vunpack.c.l.bf16 %v581
        %v838 = vunpack.c.l.bf16 %v582
        %v839 = vunpack.c.l.bf16 %v583
        %v840 = vunpack.c.l.bf16 %v584
        %v841 = vunpack.c.l.bf16 %v585
        %v842 = vunpack.c.l.bf16 %v586
        %v843 = vunpack.c.l.bf16 %v587
        %v844 = vunpack.c.l.bf16 %v588
        %v845 = vunpack.c.l.bf16 %v589
        %v846 = vunpack.c.l.bf16 %v590
        %v847 = vunpack.c.l.bf16 %v591
        %v848 = vunpack.c.l.bf16 %v592
        %v849 = vunpack.c.l.bf16 %v593
        %v850 = vunpack.c.l.bf16 %v594
        %v851 = vunpack.c.l.bf16 %v595
        %v852 = vunpack.c.l.bf16 %v596
        %v853 = vunpack.c.l.bf16 %v597
        %v854 = vunpack.c.l.bf16 %v598
        %v855 = vunpack.c.l.bf16 %v599
        %v856 = vunpack.c.l.bf16 %v600
        %v857 = vunpack.c.l.bf16 %v601
        %v858 = vunpack.c.l.bf16 %v602
        %v859 = vunpack.c.l.bf16 %v603
        %v860 = vunpack.c.l.bf16 %v604
        %v861 = vunpack.c.l.bf16 %v605
        %v862 = vunpack.c.l.bf16 %v606
        %v863 = vunpack.c.l.bf16 %v607
        %v864 = vunpack.c.l.bf16 %v608
        %v865 = vunpack.c.l.bf16 %v609
        %v866 = vunpack.c.l.bf16 %v610
        %v867 = vunpack.c.l.bf16 %v611
        %v868 = vunpack.c.l.bf16 %v612
        %v869 = vunpack.c.l.bf16 %v613
        %v870 = vunpack.c.l.bf16 %v614
        %v871 = vunpack.c.l.bf16 %v615
        %v872 = vunpack.c.l.bf16 %v616
        %v873 = vunpack.c.l.bf16 %v617
        %v874 = vunpack.c.l.bf16 %v618
        %v875 = vunpack.c.l.bf16 %v619
        %v876 = vunpack.c.l.bf16 %v620
        %v877 = vunpack.c.l.bf16 %v621
        %v878 = vunpack.c.l.bf16 %v622
        %v879 = vunpack.c.l.bf16 %v623
        %v880 = vunpack.c.l.bf16 %v624
        %v881 = vunpack.c.l.bf16 %v625
        %v882 = vunpack.c.l.bf16 %v626
        %v883 = vunpack.c.l.bf16 %v627
        %v884 = vunpack.c.l.bf16 %v628
        %v885 = vunpack.c.l.bf16 %v629
        %v886 = vunpack.c.l.bf16 %v630
        %v887 = vunpack.c.l.bf16 %v631
        %v888 = vunpack.c.l.bf16 %v632
        %v889 = vunpack.c.l.bf16 %v633
        %v890 = vunpack.c.l.bf16 %v634
        %v891 = vunpack.c.l.bf16 %v635
        %v892 = vunpack.c.l.bf16 %v636
        %v893 = vunpack.c.l.bf16 %v637
        %v894 = vunpack.c.l.bf16 %v638
        %v895 = vunpack.c.l.bf16 %v639
        %v896 = vunpack.c.l.bf16 %v640
        %v897 = vunpack.c.l.bf16 %v641
        %v898 = vunpack.c.l.bf16 %v642
        %v899 = vunpack.c.l.bf16 %v643
        %v900 = vunpack.c.l.bf16 %v644
        %v901 = vunpack.c.l.bf16 %v645
        %v902 = vunpack.c.l.bf16 %v646
        %v903 = vunpack.c.l.bf16 %v647
        %v904 = vunpack.c.l.bf16 %v648
        %v905 = vunpack.c.l.bf16 %v649
        %v906 = vunpack.c.l.bf16 %v650
        %v907 = vunpack.c.l.bf16 %v651
        %v908 = vunpack.c.l.bf16 %v652
        %v909 = vunpack.c.l.bf16 %v653
        %v910 = vunpack.c.l.bf16 %v654
        %v911 = vunpack.c.l.bf16 %v655
        %v912 = vunpack.c.l.bf16 %v656
        %v913 = vunpack.c.l.bf16 %v657
        %v914 = vunpack.c.l.bf16 %v658
        %v915 = vunpack.c.l.bf16 %v659
        %v916 = vunpack.c.l.bf16 %v660
        %v917 = vunpack.c.l.bf16 %v661
        %v918 = vunpack.c.l.bf16 %v662
        %v919 = vunpack.c.l.bf16 %v663
        %v920 = vunpack.c.l.bf16 %v664
        %v921 = vunpack.c.l.bf16 %v665
        %v922 = vunpack.c.l.bf16 %v666
        %v923 = vunpack.c.l.bf16 %v667
        %v924 = vunpack.c.l.bf16 %v668
        %v925 = vunpack.c.l.bf16 %v669
        %v926 = vunpack.c.l.bf16 %v670
        %v927 = vunpack.c.l.bf16 %v671
        %v928 = vunpack.c.l.bf16 %v672
        %v929 = vunpack.c.l.bf16 %v673
        %v930 = vunpack.c.l.bf16 %v674
        %v931 = vunpack.c.l.bf16 %v675
        %v932 = vunpack.c.l.bf16 %v676
        %v933 = vunpack.c.l.bf16 %v677
        %v934 = vunpack.c.l.bf16 %v678
        %v935 = vunpack.c.l.bf16 %v679
        %v936 = vunpack.c.l.bf16 %v680
        %v937 = vunpack.c.l.bf16 %v681
        %v938 = vunpack.c.l.bf16 %v682
        %v939 = vunpack.c.l.bf16 %v683
        %v940 = vunpack.c.l.bf16 %v684
        %v941 = vunpack.c.l.bf16 %v685
        %v942 = vunpack.c.l.bf16 %v686
        %v943 = vunpack.c.l.bf16 %v687
        %v944 = vunpack.c.l.bf16 %v688
        %v945 = vunpack.c.l.bf16 %v689
        %v946 = vunpack.c.l.bf16 %v690
        %v947 = vunpack.c.l.bf16 %v691
        %v948 = vunpack.c.l.bf16 %v692
        %v949 = vunpack.c.l.bf16 %v693
        %v950 = vunpack.c.l.bf16 %v694
        %v951 = vunpack.c.l.bf16 %v695
        %v952 = vunpack.c.l.bf16 %v696
        %v953 = vunpack.c.l.bf16 %v697
        %v954 = vunpack.c.l.bf16 %v698
        %v955 = vunpack.c.l.bf16 %v699
        %v956 = vunpack.c.l.bf16 %v700
        %v957 = vunpack.c.l.bf16 %v701
        %v958 = vunpack.c.l.bf16 %v702
        %v959 = vunpack.c.l.bf16 %v703
        %v960 = vunpack.c.l.bf16 %v704
        %v961 = vunpack.c.l.bf16 %v705
        %v962 = vunpack.c.l.bf16 %v706
        %v963 = vunpack.c.l.bf16 %v707
        %v964 = vunpack.c.l.bf16 %v708
        %v965 = vunpack.c.l.bf16 %v709
        %v966 = vunpack.c.l.bf16 %v710
        %v967 = vunpack.c.l.bf16 %v711
        %v968 = vunpack.c.l.bf16 %v712
        %v969 = vunpack.c.l.bf16 %v713
        %v970 = vunpack.c.l.bf16 %v714
        %v971 = vunpack.c.l.bf16 %v715
        %v972 = vunpack.c.l.bf16 %v716
        %v973 = vunpack.c.l.bf16 %v717
        %v974 = vunpack.c.l.bf16 %v718
        %v975 = vunpack.c.l.bf16 %v719
        %v976 = vunpack.c.l.bf16 %v720
        %v977 = vunpack.c.l.bf16 %v721
        %v978 = vunpack.c.l.bf16 %v722
        %v979 = vunpack.c.l.bf16 %v723
        %v980 = vunpack.c.l.bf16 %v724
        %v981 = vunpack.c.l.bf16 %v725
        %v982 = vunpack.c.l.bf16 %v726
        %v983 = vunpack.c.l.bf16 %v727
        %v984 = vunpack.c.l.bf16 %v728
        %v985 = vunpack.c.l.bf16 %v729
        %v986 = vunpack.c.l.bf16 %v730
        %v987 = vunpack.c.l.bf16 %v731
        %v988 = vunpack.c.l.bf16 %v732
        %v989 = vunpack.c.l.bf16 %v733
        %v990 = vunpack.c.l.bf16 %v734
        %v991 = vunpack.c.l.bf16 %v735
        %v992 = vunpack.c.l.bf16 %v736
        %v993 = vunpack.c.l.bf16 %v737
        %v994 = vunpack.c.l.bf16 %v738
        %v995 = vunpack.c.l.bf16 %v739
        %v996 = vunpack.c.l.bf16 %v740
        %v997 = vunpack.c.l.bf16 %v741
        %v998 = vunpack.c.l.bf16 %v742
        %v999 = vunpack.c.l.bf16 %v743
        %v1000 = vunpack.c.l.bf16 %v744
        %v1001 = vunpack.c.l.bf16 %v745
        %v1002 = vunpack.c.l.bf16 %v746
        %v1003 = vunpack.c.l.bf16 %v747
        %v1004 = vunpack.c.l.bf16 %v748
        %v1005 = vunpack.c.l.bf16 %v749
        %v1006 = vunpack.c.l.bf16 %v750
        %v1007 = vunpack.c.l.bf16 %v751
        %v1008 = vunpack.c.l.bf16 %v752
        %v1009 = vunpack.c.l.bf16 %v753
        %v1010 = vunpack.c.l.bf16 %v754
        %v1011 = vunpack.c.l.bf16 %v755
        %v1012 = vunpack.c.l.bf16 %v756
        %v1013 = vunpack.c.l.bf16 %v757
        %v1014 = vunpack.c.l.bf16 %v758
        %v1015 = vunpack.c.l.bf16 %v759
        %v1016 = vunpack.c.l.bf16 %v760
        %v1017 = vunpack.c.l.bf16 %v761
        %v1018 = vunpack.c.l.bf16 %v762
        %v1019 = vunpack.c.l.bf16 %v763
        %v1020 = vunpack.c.l.bf16 %v764
        %v1021 = vunpack.c.l.bf16 %v765
        %v1022 = vunpack.c.l.bf16 %v766
        %v1023 = vunpack.c.l.bf16 %v767
        %v1024 = vld [vmem:[%s384] sm:$0xff]
        %v1025 = vld [vmem:[%s384 + $0x8] sm:$0x1]
        %v1026 = vld [vmem:[%s388] sm:$0xff]
        %v1027 = vld [vmem:[%s388 + $0x8] sm:$0xff]
        %v1028 = vld [vmem:[%s1] sm:$0xff]
        %v1029 = vld [vmem:[%s1 + $0x8] sm:$0xff]
        %vm1030 = vcmask 261120
        %v1032 = vsel %vm1030, %v398, 0
        %v1035 = vsel %vm1030, %v399, 0
        %1037 = vmatprep.subr.mxu0 0.0
        %1038 = vmatpush1.msra.mxu0 %v404
        %1039 = vmatprep.subr.mxu0 0.0
        %1040 = vmatpush1.msra.mxu0 %v405
        %1041 = vmatprep.subr.mxu0 0.0
        %1042 = vmatpush1.msra.mxu0 %v406
        %1043 = vmatprep.subr.mxu0 0.0
        %1044 = vmatpush1.msra.mxu0 %v407
        %1045 = vmatprep.subr.mxu0 0.0
        %1046 = vmatpush1.msra.mxu0 0.0
        %1047 = vmatprep.subr.mxu0 0.0
        %1048 = vmatpush1.msra.mxu0 0.0
        %1049 = vmatprep.subr.mxu0 0.0
        %1050 = vmatpush1.msra.mxu0 0.0
        %1051 = vmatprep.subr.mxu0 0.0
        %1052 = vmatpush1.msra.mxu0 0.0
        %1053 = vmatprep.subr.mxu0 0.0
        %1054 = vmatpush1.msra.mxu0 0.0
        %1055 = vmatprep.subr.mxu0 0.0
        %1056 = vmatpush1.msra.mxu0 0.0
        %1057 = vmatprep.subr.mxu0 0.0
        %1058 = vmatpush1.msra.mxu0 0.0
        %1059 = vmatprep.subr.mxu0 0.0
        %1060 = vmatpush1.msra.mxu0 0.0
        %1061 = vmatprep.subr.mxu0 0.0
        %1062 = vmatpush1.msra.mxu0 0.0
        %1063 = vmatprep.subr.mxu0 0.0
        %1064 = vmatpush1.msra.mxu0 0.0
        %1065 = vmatprep.subr.mxu0 0.0
        %1066 = vmatpush1.msra.mxu0 0.0
        %1067 = vmatprep.subr.mxu0 0.0
        %1068 = vmatpush1.msra.mxu0 0.0
        %1069 = vmatprep.subr.mxu0 0.0
        %1070 = vmatpush1.msra.mxu0 0.0
        %1071 = vmatprep.subr.mxu0 0.0
        %1072 = vmatpush1.msra.mxu0 0.0
        %1073 = vmatprep.subr.mxu0 0.0
        %1074 = vmatpush1.msra.mxu0 0.0
        %1075 = vmatprep.subr.mxu0 0.0
        %1076 = vmatpush1.msra.mxu0 0.0
        %1077 = vmatprep.subr.mxu0 0.0
        %1078 = vmatpush1.msra.mxu0 0.0
        %1079 = vmatprep.subr.mxu0 0.0
        %1080 = vmatpush1.msra.mxu0 0.0
        %1081 = vmatprep.subr.mxu0 0.0
        %1082 = vmatpush1.msra.mxu0 0.0
        %1083 = vmatprep.subr.mxu0 0.0
        %1084 = vmatpush1.msra.mxu0 0.0
        %1085 = vmatprep.subr.mxu0 0.0
        %1086 = vmatpush1.msra.mxu0 0.0
        %1087 = vmatprep.subr.mxu0 0.0
        %1088 = vmatpush1.msra.mxu0 0.0
        %1089 = vmatprep.subr.mxu0 0.0
        %1090 = vmatpush1.msra.mxu0 0.0
        %1091 = vmatprep.subr.mxu0 0.0
        %1092 = vmatpush1.msra.mxu0 0.0
        %1093 = vmatprep.subr.mxu0 0.0
        %1094 = vmatpush1.msra.mxu0 0.0
        %1095 = vmatprep.subr.mxu0 0.0
        %1096 = vmatpush1.msra.mxu0 0.0
        %1097 = vmatprep.subr.mxu0 0.0
        %1098 = vmatpush1.msra.mxu0 0.0
        %1099 = vmatprep.subr.mxu0 0.0
        %1100 = vmatpush1.msra.mxu0 0.0
        %1101 = vmatprep.mubr.f32.mxu0 0.0
        %1102 = vmatmul.mubr.f32.gmra.mrb[0].mxu0 %v1032
        %v1103 = vpop.f32.mrb[0].mxu0
        %v1104 = vadd.f32 0.0, %v1103
        %v1105 = vpop.f32.mrb[0].mxu0
        %1106 = vmatprep.mubr.f32.mxu0 0.0
        %1107 = vmatmul.mubr.f32.gmra.mrb[0].mxu0 %v1035
        %v1108 = vpop.f32.mrb[0].mxu0
        %v1109 = vadd.f32 0.0, %v1108
        %v1110 = vpop.f32.mrb[0].mxu0
        %1111 = vdwg.mxu0
        %v1112 = vlaneseq
        %v1113 = vshrl.u32 %v1112, 7
        %v1114 = vsub.s32 0, %v1113
        %v1115 = vrot.slane %v1024, %v1114
        %v1116 = vadd.f32 %v1104, %v1115
        %v1117 = vadd.f32 %v1109, %v1115
        %v1118 = vlaneseq
        %v1119 = vshrl.u32 %v1118, 7
        %v1120 = vsub.s32 1, %v1119
        %v1121 = vrot.slane %v1024, %v1120
        %1123 = vrot.lane.b32.xlu0 %v1121, 32
        %v1124 = vpop.permute.xlu0 %1123
        %v1126 = vadd.f32 %v1104, %v1124
        %v1127 = vadd.f32 %v1109, %v1124
        %v1128 = vlaneseq
        %v1129 = vshrl.u32 %v1128, 7
        %v1130 = vsub.s32 2, %v1129
        %v1131 = vrot.slane %v1024, %v1130
        %1133 = vrot.lane.b32.xlu0 %v1131, 64
        %v1134 = vpop.permute.xlu0 %1133
        %v1136 = vadd.f32 %v1104, %v1134
        %v1137 = vadd.f32 %v1109, %v1134
        %1140 = vrot.lane.b32.xlu0 %v1116, 120
        %v1141 = vpop.permute.xlu0 %1140
        %1142 = vrot.lane.b32.xlu0 %v1117, 120
        %v1143 = vpop.permute.xlu0 %1142
        %1146 = vrot.lane.b32.xlu0 %v1116, 112
        %v1147 = vpop.permute.xlu0 %1146
        %1148 = vrot.lane.b32.xlu0 %v1117, 112
        %v1149 = vpop.permute.xlu0 %1148
        %1152 = vrot.lane.b32.xlu0 %v1116, 104
        %v1153 = vpop.permute.xlu0 %1152
        %1154 = vrot.lane.b32.xlu0 %v1117, 104
        %v1155 = vpop.permute.xlu0 %1154
        %v1158 = vcombine.low %v1116, %v1147
        %v1159 = vcombine.high %v1116, %v1147
        %v1161 = vunpack.c.l.s4 1983009808
        %v1162 = vunpack.c.0.s8 %v1161
        %v1163 = vlaneseq
        %v1164 = vshrl.u32 %v1163, 7
        %v1165 = vsub.s32 %v1162, %v1164
        %v1166 = vrot.slane %v1158, %v1165
        %v1168 = vunpack.c.l.s4 1983009808
        %v1169 = vunpack.c.0.s8 %v1168
        %v1170 = vlaneseq
        %v1171 = vshrl.u32 %v1170, 7
        %v1172 = vsub.s32 %v1169, %v1171
        %v1173 = vrot.slane %v1159, %v1172
        %v1174 = vcombine.low %v1141, %v1153
        %v1175 = vcombine.high %v1141, %v1153
        %v1177 = vunpack.c.l.s4 1983009808
        %v1178 = vunpack.c.0.s8 %v1177
        %v1179 = vlaneseq
        %v1180 = vshrl.u32 %v1179, 7
        %v1181 = vsub.s32 %v1178, %v1180
        %v1182 = vrot.slane %v1174, %v1181
        %v1184 = vunpack.c.l.s4 1983009808
        %v1185 = vunpack.c.0.s8 %v1184
        %v1186 = vlaneseq
        %v1187 = vshrl.u32 %v1186, 7
        %v1188 = vsub.s32 %v1185, %v1187
        %v1189 = vrot.slane %v1175, %v1188
        %v1190 = vcombine.low %v1166, %v1182
        %v1191 = vcombine.high %v1166, %v1182
        %v1193 = vunpack.c.l.s4 1934713408
        %v1194 = vunpack.c.0.s8 %v1193
        %v1195 = vlaneseq
        %v1196 = vshrl.u32 %v1195, 7
        %v1197 = vsub.s32 %v1194, %v1196
        %v1198 = vrot.slane %v1190, %v1197
        %v1200 = vunpack.c.l.s4 1934713408
        %v1201 = vunpack.c.0.s8 %v1200
        %v1202 = vlaneseq
        %v1203 = vshrl.u32 %v1202, 7
        %v1204 = vsub.s32 %v1201, %v1203
        %v1205 = vrot.slane %v1191, %v1204
        %v1206 = vcombine.low %v1173, %v1189
        %v1207 = vcombine.high %v1173, %v1189
        %v1209 = vunpack.c.l.s4 1934713408
        %v1210 = vunpack.c.0.s8 %v1209
        %v1211 = vlaneseq
        %v1212 = vshrl.u32 %v1211, 7
        %v1213 = vsub.s32 %v1210, %v1212
        %v1214 = vrot.slane %v1206, %v1213
        %v1216 = vunpack.c.l.s4 1934713408
        %v1217 = vunpack.c.0.s8 %v1216
        %v1218 = vlaneseq
        %v1219 = vshrl.u32 %v1218, 7
        %v1220 = vsub.s32 %v1217, %v1219
        %v1221 = vrot.slane %v1207, %v1220
        %v1222 = vcombine.high %v1198, 0.0
        %v1223 = vcombine.high %v1205, 0.0
        %v1224 = vcombine.high %v1214, 0.0
        %v1225 = vcombine.high %v1221, 0.0
        %v1226 = vcombine.low %v1117, %v1149
        %v1227 = vcombine.high %v1117, %v1149
        %v1229 = vunpack.c.l.s4 1983009808
        %v1230 = vunpack.c.0.s8 %v1229
        %v1231 = vlaneseq
        %v1232 = vshrl.u32 %v1231, 7
        %v1233 = vsub.s32 %v1230, %v1232
        %v1234 = vrot.slane %v1226, %v1233
        %v1236 = vunpack.c.l.s4 1983009808
        %v1237 = vunpack.c.0.s8 %v1236
        %v1238 = vlaneseq
        %v1239 = vshrl.u32 %v1238, 7
        %v1240 = vsub.s32 %v1237, %v1239
        %v1241 = vrot.slane %v1227, %v1240
        %v1242 = vcombine.low %v1143, %v1155
        %v1243 = vcombine.high %v1143, %v1155
        %v1245 = vunpack.c.l.s4 1983009808
        %v1246 = vunpack.c.0.s8 %v1245
        %v1247 = vlaneseq
        %v1248 = vshrl.u32 %v1247, 7
        %v1249 = vsub.s32 %v1246, %v1248
        %v1250 = vrot.slane %v1242, %v1249
        %v1252 = vunpack.c.l.s4 1983009808
        %v1253 = vunpack.c.0.s8 %v1252
        %v1254 = vlaneseq
        %v1255 = vshrl.u32 %v1254, 7
        %v1256 = vsub.s32 %v1253, %v1255
        %v1257 = vrot.slane %v1243, %v1256
        %v1258 = vcombine.low %v1234, %v1250
        %v1259 = vcombine.high %v1234, %v1250
        %v1261 = vunpack.c.l.s4 1934713408
        %v1262 = vunpack.c.0.s8 %v1261
        %v1263 = vlaneseq
        %v1264 = vshrl.u32 %v1263, 7
        %v1265 = vsub.s32 %v1262, %v1264
        %v1266 = vrot.slane %v1258, %v1265
        %v1268 = vunpack.c.l.s4 1934713408
        %v1269 = vunpack.c.0.s8 %v1268
        %v1270 = vlaneseq
        %v1271 = vshrl.u32 %v1270, 7
        %v1272 = vsub.s32 %v1269, %v1271
        %v1273 = vrot.slane %v1259, %v1272
        %v1274 = vcombine.low %v1241, %v1257
        %v1275 = vcombine.high %v1241, %v1257
        %v1277 = vunpack.c.l.s4 1934713408
        %v1278 = vunpack.c.0.s8 %v1277
        %v1279 = vlaneseq
        %v1280 = vshrl.u32 %v1279, 7
        %v1281 = vsub.s32 %v1278, %v1280
        %v1282 = vrot.slane %v1274, %v1281
        %v1284 = vunpack.c.l.s4 1934713408
        %v1285 = vunpack.c.0.s8 %v1284
        %v1286 = vlaneseq
        %v1287 = vshrl.u32 %v1286, 7
        %v1288 = vsub.s32 %v1285, %v1287
        %v1289 = vrot.slane %v1275, %v1288
        %v1290 = vcombine.high %v1266, 0.0
        %v1291 = vcombine.high %v1273, 0.0
        %v1292 = vcombine.high %v1282, 0.0
        %v1293 = vcombine.high %v1289, 0.0
        %v1294 = vcombine.low %v1198, %v1205
        %v1296 = vunpack.c.l.s4 1983009808
        %v1297 = vunpack.c.0.s8 %v1296
        %v1298 = vlaneseq
        %v1299 = vshrl.u32 %v1298, 7
        %v1300 = vsub.s32 %v1297, %v1299
        %v1301 = vrot.slane %v1294, %v1300
        %v1302 = vcombine.low %v1222, %v1223
        %v1304 = vunpack.c.l.s4 1983009808
        %v1305 = vunpack.c.0.s8 %v1304
        %v1306 = vlaneseq
        %v1307 = vshrl.u32 %v1306, 7
        %v1308 = vsub.s32 %v1305, %v1307
        %v1309 = vrot.slane %v1302, %v1308
        %v1310 = vcombine.low %v1214, %v1221
        %v1312 = vunpack.c.l.s4 1983009808
        %v1313 = vunpack.c.0.s8 %v1312
        %v1314 = vlaneseq
        %v1315 = vshrl.u32 %v1314, 7
        %v1316 = vsub.s32 %v1313, %v1315
        %v1317 = vrot.slane %v1310, %v1316
        %v1318 = vcombine.low %v1224, %v1225
        %v1320 = vunpack.c.l.s4 1983009808
        %v1321 = vunpack.c.0.s8 %v1320
        %v1322 = vlaneseq
        %v1323 = vshrl.u32 %v1322, 7
        %v1324 = vsub.s32 %v1321, %v1323
        %v1325 = vrot.slane %v1318, %v1324
        %v1326 = vcombine.low %v1301, %v1309
        %v1327 = vcombine.high %v1301, %v1309
        %v1329 = vunpack.c.l.s4 1934713408
        %v1330 = vunpack.c.0.s8 %v1329
        %v1331 = vlaneseq
        %v1332 = vshrl.u32 %v1331, 7
        %v1333 = vsub.s32 %v1330, %v1332
        %v1334 = vrot.slane %v1326, %v1333
        %v1336 = vunpack.c.l.s4 1934713408
        %v1337 = vunpack.c.0.s8 %v1336
        %v1338 = vlaneseq
        %v1339 = vshrl.u32 %v1338, 7
        %v1340 = vsub.s32 %v1337, %v1339
        %v1341 = vrot.slane %v1327, %v1340
        %v1342 = vcombine.low %v1317, %v1325
        %v1343 = vcombine.high %v1317, %v1325
        %v1345 = vunpack.c.l.s4 1934713408
        %v1346 = vunpack.c.0.s8 %v1345
        %v1347 = vlaneseq
        %v1348 = vshrl.u32 %v1347, 7
        %v1349 = vsub.s32 %v1346, %v1348
        %v1350 = vrot.slane %v1342, %v1349
        %v1352 = vunpack.c.l.s4 1934713408
        %v1353 = vunpack.c.0.s8 %v1352
        %v1354 = vlaneseq
        %v1355 = vshrl.u32 %v1354, 7
        %v1356 = vsub.s32 %v1353, %v1355
        %v1357 = vrot.slane %v1343, %v1356
        %v1358 = vcombine.low %v1334, %v1350
        %v1359 = vcombine.high %v1334, %v1350
        %v1360 = vcombine.low %v1341, %v1357
        %v1361 = vcombine.high %v1341, %v1357
        %v1362 = vcombine.low %v1266, %v1273
        %v1364 = vunpack.c.l.s4 1983009808
        %v1365 = vunpack.c.0.s8 %v1364
        %v1366 = vlaneseq
        %v1367 = vshrl.u32 %v1366, 7
        %v1368 = vsub.s32 %v1365, %v1367
        %v1369 = vrot.slane %v1362, %v1368
        %v1370 = vcombine.low %v1290, %v1291
        %v1372 = vunpack.c.l.s4 1983009808
        %v1373 = vunpack.c.0.s8 %v1372
        %v1374 = vlaneseq
        %v1375 = vshrl.u32 %v1374, 7
        %v1376 = vsub.s32 %v1373, %v1375
        %v1377 = vrot.slane %v1370, %v1376
        %v1378 = vcombine.low %v1282, %v1289
        %v1380 = vunpack.c.l.s4 1983009808
        %v1381 = vunpack.c.0.s8 %v1380
        %v1382 = vlaneseq
        %v1383 = vshrl.u32 %v1382, 7
        %v1384 = vsub.s32 %v1381, %v1383
        %v1385 = vrot.slane %v1378, %v1384
        %v1386 = vcombine.low %v1292, %v1293
        %v1388 = vunpack.c.l.s4 1983009808
        %v1389 = vunpack.c.0.s8 %v1388
        %v1390 = vlaneseq
        %v1391 = vshrl.u32 %v1390, 7
        %v1392 = vsub.s32 %v1389, %v1391
        %v1393 = vrot.slane %v1386, %v1392
        %v1394 = vcombine.low %v1369, %v1377
        %v1395 = vcombine.high %v1369, %v1377
        %v1397 = vunpack.c.l.s4 1934713408
        %v1398 = vunpack.c.0.s8 %v1397
        %v1399 = vlaneseq
        %v1400 = vshrl.u32 %v1399, 7
        %v1401 = vsub.s32 %v1398, %v1400
        %v1402 = vrot.slane %v1394, %v1401
        %v1404 = vunpack.c.l.s4 1934713408
        %v1405 = vunpack.c.0.s8 %v1404
        %v1406 = vlaneseq
        %v1407 = vshrl.u32 %v1406, 7
        %v1408 = vsub.s32 %v1405, %v1407
        %v1409 = vrot.slane %v1395, %v1408
        %v1410 = vcombine.low %v1385, %v1393
        %v1411 = vcombine.high %v1385, %v1393
        %v1413 = vunpack.c.l.s4 1934713408
        %v1414 = vunpack.c.0.s8 %v1413
        %v1415 = vlaneseq
        %v1416 = vshrl.u32 %v1415, 7
        %v1417 = vsub.s32 %v1414, %v1416
        %v1418 = vrot.slane %v1410, %v1417
        %v1420 = vunpack.c.l.s4 1934713408
        %v1421 = vunpack.c.0.s8 %v1420
        %v1422 = vlaneseq
        %v1423 = vshrl.u32 %v1422, 7
        %v1424 = vsub.s32 %v1421, %v1423
        %v1425 = vrot.slane %v1411, %v1424
        %v1426 = vcombine.low %v1402, %v1418
        %v1427 = vcombine.high %v1402, %v1418
        %v1428 = vcombine.low %v1409, %v1425
        %v1429 = vcombine.high %v1409, %v1425
        %1432 = vrot.lane.b32.xlu0 %v1126, 120
        %v1433 = vpop.permute.xlu0 %1432
        %1434 = vrot.lane.b32.xlu0 %v1127, 120
        %v1435 = vpop.permute.xlu0 %1434
        %1436 = vrot.lane.b32.xlu0 %v1126, 112
        %v1437 = vpop.permute.xlu0 %1436
        %1438 = vrot.lane.b32.xlu0 %v1127, 112
        %v1439 = vpop.permute.xlu0 %1438
        %1440 = vrot.lane.b32.xlu0 %v1126, 104
        %v1441 = vpop.permute.xlu0 %1440
        %1442 = vrot.lane.b32.xlu0 %v1127, 104
        %v1443 = vpop.permute.xlu0 %1442
        %1444 = vrot.lane.b32.xlu0 %v1126, 96
        %v1445 = vpop.permute.xlu0 %1444
        %1446 = vrot.lane.b32.xlu0 %v1127, 96
        %v1447 = vpop.permute.xlu0 %1446
        %1448 = vrot.lane.b32.xlu0 %v1433, 96
        %v1449 = vpop.permute.xlu0 %1448
        %1450 = vrot.lane.b32.xlu0 %v1435, 96
        %v1451 = vpop.permute.xlu0 %1450
        %1452 = vrot.lane.b32.xlu0 %v1437, 96
        %v1453 = vpop.permute.xlu0 %1452
        %1454 = vrot.lane.b32.xlu0 %v1439, 96
        %v1455 = vpop.permute.xlu0 %1454
        %1456 = vrot.lane.b32.xlu0 %v1441, 96
        %v1457 = vpop.permute.xlu0 %1456
        %1458 = vrot.lane.b32.xlu0 %v1443, 96
        %v1459 = vpop.permute.xlu0 %1458
        %v1468 = vcombine.low %v1445, %v1453
        %v1469 = vcombine.high %v1445, %v1453
        %v1471 = vunpack.c.l.s4 1983009808
        %v1472 = vunpack.c.0.s8 %v1471
        %v1473 = vlaneseq
        %v1474 = vshrl.u32 %v1473, 7
        %v1475 = vsub.s32 %v1472, %v1474
        %v1476 = vrot.slane %v1468, %v1475
        %v1478 = vunpack.c.l.s4 1983009808
        %v1479 = vunpack.c.0.s8 %v1478
        %v1480 = vlaneseq
        %v1481 = vshrl.u32 %v1480, 7
        %v1482 = vsub.s32 %v1479, %v1481
        %v1483 = vrot.slane %v1469, %v1482
        %v1484 = vcombine.low %v1449, %v1457
        %v1485 = vcombine.high %v1449, %v1457
        %v1487 = vunpack.c.l.s4 1983009808
        %v1488 = vunpack.c.0.s8 %v1487
        %v1489 = vlaneseq
        %v1490 = vshrl.u32 %v1489, 7
        %v1491 = vsub.s32 %v1488, %v1490
        %v1492 = vrot.slane %v1484, %v1491
        %v1494 = vunpack.c.l.s4 1983009808
        %v1495 = vunpack.c.0.s8 %v1494
        %v1496 = vlaneseq
        %v1497 = vshrl.u32 %v1496, 7
        %v1498 = vsub.s32 %v1495, %v1497
        %v1499 = vrot.slane %v1485, %v1498
        %v1500 = vcombine.low %v1476, %v1492
        %v1501 = vcombine.high %v1476, %v1492
        %v1503 = vunpack.c.l.s4 1934713408
        %v1504 = vunpack.c.0.s8 %v1503
        %v1505 = vlaneseq
        %v1506 = vshrl.u32 %v1505, 7
        %v1507 = vsub.s32 %v1504, %v1506
        %v1508 = vrot.slane %v1500, %v1507
        %v1510 = vunpack.c.l.s4 1934713408
        %v1511 = vunpack.c.0.s8 %v1510
        %v1512 = vlaneseq
        %v1513 = vshrl.u32 %v1512, 7
        %v1514 = vsub.s32 %v1511, %v1513
        %v1515 = vrot.slane %v1501, %v1514
        %v1516 = vcombine.low %v1483, %v1499
        %v1517 = vcombine.high %v1483, %v1499
        %v1519 = vunpack.c.l.s4 1934713408
        %v1520 = vunpack.c.0.s8 %v1519
        %v1521 = vlaneseq
        %v1522 = vshrl.u32 %v1521, 7
        %v1523 = vsub.s32 %v1520, %v1522
        %v1524 = vrot.slane %v1516, %v1523
        %v1526 = vunpack.c.l.s4 1934713408
        %v1527 = vunpack.c.0.s8 %v1526
        %v1528 = vlaneseq
        %v1529 = vshrl.u32 %v1528, 7
        %v1530 = vsub.s32 %v1527, %v1529
        %v1531 = vrot.slane %v1517, %v1530
        %v1532 = vcombine.high %v1508, 0.0
        %v1533 = vcombine.high %v1515, 0.0
        %v1534 = vcombine.high %v1524, 0.0
        %v1535 = vcombine.high %v1531, 0.0
        %v1536 = vcombine.low %v1447, %v1455
        %v1537 = vcombine.high %v1447, %v1455
        %v1539 = vunpack.c.l.s4 1983009808
        %v1540 = vunpack.c.0.s8 %v1539
        %v1541 = vlaneseq
        %v1542 = vshrl.u32 %v1541, 7
        %v1543 = vsub.s32 %v1540, %v1542
        %v1544 = vrot.slane %v1536, %v1543
        %v1546 = vunpack.c.l.s4 1983009808
        %v1547 = vunpack.c.0.s8 %v1546
        %v1548 = vlaneseq
        %v1549 = vshrl.u32 %v1548, 7
        %v1550 = vsub.s32 %v1547, %v1549
        %v1551 = vrot.slane %v1537, %v1550
        %v1552 = vcombine.low %v1451, %v1459
        %v1553 = vcombine.high %v1451, %v1459
        %v1555 = vunpack.c.l.s4 1983009808
        %v1556 = vunpack.c.0.s8 %v1555
        %v1557 = vlaneseq
        %v1558 = vshrl.u32 %v1557, 7
        %v1559 = vsub.s32 %v1556, %v1558
        %v1560 = vrot.slane %v1552, %v1559
        %v1562 = vunpack.c.l.s4 1983009808
        %v1563 = vunpack.c.0.s8 %v1562
        %v1564 = vlaneseq
        %v1565 = vshrl.u32 %v1564, 7
        %v1566 = vsub.s32 %v1563, %v1565
        %v1567 = vrot.slane %v1553, %v1566
        %v1568 = vcombine.low %v1544, %v1560
        %v1569 = vcombine.high %v1544, %v1560
        %v1571 = vunpack.c.l.s4 1934713408
        %v1572 = vunpack.c.0.s8 %v1571
        %v1573 = vlaneseq
        %v1574 = vshrl.u32 %v1573, 7
        %v1575 = vsub.s32 %v1572, %v1574
        %v1576 = vrot.slane %v1568, %v1575
        %v1578 = vunpack.c.l.s4 1934713408
        %v1579 = vunpack.c.0.s8 %v1578
        %v1580 = vlaneseq
        %v1581 = vshrl.u32 %v1580, 7
        %v1582 = vsub.s32 %v1579, %v1581
        %v1583 = vrot.slane %v1569, %v1582
        %v1584 = vcombine.low %v1551, %v1567
        %v1585 = vcombine.high %v1551, %v1567
        %v1587 = vunpack.c.l.s4 1934713408
        %v1588 = vunpack.c.0.s8 %v1587
        %v1589 = vlaneseq
        %v1590 = vshrl.u32 %v1589, 7
        %v1591 = vsub.s32 %v1588, %v1590
        %v1592 = vrot.slane %v1584, %v1591
        %v1594 = vunpack.c.l.s4 1934713408
        %v1595 = vunpack.c.0.s8 %v1594
        %v1596 = vlaneseq
        %v1597 = vshrl.u32 %v1596, 7
        %v1598 = vsub.s32 %v1595, %v1597
        %v1599 = vrot.slane %v1585, %v1598
        %v1600 = vcombine.high %v1576, 0.0
        %v1601 = vcombine.high %v1583, 0.0
        %v1602 = vcombine.high %v1592, 0.0
        %v1603 = vcombine.high %v1599, 0.0
        %v1604 = vcombine.low %v1508, %v1515
        %v1606 = vunpack.c.l.s4 1983009808
        %v1607 = vunpack.c.0.s8 %v1606
        %v1608 = vlaneseq
        %v1609 = vshrl.u32 %v1608, 7
        %v1610 = vsub.s32 %v1607, %v1609
        %v1611 = vrot.slane %v1604, %v1610
        %v1612 = vcombine.low %v1532, %v1533
        %v1614 = vunpack.c.l.s4 1983009808
        %v1615 = vunpack.c.0.s8 %v1614
        %v1616 = vlaneseq
        %v1617 = vshrl.u32 %v1616, 7
        %v1618 = vsub.s32 %v1615, %v1617
        %v1619 = vrot.slane %v1612, %v1618
        %v1620 = vcombine.low %v1524, %v1531
        %v1622 = vunpack.c.l.s4 1983009808
        %v1623 = vunpack.c.0.s8 %v1622
        %v1624 = vlaneseq
        %v1625 = vshrl.u32 %v1624, 7
        %v1626 = vsub.s32 %v1623, %v1625
        %v1627 = vrot.slane %v1620, %v1626
        %v1628 = vcombine.low %v1534, %v1535
        %v1630 = vunpack.c.l.s4 1983009808
        %v1631 = vunpack.c.0.s8 %v1630
        %v1632 = vlaneseq
        %v1633 = vshrl.u32 %v1632, 7
        %v1634 = vsub.s32 %v1631, %v1633
        %v1635 = vrot.slane %v1628, %v1634
        %v1636 = vcombine.low %v1611, %v1619
        %v1637 = vcombine.high %v1611, %v1619
        %v1639 = vunpack.c.l.s4 1934713408
        %v1640 = vunpack.c.0.s8 %v1639
        %v1641 = vlaneseq
        %v1642 = vshrl.u32 %v1641, 7
        %v1643 = vsub.s32 %v1640, %v1642
        %v1644 = vrot.slane %v1636, %v1643
        %v1646 = vunpack.c.l.s4 1934713408
        %v1647 = vunpack.c.0.s8 %v1646
        %v1648 = vlaneseq
        %v1649 = vshrl.u32 %v1648, 7
        %v1650 = vsub.s32 %v1647, %v1649
        %v1651 = vrot.slane %v1637, %v1650
        %v1652 = vcombine.low %v1627, %v1635
        %v1653 = vcombine.high %v1627, %v1635
        %v1655 = vunpack.c.l.s4 1934713408
        %v1656 = vunpack.c.0.s8 %v1655
        %v1657 = vlaneseq
        %v1658 = vshrl.u32 %v1657, 7
        %v1659 = vsub.s32 %v1656, %v1658
        %v1660 = vrot.slane %v1652, %v1659
        %v1662 = vunpack.c.l.s4 1934713408
        %v1663 = vunpack.c.0.s8 %v1662
        %v1664 = vlaneseq
        %v1665 = vshrl.u32 %v1664, 7
        %v1666 = vsub.s32 %v1663, %v1665
        %v1667 = vrot.slane %v1653, %v1666
        %v1668 = vcombine.low %v1644, %v1660
        %v1669 = vcombine.high %v1644, %v1660
        %v1670 = vcombine.low %v1651, %v1667
        %v1671 = vcombine.high %v1651, %v1667
        %v1672 = vcombine.low %v1576, %v1583
        %v1674 = vunpack.c.l.s4 1983009808
        %v1675 = vunpack.c.0.s8 %v1674
        %v1676 = vlaneseq
        %v1677 = vshrl.u32 %v1676, 7
        %v1678 = vsub.s32 %v1675, %v1677
        %v1679 = vrot.slane %v1672, %v1678
        %v1680 = vcombine.low %v1600, %v1601
        %v1682 = vunpack.c.l.s4 1983009808
        %v1683 = vunpack.c.0.s8 %v1682
        %v1684 = vlaneseq
        %v1685 = vshrl.u32 %v1684, 7
        %v1686 = vsub.s32 %v1683, %v1685
        %v1687 = vrot.slane %v1680, %v1686
        %v1688 = vcombine.low %v1592, %v1599
        %v1690 = vunpack.c.l.s4 1983009808
        %v1691 = vunpack.c.0.s8 %v1690
        %v1692 = vlaneseq
        %v1693 = vshrl.u32 %v1692, 7
        %v1694 = vsub.s32 %v1691, %v1693
        %v1695 = vrot.slane %v1688, %v1694
        %v1696 = vcombine.low %v1602, %v1603
        %v1698 = vunpack.c.l.s4 1983009808
        %v1699 = vunpack.c.0.s8 %v1698
        %v1700 = vlaneseq
        %v1701 = vshrl.u32 %v1700, 7
        %v1702 = vsub.s32 %v1699, %v1701
        %v1703 = vrot.slane %v1696, %v1702
        %v1704 = vcombine.low %v1679, %v1687
        %v1705 = vcombine.high %v1679, %v1687
        %v1707 = vunpack.c.l.s4 1934713408
        %v1708 = vunpack.c.0.s8 %v1707
        %v1709 = vlaneseq
        %v1710 = vshrl.u32 %v1709, 7
        %v1711 = vsub.s32 %v1708, %v1710
        %v1712 = vrot.slane %v1704, %v1711
        %v1714 = vunpack.c.l.s4 1934713408
        %v1715 = vunpack.c.0.s8 %v1714
        %v1716 = vlaneseq
        %v1717 = vshrl.u32 %v1716, 7
        %v1718 = vsub.s32 %v1715, %v1717
        %v1719 = vrot.slane %v1705, %v1718
        %v1720 = vcombine.low %v1695, %v1703
        %v1721 = vcombine.high %v1695, %v1703
        %v1723 = vunpack.c.l.s4 1934713408
        %v1724 = vunpack.c.0.s8 %v1723
        %v1725 = vlaneseq
        %v1726 = vshrl.u32 %v1725, 7
        %v1727 = vsub.s32 %v1724, %v1726
        %v1728 = vrot.slane %v1720, %v1727
        %v1730 = vunpack.c.l.s4 1934713408
        %v1731 = vunpack.c.0.s8 %v1730
        %v1732 = vlaneseq
        %v1733 = vshrl.u32 %v1732, 7
        %v1734 = vsub.s32 %v1731, %v1733
        %v1735 = vrot.slane %v1721, %v1734
        %v1736 = vcombine.low %v1712, %v1728
        %v1737 = vcombine.high %v1712, %v1728
        %v1738 = vcombine.low %v1719, %v1735
        %v1739 = vcombine.high %v1719, %v1735
        %1742 = vrot.lane.b32.xlu0 %v1136, 120
        %v1743 = vpop.permute.xlu0 %1742
        %1744 = vrot.lane.b32.xlu0 %v1137, 120
        %v1745 = vpop.permute.xlu0 %1744
        %1746 = vrot.lane.b32.xlu0 %v1136, 112
        %v1747 = vpop.permute.xlu0 %1746
        %1748 = vrot.lane.b32.xlu0 %v1137, 112
        %v1749 = vpop.permute.xlu0 %1748
        %1750 = vrot.lane.b32.xlu0 %v1136, 104
        %v1751 = vpop.permute.xlu0 %1750
        %1752 = vrot.lane.b32.xlu0 %v1137, 104
        %v1753 = vpop.permute.xlu0 %1752
        %1754 = vrot.lane.b32.xlu0 %v1136, 64
        %v1755 = vpop.permute.xlu0 %1754
        %1756 = vrot.lane.b32.xlu0 %v1137, 64
        %v1757 = vpop.permute.xlu0 %1756
        %1758 = vrot.lane.b32.xlu0 %v1743, 64
        %v1759 = vpop.permute.xlu0 %1758
        %1760 = vrot.lane.b32.xlu0 %v1745, 64
        %v1761 = vpop.permute.xlu0 %1760
        %1762 = vrot.lane.b32.xlu0 %v1747, 64
        %v1763 = vpop.permute.xlu0 %1762
        %1764 = vrot.lane.b32.xlu0 %v1749, 64
        %v1765 = vpop.permute.xlu0 %1764
        %1766 = vrot.lane.b32.xlu0 %v1751, 64
        %v1767 = vpop.permute.xlu0 %1766
        %1768 = vrot.lane.b32.xlu0 %v1753, 64
        %v1769 = vpop.permute.xlu0 %1768
        %v1778 = vcombine.low %v1755, %v1763
        %v1779 = vcombine.high %v1755, %v1763
        %v1781 = vunpack.c.l.s4 1983009808
        %v1782 = vunpack.c.0.s8 %v1781
        %v1783 = vlaneseq
        %v1784 = vshrl.u32 %v1783, 7
        %v1785 = vsub.s32 %v1782, %v1784
        %v1786 = vrot.slane %v1778, %v1785
        %v1788 = vunpack.c.l.s4 1983009808
        %v1789 = vunpack.c.0.s8 %v1788
        %v1790 = vlaneseq
        %v1791 = vshrl.u32 %v1790, 7
        %v1792 = vsub.s32 %v1789, %v1791
        %v1793 = vrot.slane %v1779, %v1792
        %v1794 = vcombine.low %v1759, %v1767
        %v1795 = vcombine.high %v1759, %v1767
        %v1797 = vunpack.c.l.s4 1983009808
        %v1798 = vunpack.c.0.s8 %v1797
        %v1799 = vlaneseq
        %v1800 = vshrl.u32 %v1799, 7
        %v1801 = vsub.s32 %v1798, %v1800
        %v1802 = vrot.slane %v1794, %v1801
        %v1804 = vunpack.c.l.s4 1983009808
        %v1805 = vunpack.c.0.s8 %v1804
        %v1806 = vlaneseq
        %v1807 = vshrl.u32 %v1806, 7
        %v1808 = vsub.s32 %v1805, %v1807
        %v1809 = vrot.slane %v1795, %v1808
        %v1810 = vcombine.low %v1786, %v1802
        %v1811 = vcombine.high %v1786, %v1802
        %v1813 = vunpack.c.l.s4 1934713408
        %v1814 = vunpack.c.0.s8 %v1813
        %v1815 = vlaneseq
        %v1816 = vshrl.u32 %v1815, 7
        %v1817 = vsub.s32 %v1814, %v1816
        %v1818 = vrot.slane %v1810, %v1817
        %v1820 = vunpack.c.l.s4 1934713408
        %v1821 = vunpack.c.0.s8 %v1820
        %v1822 = vlaneseq
        %v1823 = vshrl.u32 %v1822, 7
        %v1824 = vsub.s32 %v1821, %v1823
        %v1825 = vrot.slane %v1811, %v1824
        %v1826 = vcombine.low %v1793, %v1809
        %v1827 = vcombine.high %v1793, %v1809
        %v1829 = vunpack.c.l.s4 1934713408
        %v1830 = vunpack.c.0.s8 %v1829
        %v1831 = vlaneseq
        %v1832 = vshrl.u32 %v1831, 7
        %v1833 = vsub.s32 %v1830, %v1832
        %v1834 = vrot.slane %v1826, %v1833
        %v1836 = vunpack.c.l.s4 1934713408
        %v1837 = vunpack.c.0.s8 %v1836
        %v1838 = vlaneseq
        %v1839 = vshrl.u32 %v1838, 7
        %v1840 = vsub.s32 %v1837, %v1839
        %v1841 = vrot.slane %v1827, %v1840
        %v1842 = vcombine.high %v1818, 0.0
        %v1843 = vcombine.high %v1825, 0.0
        %v1844 = vcombine.high %v1834, 0.0
        %v1845 = vcombine.high %v1841, 0.0
        %v1846 = vcombine.low %v1757, %v1765
        %v1847 = vcombine.high %v1757, %v1765
        %v1849 = vunpack.c.l.s4 1983009808
        %v1850 = vunpack.c.0.s8 %v1849
        %v1851 = vlaneseq
        %v1852 = vshrl.u32 %v1851, 7
        %v1853 = vsub.s32 %v1850, %v1852
        %v1854 = vrot.slane %v1846, %v1853
        %v1856 = vunpack.c.l.s4 1983009808
        %v1857 = vunpack.c.0.s8 %v1856
        %v1858 = vlaneseq
        %v1859 = vshrl.u32 %v1858, 7
        %v1860 = vsub.s32 %v1857, %v1859
        %v1861 = vrot.slane %v1847, %v1860
        %v1862 = vcombine.low %v1761, %v1769
        %v1863 = vcombine.high %v1761, %v1769
        %v1865 = vunpack.c.l.s4 1983009808
        %v1866 = vunpack.c.0.s8 %v1865
        %v1867 = vlaneseq
        %v1868 = vshrl.u32 %v1867, 7
        %v1869 = vsub.s32 %v1866, %v1868
        %v1870 = vrot.slane %v1862, %v1869
        %v1872 = vunpack.c.l.s4 1983009808
        %v1873 = vunpack.c.0.s8 %v1872
        %v1874 = vlaneseq
        %v1875 = vshrl.u32 %v1874, 7
        %v1876 = vsub.s32 %v1873, %v1875
        %v1877 = vrot.slane %v1863, %v1876
        %v1878 = vcombine.low %v1854, %v1870
        %v1879 = vcombine.high %v1854, %v1870
        %v1881 = vunpack.c.l.s4 1934713408
        %v1882 = vunpack.c.0.s8 %v1881
        %v1883 = vlaneseq
        %v1884 = vshrl.u32 %v1883, 7
        %v1885 = vsub.s32 %v1882, %v1884
        %v1886 = vrot.slane %v1878, %v1885
        %v1888 = vunpack.c.l.s4 1934713408
        %v1889 = vunpack.c.0.s8 %v1888
        %v1890 = vlaneseq
        %v1891 = vshrl.u32 %v1890, 7
        %v1892 = vsub.s32 %v1889, %v1891
        %v1893 = vrot.slane %v1879, %v1892
        %v1894 = vcombine.low %v1861, %v1877
        %v1895 = vcombine.high %v1861, %v1877
        %v1897 = vunpack.c.l.s4 1934713408
        %v1898 = vunpack.c.0.s8 %v1897
        %v1899 = vlaneseq
        %v1900 = vshrl.u32 %v1899, 7
        %v1901 = vsub.s32 %v1898, %v1900
        %v1902 = vrot.slane %v1894, %v1901
        %v1904 = vunpack.c.l.s4 1934713408
        %v1905 = vunpack.c.0.s8 %v1904
        %v1906 = vlaneseq
        %v1907 = vshrl.u32 %v1906, 7
        %v1908 = vsub.s32 %v1905, %v1907
        %v1909 = vrot.slane %v1895, %v1908
        %v1910 = vcombine.high %v1886, 0.0
        %v1911 = vcombine.high %v1893, 0.0
        %v1912 = vcombine.high %v1902, 0.0
        %v1913 = vcombine.high %v1909, 0.0
        %v1914 = vcombine.low %v1818, %v1825
        %v1916 = vunpack.c.l.s4 1983009808
        %v1917 = vunpack.c.0.s8 %v1916
        %v1918 = vlaneseq
        %v1919 = vshrl.u32 %v1918, 7
        %v1920 = vsub.s32 %v1917, %v1919
        %v1921 = vrot.slane %v1914, %v1920
        %v1922 = vcombine.low %v1842, %v1843
        %v1924 = vunpack.c.l.s4 1983009808
        %v1925 = vunpack.c.0.s8 %v1924
        %v1926 = vlaneseq
        %v1927 = vshrl.u32 %v1926, 7
        %v1928 = vsub.s32 %v1925, %v1927
        %v1929 = vrot.slane %v1922, %v1928
        %v1930 = vcombine.low %v1834, %v1841
        %v1932 = vunpack.c.l.s4 1983009808
        %v1933 = vunpack.c.0.s8 %v1932
        %v1934 = vlaneseq
        %v1935 = vshrl.u32 %v1934, 7
        %v1936 = vsub.s32 %v1933, %v1935
        %v1937 = vrot.slane %v1930, %v1936
        %v1938 = vcombine.low %v1844, %v1845
        %v1940 = vunpack.c.l.s4 1983009808
        %v1941 = vunpack.c.0.s8 %v1940
        %v1942 = vlaneseq
        %v1943 = vshrl.u32 %v1942, 7
        %v1944 = vsub.s32 %v1941, %v1943
        %v1945 = vrot.slane %v1938, %v1944
        %v1946 = vcombine.low %v1921, %v1929
        %v1947 = vcombine.high %v1921, %v1929
        %v1949 = vunpack.c.l.s4 1934713408
        %v1950 = vunpack.c.0.s8 %v1949
        %v1951 = vlaneseq
        %v1952 = vshrl.u32 %v1951, 7
        %v1953 = vsub.s32 %v1950, %v1952
        %v1954 = vrot.slane %v1946, %v1953
        %v1956 = vunpack.c.l.s4 1934713408
        %v1957 = vunpack.c.0.s8 %v1956
        %v1958 = vlaneseq
        %v1959 = vshrl.u32 %v1958, 7
        %v1960 = vsub.s32 %v1957, %v1959
        %v1961 = vrot.slane %v1947, %v1960
        %v1962 = vcombine.low %v1937, %v1945
        %v1963 = vcombine.high %v1937, %v1945
        %v1965 = vunpack.c.l.s4 1934713408
        %v1966 = vunpack.c.0.s8 %v1965
        %v1967 = vlaneseq
        %v1968 = vshrl.u32 %v1967, 7
        %v1969 = vsub.s32 %v1966, %v1968
        %v1970 = vrot.slane %v1962, %v1969
        %v1972 = vunpack.c.l.s4 1934713408
        %v1973 = vunpack.c.0.s8 %v1972
        %v1974 = vlaneseq
        %v1975 = vshrl.u32 %v1974, 7
        %v1976 = vsub.s32 %v1973, %v1975
        %v1977 = vrot.slane %v1963, %v1976
        %v1978 = vcombine.low %v1954, %v1970
        %v1979 = vcombine.high %v1954, %v1970
        %v1980 = vcombine.low %v1961, %v1977
        %v1981 = vcombine.high %v1961, %v1977
        %v1982 = vcombine.low %v1886, %v1893
        %v1984 = vunpack.c.l.s4 1983009808
        %v1985 = vunpack.c.0.s8 %v1984
        %v1986 = vlaneseq
        %v1987 = vshrl.u32 %v1986, 7
        %v1988 = vsub.s32 %v1985, %v1987
        %v1989 = vrot.slane %v1982, %v1988
        %v1990 = vcombine.low %v1910, %v1911
        %v1992 = vunpack.c.l.s4 1983009808
        %v1993 = vunpack.c.0.s8 %v1992
        %v1994 = vlaneseq
        %v1995 = vshrl.u32 %v1994, 7
        %v1996 = vsub.s32 %v1993, %v1995
        %v1997 = vrot.slane %v1990, %v1996
        %v1998 = vcombine.low %v1902, %v1909
        %v2000 = vunpack.c.l.s4 1983009808
        %v2001 = vunpack.c.0.s8 %v2000
        %v2002 = vlaneseq
        %v2003 = vshrl.u32 %v2002, 7
        %v2004 = vsub.s32 %v2001, %v2003
        %v2005 = vrot.slane %v1998, %v2004
        %v2006 = vcombine.low %v1912, %v1913
        %v2008 = vunpack.c.l.s4 1983009808
        %v2009 = vunpack.c.0.s8 %v2008
        %v2010 = vlaneseq
        %v2011 = vshrl.u32 %v2010, 7
        %v2012 = vsub.s32 %v2009, %v2011
        %v2013 = vrot.slane %v2006, %v2012
        %v2014 = vcombine.low %v1989, %v1997
        %v2015 = vcombine.high %v1989, %v1997
        %v2017 = vunpack.c.l.s4 1934713408
        %v2018 = vunpack.c.0.s8 %v2017
        %v2019 = vlaneseq
        %v2020 = vshrl.u32 %v2019, 7
        %v2021 = vsub.s32 %v2018, %v2020
        %v2022 = vrot.slane %v2014, %v2021
        %v2024 = vunpack.c.l.s4 1934713408
        %v2025 = vunpack.c.0.s8 %v2024
        %v2026 = vlaneseq
        %v2027 = vshrl.u32 %v2026, 7
        %v2028 = vsub.s32 %v2025, %v2027
        %v2029 = vrot.slane %v2015, %v2028
        %v2030 = vcombine.low %v2005, %v2013
        %v2031 = vcombine.high %v2005, %v2013
        %v2033 = vunpack.c.l.s4 1934713408
        %v2034 = vunpack.c.0.s8 %v2033
        %v2035 = vlaneseq
        %v2036 = vshrl.u32 %v2035, 7
        %v2037 = vsub.s32 %v2034, %v2036
        %v2038 = vrot.slane %v2030, %v2037
        %v2040 = vunpack.c.l.s4 1934713408
        %v2041 = vunpack.c.0.s8 %v2040
        %v2042 = vlaneseq
        %v2043 = vshrl.u32 %v2042, 7
        %v2044 = vsub.s32 %v2041, %v2043
        %v2045 = vrot.slane %v2031, %v2044
        %v2046 = vcombine.low %v2022, %v2038
        %v2047 = vcombine.high %v2022, %v2038
        %v2048 = vcombine.low %v2029, %v2045
        %v2049 = vcombine.high %v2029, %v2045
        %vm2050 = vcmask 64512
        %v2052 = vsel %vm2050, %v1358, 0
        %v2055 = vsel %vm2050, %v1426, 0
        %v2058 = vsel %vm2050, %v1668, 0
        %v2061 = vsel %vm2050, %v1736, 0
        %2063 = vmatprep.subr.mxu0 0.0
        %2064 = vmatpush1.xpose.msra.mxu0 %v2058
        %2065 = vmatprep.subr.mxu0 0.0
        %2066 = vmatpush1.xpose.msra.mxu0 %v2061
        %2067 = vmatprep.subr.mxu0 0.0
        %2068 = vmatpush1.xpose.msra.mxu0 0.0
        %2069 = vmatprep.subr.mxu0 0.0
        %2070 = vmatpush1.xpose.msra.mxu0 0.0
        %2071 = vmatprep.subr.mxu0 0.0
        %2072 = vmatpush1.xpose.msra.mxu0 0.0
        %2073 = vmatprep.subr.mxu0 0.0
        %2074 = vmatpush1.xpose.msra.mxu0 0.0
        %2075 = vmatprep.subr.mxu0 0.0
        %2076 = vmatpush1.xpose.msra.mxu0 0.0
        %2077 = vmatprep.subr.mxu0 0.0
        %2078 = vmatpush1.xpose.msra.mxu0 0.0
        %2079 = vmatprep.subr.mxu0 0.0
        %2080 = vmatpush1.xpose.msra.mxu0 0.0
        %2081 = vmatprep.subr.mxu0 0.0
        %2082 = vmatpush1.xpose.msra.mxu0 0.0
        %2083 = vmatprep.subr.mxu0 0.0
        %2084 = vmatpush1.xpose.msra.mxu0 0.0
        %2085 = vmatprep.subr.mxu0 0.0
        %2086 = vmatpush1.xpose.msra.mxu0 0.0
        %2087 = vmatprep.subr.mxu0 0.0
        %2088 = vmatpush1.xpose.msra.mxu0 0.0
        %2089 = vmatprep.subr.mxu0 0.0
        %2090 = vmatpush1.xpose.msra.mxu0 0.0
        %2091 = vmatprep.subr.mxu0 0.0
        %2092 = vmatpush1.xpose.msra.mxu0 0.0
        %2093 = vmatprep.subr.mxu0 0.0
        %2094 = vmatpush1.xpose.msra.mxu0 0.0
        %2095 = vmatprep.subr.mxu0 0.0
        %2096 = vmatpush1.xpose.msra.mxu0 0.0
        %2097 = vmatprep.subr.mxu0 0.0
        %2098 = vmatpush1.xpose.msra.mxu0 0.0
        %2099 = vmatprep.subr.mxu0 0.0
        %2100 = vmatpush1.xpose.msra.mxu0 0.0
        %2101 = vmatprep.subr.mxu0 0.0
        %2102 = vmatpush1.xpose.msra.mxu0 0.0
        %2103 = vmatprep.subr.mxu0 0.0
        %2104 = vmatpush1.xpose.msra.mxu0 0.0
        %2105 = vmatprep.subr.mxu0 0.0
        %2106 = vmatpush1.xpose.msra.mxu0 0.0
        %2107 = vmatprep.subr.mxu0 0.0
        %2108 = vmatpush1.xpose.msra.mxu0 0.0
        %2109 = vmatprep.subr.mxu0 0.0
        %2110 = vmatpush1.xpose.msra.mxu0 0.0
        %2111 = vmatprep.subr.mxu0 0.0
        %2112 = vmatpush1.xpose.msra.mxu0 0.0
        %2113 = vmatprep.subr.mxu0 0.0
        %2114 = vmatpush1.xpose.msra.mxu0 0.0
        %2115 = vmatprep.subr.mxu0 0.0
        %2116 = vmatpush1.xpose.msra.mxu0 0.0
        %2117 = vmatprep.subr.mxu0 0.0
        %2118 = vmatpush1.xpose.msra.mxu0 0.0
        %2119 = vmatprep.subr.mxu0 0.0
        %2120 = vmatpush1.xpose.msra.mxu0 0.0
        %2121 = vmatprep.subr.mxu0 0.0
        %2122 = vmatpush1.xpose.msra.mxu0 0.0
        %2123 = vmatprep.subr.mxu0 0.0
        %2124 = vmatpush1.xpose.msra.mxu0 0.0
        %2125 = vmatprep.subr.mxu0 0.0
        %2126 = vmatpush1.xpose.msra.mxu0 0.0
        %2127 = vmatprep.mubr.f32.mxu0 0.0
        %2128 = vmatmul.mubr.f32.gmra.mrb[0].mxu0 %v2052
        %v2129 = vpop.f32.mrb[0].mxu0
        %v2130 = vadd.f32 %v1028, %v2129
        %v2131 = vpop.f32.mrb[0].mxu0
        %2132 = vmatprep.mubr.f32.mxu0 0.0
        %2133 = vmatmul.mubr.f32.gmra.mrb[0].mxu0 %v2055
        %v2134 = vpop.f32.mrb[0].mxu0
        %v2135 = vadd.f32 %v1029, %v2134
        %v2136 = vpop.f32.mrb[0].mxu0
        %2137 = vdwg.mxu0
        %v2139 = vsel %vm2050, %v1359, 0
        %v2142 = vsel %vm2050, %v1427, 0
        %v2145 = vsel %vm2050, %v1669, 0
        %v2148 = vsel %vm2050, %v1737, 0
        %2150 = vmatprep.subr.mxu0 0.0
        %2151 = vmatpush1.xpose.msra.mxu0 %v2145
        %2152 = vmatprep.subr.mxu0 0.0
        %2153 = vmatpush1.xpose.msra.mxu0 %v2148
        %2154 = vmatprep.subr.mxu0 0.0
        %2155 = vmatpush1.xpose.msra.mxu0 0.0
        %2156 = vmatprep.subr.mxu0 0.0
        %2157 = vmatpush1.xpose.msra.mxu0 0.0
        %2158 = vmatprep.subr.mxu0 0.0
        %2159 = vmatpush1.xpose.msra.mxu0 0.0
        %2160 = vmatprep.subr.mxu0 0.0
        %2161 = vmatpush1.xpose.msra.mxu0 0.0
        %2162 = vmatprep.subr.mxu0 0.0
        %2163 = vmatpush1.xpose.msra.mxu0 0.0
        %2164 = vmatprep.subr.mxu0 0.0
        %2165 = vmatpush1.xpose.msra.mxu0 0.0
        %2166 = vmatprep.subr.mxu0 0.0
        %2167 = vmatpush1.xpose.msra.mxu0 0.0
        %2168 = vmatprep.subr.mxu0 0.0
        %2169 = vmatpush1.xpose.msra.mxu0 0.0
        %2170 = vmatprep.subr.mxu0 0.0
        %2171 = vmatpush1.xpose.msra.mxu0 0.0
        %2172 = vmatprep.subr.mxu0 0.0
        %2173 = vmatpush1.xpose.msra.mxu0 0.0
        %2174 = vmatprep.subr.mxu0 0.0
        %2175 = vmatpush1.xpose.msra.mxu0 0.0
        %2176 = vmatprep.subr.mxu0 0.0
        %2177 = vmatpush1.xpose.msra.mxu0 0.0
        %2178 = vmatprep.subr.mxu0 0.0
        %2179 = vmatpush1.xpose.msra.mxu0 0.0
        %2180 = vmatprep.subr.mxu0 0.0
        %2181 = vmatpush1.xpose.msra.mxu0 0.0
        %2182 = vmatprep.subr.mxu0 0.0
        %2183 = vmatpush1.xpose.msra.mxu0 0.0
        %2184 = vmatprep.subr.mxu0 0.0
        %2185 = vmatpush1.xpose.msra.mxu0 0.0
        %2186 = vmatprep.subr.mxu0 0.0
        %2187 = vmatpush1.xpose.msra.mxu0 0.0
        %2188 = vmatprep.subr.mxu0 0.0
        %2189 = vmatpush1.xpose.msra.mxu0 0.0
        %2190 = vmatprep.subr.mxu0 0.0
        %2191 = vmatpush1.xpose.msra.mxu0 0.0
        %2192 = vmatprep.subr.mxu0 0.0
        %2193 = vmatpush1.xpose.msra.mxu0 0.0
        %2194 = vmatprep.subr.mxu0 0.0
        %2195 = vmatpush1.xpose.msra.mxu0 0.0
        %2196 = vmatprep.subr.mxu0 0.0
        %2197 = vmatpush1.xpose.msra.mxu0 0.0
        %2198 = vmatprep.subr.mxu0 0.0
        %2199 = vmatpush1.xpose.msra.mxu0 0.0
        %2200 = vmatprep.subr.mxu0 0.0
        %2201 = vmatpush1.xpose.msra.mxu0 0.0
        %2202 = vmatprep.subr.mxu0 0.0
        %2203 = vmatpush1.xpose.msra.mxu0 0.0
        %2204 = vmatprep.subr.mxu0 0.0
        %2205 = vmatpush1.xpose.msra.mxu0 0.0
        %2206 = vmatprep.subr.mxu0 0.0
        %2207 = vmatpush1.xpose.msra.mxu0 0.0
        %2208 = vmatprep.subr.mxu0 0.0
        %2209 = vmatpush1.xpose.msra.mxu0 0.0
        %2210 = vmatprep.subr.mxu0 0.0
        %2211 = vmatpush1.xpose.msra.mxu0 0.0
        %2212 = vmatprep.subr.mxu0 0.0
        %2213 = vmatpush1.xpose.msra.mxu0 0.0
        %2214 = vmatprep.mubr.f32.mxu0 0.0
        %2215 = vmatmul.mubr.f32.gmra.mrb[0].mxu0 %v2139
        %v2216 = vpop.f32.mrb[0].mxu0
        %v2217 = vadd.f32 %v1028, %v2216
        %v2218 = vpop.f32.mrb[0].mxu0
        %2219 = vmatprep.mubr.f32.mxu0 0.0
        %2220 = vmatmul.mubr.f32.gmra.mrb[0].mxu0 %v2142
        %v2221 = vpop.f32.mrb[0].mxu0
        %v2222 = vadd.f32 %v1029, %v2221
        %v2223 = vpop.f32.mrb[0].mxu0
        %2224 = vdwg.mxu0
        %v2226 = vsel %vm2050, %v1360, 0
        %v2229 = vsel %vm2050, %v1428, 0
        %v2232 = vsel %vm2050, %v1670, 0
        %v2235 = vsel %vm2050, %v1738, 0
        %2237 = vmatprep.subr.mxu0 0.0
        %2238 = vmatpush1.xpose.msra.mxu0 %v2232
        %2239 = vmatprep.subr.mxu0 0.0
        %2240 = vmatpush1.xpose.msra.mxu0 %v2235
        %2241 = vmatprep.subr.mxu0 0.0
        %2242 = vmatpush1.xpose.msra.mxu0 0.0
        %2243 = vmatprep.subr.mxu0 0.0
        %2244 = vmatpush1.xpose.msra.mxu0 0.0
        %2245 = vmatprep.subr.mxu0 0.0
        %2246 = vmatpush1.xpose.msra.mxu0 0.0
        %2247 = vmatprep.subr.mxu0 0.0
        %2248 = vmatpush1.xpose.msra.mxu0 0.0
        %2249 = vmatprep.subr.mxu0 0.0
        %2250 = vmatpush1.xpose.msra.mxu0 0.0
        %2251 = vmatprep.subr.mxu0 0.0
        %2252 = vmatpush1.xpose.msra.mxu0 0.0
        %2253 = vmatprep.subr.mxu0 0.0
        %2254 = vmatpush1.xpose.msra.mxu0 0.0
        %2255 = vmatprep.subr.mxu0 0.0
        %2256 = vmatpush1.xpose.msra.mxu0 0.0
        %2257 = vmatprep.subr.mxu0 0.0
        %2258 = vmatpush1.xpose.msra.mxu0 0.0
        %2259 = vmatprep.subr.mxu0 0.0
        %2260 = vmatpush1.xpose.msra.mxu0 0.0
        %2261 = vmatprep.subr.mxu0 0.0
        %2262 = vmatpush1.xpose.msra.mxu0 0.0
        %2263 = vmatprep.subr.mxu0 0.0
        %2264 = vmatpush1.xpose.msra.mxu0 0.0
        %2265 = vmatprep.subr.mxu0 0.0
        %2266 = vmatpush1.xpose.msra.mxu0 0.0
        %2267 = vmatprep.subr.mxu0 0.0
        %2268 = vmatpush1.xpose.msra.mxu0 0.0
        %2269 = vmatprep.subr.mxu0 0.0
        %2270 = vmatpush1.xpose.msra.mxu0 0.0
        %2271 = vmatprep.subr.mxu0 0.0
        %2272 = vmatpush1.xpose.msra.mxu0 0.0
        %2273 = vmatprep.subr.mxu0 0.0
        %2274 = vmatpush1.xpose.msra.mxu0 0.0
        %2275 = vmatprep.subr.mxu0 0.0
        %2276 = vmatpush1.xpose.msra.mxu0 0.0
        %2277 = vmatprep.subr.mxu0 0.0
        %2278 = vmatpush1.xpose.msra.mxu0 0.0
        %2279 = vmatprep.subr.mxu0 0.0
        %2280 = vmatpush1.xpose.msra.mxu0 0.0
        %2281 = vmatprep.subr.mxu0 0.0
        %2282 = vmatpush1.xpose.msra.mxu0 0.0
        %2283 = vmatprep.subr.mxu0 0.0
        %2284 = vmatpush1.xpose.msra.mxu0 0.0
        %2285 = vmatprep.subr.mxu0 0.0
        %2286 = vmatpush1.xpose.msra.mxu0 0.0
        %2287 = vmatprep.subr.mxu0 0.0
        %2288 = vmatpush1.xpose.msra.mxu0 0.0
        %2289 = vmatprep.subr.mxu0 0.0
        %2290 = vmatpush1.xpose.msra.mxu0 0.0
        %2291 = vmatprep.subr.mxu0 0.0
        %2292 = vmatpush1.xpose.msra.mxu0 0.0
        %2293 = vmatprep.subr.mxu0 0.0
        %2294 = vmatpush1.xpose.msra.mxu0 0.0
        %2295 = vmatprep.subr.mxu0 0.0
        %2296 = vmatpush1.xpose.msra.mxu0 0.0
        %2297 = vmatprep.subr.mxu0 0.0
        %2298 = vmatpush1.xpose.msra.mxu0 0.0
        %2299 = vmatprep.subr.mxu0 0.0
        %2300 = vmatpush1.xpose.msra.mxu0 0.0
        %2301 = vmatprep.mubr.f32.mxu0 0.0
        %2302 = vmatmul.mubr.f32.gmra.mrb[0].mxu0 %v2226
        %v2303 = vpop.f32.mrb[0].mxu0
        %v2304 = vadd.f32 %v1028, %v2303
        %v2305 = vpop.f32.mrb[0].mxu0
        %2306 = vmatprep.mubr.f32.mxu0 0.0
        %2307 = vmatmul.mubr.f32.gmra.mrb[0].mxu0 %v2229
        %v2308 = vpop.f32.mrb[0].mxu0
        %v2309 = vadd.f32 %v1029, %v2308
        %v2310 = vpop.f32.mrb[0].mxu0
        %2311 = vdwg.mxu0
        %v2313 = vsel %vm2050, %v1361, 0
        %v2316 = vsel %vm2050, %v1429, 0
        %v2319 = vsel %vm2050, %v1671, 0
        %v2322 = vsel %vm2050, %v1739, 0
        %2324 = vmatprep.subr.mxu0 0.0
        %2325 = vmatpush1.xpose.msra.mxu0 %v2319
        %2326 = vmatprep.subr.mxu0 0.0
        %2327 = vmatpush1.xpose.msra.mxu0 %v2322
        %2328 = vmatprep.subr.mxu0 0.0
        %2329 = vmatpush1.xpose.msra.mxu0 0.0
        %2330 = vmatprep.subr.mxu0 0.0
        %2331 = vmatpush1.xpose.msra.mxu0 0.0
        %2332 = vmatprep.subr.mxu0 0.0
        %2333 = vmatpush1.xpose.msra.mxu0 0.0
        %2334 = vmatprep.subr.mxu0 0.0
        %2335 = vmatpush1.xpose.msra.mxu0 0.0
        %2336 = vmatprep.subr.mxu0 0.0
        %2337 = vmatpush1.xpose.msra.mxu0 0.0
        %2338 = vmatprep.subr.mxu0 0.0
        %2339 = vmatpush1.xpose.msra.mxu0 0.0
        %2340 = vmatprep.subr.mxu0 0.0
        %2341 = vmatpush1.xpose.msra.mxu0 0.0
        %2342 = vmatprep.subr.mxu0 0.0
        %2343 = vmatpush1.xpose.msra.mxu0 0.0
        %2344 = vmatprep.subr.mxu0 0.0
        %2345 = vmatpush1.xpose.msra.mxu0 0.0
        %2346 = vmatprep.subr.mxu0 0.0
        %2347 = vmatpush1.xpose.msra.mxu0 0.0
        %2348 = vmatprep.subr.mxu0 0.0
        %2349 = vmatpush1.xpose.msra.mxu0 0.0
        %2350 = vmatprep.subr.mxu0 0.0
        %2351 = vmatpush1.xpose.msra.mxu0 0.0
        %2352 = vmatprep.subr.mxu0 0.0
        %2353 = vmatpush1.xpose.msra.mxu0 0.0
        %2354 = vmatprep.subr.mxu0 0.0
        %2355 = vmatpush1.xpose.msra.mxu0 0.0
        %2356 = vmatprep.subr.mxu0 0.0
        %2357 = vmatpush1.xpose.msra.mxu0 0.0
        %2358 = vmatprep.subr.mxu0 0.0
        %2359 = vmatpush1.xpose.msra.mxu0 0.0
        %2360 = vmatprep.subr.mxu0 0.0
        %2361 = vmatpush1.xpose.msra.mxu0 0.0
        %2362 = vmatprep.subr.mxu0 0.0
        %2363 = vmatpush1.xpose.msra.mxu0 0.0
        %2364 = vmatprep.subr.mxu0 0.0
        %2365 = vmatpush1.xpose.msra.mxu0 0.0
        %2366 = vmatprep.subr.mxu0 0.0
        %2367 = vmatpush1.xpose.msra.mxu0 0.0
        %2368 = vmatprep.subr.mxu0 0.0
        %2369 = vmatpush1.xpose.msra.mxu0 0.0
        %2370 = vmatprep.subr.mxu0 0.0
        %2371 = vmatpush1.xpose.msra.mxu0 0.0
        %2372 = vmatprep.subr.mxu0 0.0
        %2373 = vmatpush1.xpose.msra.mxu0 0.0
        %2374 = vmatprep.subr.mxu0 0.0
        %2375 = vmatpush1.xpose.msra.mxu0 0.0
        %2376 = vmatprep.subr.mxu0 0.0
        %2377 = vmatpush1.xpose.msra.mxu0 0.0
        %2378 = vmatprep.subr.mxu0 0.0
        %2379 = vmatpush1.xpose.msra.mxu0 0.0
        %2380 = vmatprep.subr.mxu0 0.0
        %2381 = vmatpush1.xpose.msra.mxu0 0.0
        %2382 = vmatprep.subr.mxu0 0.0
        %2383 = vmatpush1.xpose.msra.mxu0 0.0
        %2384 = vmatprep.subr.mxu0 0.0
        %2385 = vmatpush1.xpose.msra.mxu0 0.0
        %2386 = vmatprep.subr.mxu0 0.0
        %2387 = vmatpush1.xpose.msra.mxu0 0.0
        %2388 = vmatprep.mubr.f32.mxu0 0.0
        %2389 = vmatmul.mubr.f32.gmra.mrb[0].mxu0 %v2313
        %v2390 = vpop.f32.mrb[0].mxu0
        %v2391 = vadd.f32 %v1028, %v2390
        %v2392 = vpop.f32.mrb[0].mxu0
        %2393 = vmatprep.mubr.f32.mxu0 0.0
        %2394 = vmatmul.mubr.f32.gmra.mrb[0].mxu0 %v2316
        %v2395 = vpop.f32.mrb[0].mxu0
        %v2396 = vadd.f32 %v1029, %v2395
        %v2397 = vpop.f32.mrb[0].mxu0
        %2398 = vdwg.mxu0
        %vm2399 = vcmask 130048
        %v2400 = vsel %vm2399, %v2130, -inf
        %2401 = vmax.xlane.f32.xlu0 %v2400
        %v2402 = vpop.xlane.xlu0 %2401
        %v2403 = vsel %vm2399, %v2135, -inf
        %2404 = vmax.xlane.f32.xlu0 %v2403
        %v2405 = vpop.xlane.xlu0 %2404
        %v2406 = vsel %vm2399, %v2217, -inf
        %2407 = vmax.xlane.f32.xlu0 %v2406
        %v2408 = vpop.xlane.xlu0 %2407
        %v2409 = vsel %vm2399, %v2222, -inf
        %2410 = vmax.xlane.f32.xlu0 %v2409
        %v2411 = vpop.xlane.xlu0 %2410
        %v2412 = vsel %vm2399, %v2304, -inf
        %2413 = vmax.xlane.f32.xlu0 %v2412
        %v2414 = vpop.xlane.xlu0 %2413
        %v2415 = vsel %vm2399, %v2309, -inf
        %2416 = vmax.xlane.f32.xlu0 %v2415
        %v2417 = vpop.xlane.xlu0 %2416
        %v2418 = vsel %vm2399, %v2391, -inf
        %2419 = vmax.xlane.f32.xlu0 %v2418
        %v2420 = vpop.xlane.xlu0 %2419
        %v2421 = vsel %vm2399, %v2396, -inf
        %2422 = vmax.xlane.f32.xlu0 %v2421
        %v2423 = vpop.xlane.xlu0 %2422
        %v2424 = vsub.f32 %v2130, %v2402
        %v2425 = vsub.f32 %v2135, %v2405
        %v2426 = vsub.f32 %v2217, %v2408
        %v2427 = vsub.f32 %v2222, %v2411
        %v2428 = vsub.f32 %v2304, %v2414
        %v2429 = vsub.f32 %v2309, %v2417
        %v2430 = vsub.f32 %v2391, %v2420
        %v2431 = vsub.f32 %v2396, %v2423
        %v2432 = vmul.f32 %v2424, 1.442695
        %v2433 = vpow.pop %v2432
        %v2434 = vmul.f32 %v2425, 1.442695
        %v2435 = vpow.pop %v2434
        %v2436 = vmul.f32 %v2426, 1.442695
        %v2437 = vpow.pop %v2436
        %v2438 = vmul.f32 %v2427, 1.442695
        %v2439 = vpow.pop %v2438
        %v2440 = vmul.f32 %v2428, 1.442695
        %v2441 = vpow.pop %v2440
        %v2442 = vmul.f32 %v2429, 1.442695
        %v2443 = vpow.pop %v2442
        %v2444 = vmul.f32 %v2430, 1.442695
        %v2445 = vpow.pop %v2444
        %v2446 = vmul.f32 %v2431, 1.442695
        %v2447 = vpow.pop %v2446
        %v2448 = vsel %vm2399, %v2433, 0.0
        %2449 = vadd.xlane.f32.xlu0 %v2448
        %v2450 = vpop.xlane.xlu0 %2449
        %v2451 = vsel %vm2399, %v2435, 0.0
        %2452 = vadd.xlane.f32.xlu0 %v2451
        %v2453 = vpop.xlane.xlu0 %2452
        %v2454 = vsel %vm2399, %v2437, 0.0
        %2455 = vadd.xlane.f32.xlu0 %v2454
        %v2456 = vpop.xlane.xlu0 %2455
        %v2457 = vsel %vm2399, %v2439, 0.0
        %2458 = vadd.xlane.f32.xlu0 %v2457
        %v2459 = vpop.xlane.xlu0 %2458
        %v2460 = vsel %vm2399, %v2441, 0.0
        %2461 = vadd.xlane.f32.xlu0 %v2460
        %v2462 = vpop.xlane.xlu0 %2461
        %v2463 = vsel %vm2399, %v2443, 0.0
        %2464 = vadd.xlane.f32.xlu0 %v2463
        %v2465 = vpop.xlane.xlu0 %2464
        %v2466 = vsel %vm2399, %v2445, 0.0
        %2467 = vadd.xlane.f32.xlu0 %v2466
        %v2468 = vpop.xlane.xlu0 %2467
        %v2469 = vsel %vm2399, %v2447, 0.0
        %2470 = vadd.xlane.f32.xlu0 %v2469
        %v2471 = vpop.xlane.xlu0 %2470
        %v2472 = vrcp.pop %v2450
        %v2473 = vrcp.pop %v2453
        %v2474 = vrcp.pop %v2456
        %v2475 = vrcp.pop %v2459
        %v2476 = vrcp.pop %v2462
        %v2477 = vrcp.pop %v2465
        %v2478 = vrcp.pop %v2468
        %v2479 = vrcp.pop %v2471
        %v2480 = vmul.f32 %v2433, %v2472
        %v2481 = vmul.f32 %v2435, %v2473
        %v2482 = vmul.f32 %v2437, %v2474
        %v2483 = vmul.f32 %v2439, %v2475
        %v2484 = vmul.f32 %v2441, %v2476
        %v2485 = vmul.f32 %v2443, %v2477
        %v2486 = vmul.f32 %v2445, %v2478
        %v2487 = vmul.f32 %v2447, %v2479
        %v2489 = vsel %vm2399, %v2480, 0
        %v2492 = vsel %vm2399, %v2481, 0
        %2494 = vmatprep.subr.mxu0 0.0
        %2495 = vmatpush1.msra.mxu0 %v1978
        %2496 = vmatprep.subr.mxu0 0.0
        %2497 = vmatpush1.msra.mxu0 %v2046
        %2498 = vmatprep.subr.mxu0 0.0
        %2499 = vmatpush1.msra.mxu0 0.0
        %2500 = vmatprep.subr.mxu0 0.0
        %2501 = vmatpush1.msra.mxu0 0.0
        %2502 = vmatprep.subr.mxu0 0.0
        %2503 = vmatpush1.msra.mxu0 0.0
        %2504 = vmatprep.subr.mxu0 0.0
        %2505 = vmatpush1.msra.mxu0 0.0
        %2506 = vmatprep.subr.mxu0 0.0
        %2507 = vmatpush1.msra.mxu0 0.0
        %2508 = vmatprep.subr.mxu0 0.0
        %2509 = vmatpush1.msra.mxu0 0.0
        %2510 = vmatprep.subr.mxu0 0.0
        %2511 = vmatpush1.msra.mxu0 0.0
        %2512 = vmatprep.subr.mxu0 0.0
        %2513 = vmatpush1.msra.mxu0 0.0
        %2514 = vmatprep.subr.mxu0 0.0
        %2515 = vmatpush1.msra.mxu0 0.0
        %2516 = vmatprep.subr.mxu0 0.0
        %2517 = vmatpush1.msra.mxu0 0.0
        %2518 = vmatprep.subr.mxu0 0.0
        %2519 = vmatpush1.msra.mxu0 0.0
        %2520 = vmatprep.subr.mxu0 0.0
        %2521 = vmatpush1.msra.mxu0 0.0
        %2522 = vmatprep.subr.mxu0 0.0
        %2523 = vmatpush1.msra.mxu0 0.0
        %2524 = vmatprep.subr.mxu0 0.0
        %2525 = vmatpush1.msra.mxu0 0.0
        %2526 = vmatprep.subr.mxu0 0.0
        %2527 = vmatpush1.msra.mxu0 0.0
        %2528 = vmatprep.subr.mxu0 0.0
        %2529 = vmatpush1.msra.mxu0 0.0
        %2530 = vmatprep.subr.mxu0 0.0
        %2531 = vmatpush1.msra.mxu0 0.0
        %2532 = vmatprep.subr.mxu0 0.0
        %2533 = vmatpush1.msra.mxu0 0.0
        %2534 = vmatprep.subr.mxu0 0.0
        %2535 = vmatpush1.msra.mxu0 0.0
        %2536 = vmatprep.subr.mxu0 0.0
        %2537 = vmatpush1.msra.mxu0 0.0
        %2538 = vmatprep.subr.mxu0 0.0
        %2539 = vmatpush1.msra.mxu0 0.0
        %2540 = vmatprep.subr.mxu0 0.0
        %2541 = vmatpush1.msra.mxu0 0.0
        %2542 = vmatprep.subr.mxu0 0.0
        %2543 = vmatpush1.msra.mxu0 0.0
        %2544 = vmatprep.subr.mxu0 0.0
        %2545 = vmatpush1.msra.mxu0 0.0
        %2546 = vmatprep.subr.mxu0 0.0
        %2547 = vmatpush1.msra.mxu0 0.0
        %2548 = vmatprep.subr.mxu0 0.0
        %2549 = vmatpush1.msra.mxu0 0.0
        %2550 = vmatprep.subr.mxu0 0.0
        %2551 = vmatpush1.msra.mxu0 0.0
        %2552 = vmatprep.subr.mxu0 0.0
        %2553 = vmatpush1.msra.mxu0 0.0
        %2554 = vmatprep.subr.mxu0 0.0
        %2555 = vmatpush1.msra.mxu0 0.0
        %2556 = vmatprep.subr.mxu0 0.0
        %2557 = vmatpush1.msra.mxu0 0.0
        %2558 = vmatprep.mubr.f32.mxu0 0.0
        %2559 = vmatmul.mubr.f32.gmra.mrb[0].mxu0 %v2489
        %v2560 = vpop.f32.mrb[0].mxu0
        %v2561 = vadd.f32 0.0, %v2560
        %v2562 = vpop.f32.mrb[0].mxu0
        %2563 = vmatprep.mubr.f32.mxu0 0.0
        %2564 = vmatmul.mubr.f32.gmra.mrb[0].mxu0 %v2492
        %v2565 = vpop.f32.mrb[0].mxu0
        %v2566 = vadd.f32 0.0, %v2565
        %v2567 = vpop.f32.mrb[0].mxu0
        %2568 = vdwg.mxu0
        %v2570 = vsel %vm2399, %v2482, 0
        %v2573 = vsel %vm2399, %v2483, 0
        %2575 = vmatprep.subr.mxu0 0.0
        %2576 = vmatpush1.msra.mxu0 %v1979
        %2577 = vmatprep.subr.mxu0 0.0
        %2578 = vmatpush1.msra.mxu0 %v2047
        %2579 = vmatprep.subr.mxu0 0.0
        %2580 = vmatpush1.msra.mxu0 0.0
        %2581 = vmatprep.subr.mxu0 0.0
        %2582 = vmatpush1.msra.mxu0 0.0
        %2583 = vmatprep.subr.mxu0 0.0
        %2584 = vmatpush1.msra.mxu0 0.0
        %2585 = vmatprep.subr.mxu0 0.0
        %2586 = vmatpush1.msra.mxu0 0.0
        %2587 = vmatprep.subr.mxu0 0.0
        %2588 = vmatpush1.msra.mxu0 0.0
        %2589 = vmatprep.subr.mxu0 0.0
        %2590 = vmatpush1.msra.mxu0 0.0
        %2591 = vmatprep.subr.mxu0 0.0
        %2592 = vmatpush1.msra.mxu0 0.0
        %2593 = vmatprep.subr.mxu0 0.0
        %2594 = vmatpush1.msra.mxu0 0.0
        %2595 = vmatprep.subr.mxu0 0.0
        %2596 = vmatpush1.msra.mxu0 0.0
        %2597 = vmatprep.subr.mxu0 0.0
        %2598 = vmatpush1.msra.mxu0 0.0
        %2599 = vmatprep.subr.mxu0 0.0
        %2600 = vmatpush1.msra.mxu0 0.0
        %2601 = vmatprep.subr.mxu0 0.0
        %2602 = vmatpush1.msra.mxu0 0.0
        %2603 = vmatprep.subr.mxu0 0.0
        %2604 = vmatpush1.msra.mxu0 0.0
        %2605 = vmatprep.subr.mxu0 0.0
        %2606 = vmatpush1.msra.mxu0 0.0
        %2607 = vmatprep.subr.mxu0 0.0
        %2608 = vmatpush1.msra.mxu0 0.0
        %2609 = vmatprep.subr.mxu0 0.0
        %2610 = vmatpush1.msra.mxu0 0.0
        %2611 = vmatprep.subr.mxu0 0.0
        %2612 = vmatpush1.msra.mxu0 0.0
        %2613 = vmatprep.subr.mxu0 0.0
        %2614 = vmatpush1.msra.mxu0 0.0
        %2615 = vmatprep.subr.mxu0 0.0
        %2616 = vmatpush1.msra.mxu0 0.0
        %2617 = vmatprep.subr.mxu0 0.0
        %2618 = vmatpush1.msra.mxu0 0.0
        %2619 = vmatprep.subr.mxu0 0.0
        %2620 = vmatpush1.msra.mxu0 0.0
        %2621 = vmatprep.subr.mxu0 0.0
        %2622 = vmatpush1.msra.mxu0 0.0
        %2623 = vmatprep.subr.mxu0 0.0
        %2624 = vmatpush1.msra.mxu0 0.0
        %2625 = vmatprep.subr.mxu0 0.0
        %2626 = vmatpush1.msra.mxu0 0.0
        %2627 = vmatprep.subr.mxu0 0.0
        %2628 = vmatpush1.msra.mxu0 0.0
        %2629 = vmatprep.subr.mxu0 0.0
        %2630 = vmatpush1.msra.mxu0 0.0
        %2631 = vmatprep.subr.mxu0 0.0
        %2632 = vmatpush1.msra.mxu0 0.0
        %2633 = vmatprep.subr.mxu0 0.0
        %2634 = vmatpush1.msra.mxu0 0.0
        %2635 = vmatprep.subr.mxu0 0.0
        %2636 = vmatpush1.msra.mxu0 0.0
        %2637 = vmatprep.subr.mxu0 0.0
        %2638 = vmatpush1.msra.mxu0 0.0
        %2639 = vmatprep.mubr.f32.mxu0 0.0
        %2640 = vmatmul.mubr.f32.gmra.mrb[0].mxu0 %v2570
        %v2641 = vpop.f32.mrb[0].mxu0
        %v2642 = vadd.f32 0.0, %v2641
        %v2643 = vpop.f32.mrb[0].mxu0
        %2644 = vmatprep.mubr.f32.mxu0 0.0
        %2645 = vmatmul.mubr.f32.gmra.mrb[0].mxu0 %v2573
        %v2646 = vpop.f32.mrb[0].mxu0
        %v2647 = vadd.f32 0.0, %v2646
        %v2648 = vpop.f32.mrb[0].mxu0
        %2649 = vdwg.mxu0
        %v2651 = vsel %vm2399, %v2484, 0
        %v2654 = vsel %vm2399, %v2485, 0
        %2656 = vmatprep.subr.mxu0 0.0
        %2657 = vmatpush1.msra.mxu0 %v1980
        %2658 = vmatprep.subr.mxu0 0.0
        %2659 = vmatpush1.msra.mxu0 %v2048
        %2660 = vmatprep.subr.mxu0 0.0
        %2661 = vmatpush1.msra.mxu0 0.0
        %2662 = vmatprep.subr.mxu0 0.0
        %2663 = vmatpush1.msra.mxu0 0.0
        %2664 = vmatprep.subr.mxu0 0.0
        %2665 = vmatpush1.msra.mxu0 0.0
        %2666 = vmatprep.subr.mxu0 0.0
        %2667 = vmatpush1.msra.mxu0 0.0
        %2668 = vmatprep.subr.mxu0 0.0
        %2669 = vmatpush1.msra.mxu0 0.0
        %2670 = vmatprep.subr.mxu0 0.0
        %2671 = vmatpush1.msra.mxu0 0.0
        %2672 = vmatprep.subr.mxu0 0.0
        %2673 = vmatpush1.msra.mxu0 0.0
        %2674 = vmatprep.subr.mxu0 0.0
        %2675 = vmatpush1.msra.mxu0 0.0
        %2676 = vmatprep.subr.mxu0 0.0
        %2677 = vmatpush1.msra.mxu0 0.0
        %2678 = vmatprep.subr.mxu0 0.0
        %2679 = vmatpush1.msra.mxu0 0.0
        %2680 = vmatprep.subr.mxu0 0.0
        %2681 = vmatpush1.msra.mxu0 0.0
        %2682 = vmatprep.subr.mxu0 0.0
        %2683 = vmatpush1.msra.mxu0 0.0
        %2684 = vmatprep.subr.mxu0 0.0
        %2685 = vmatpush1.msra.mxu0 0.0
        %2686 = vmatprep.subr.mxu0 0.0
        %2687 = vmatpush1.msra.mxu0 0.0
        %2688 = vmatprep.subr.mxu0 0.0
        %2689 = vmatpush1.msra.mxu0 0.0
        %2690 = vmatprep.subr.mxu0 0.0
        %2691 = vmatpush1.msra.mxu0 0.0
        %2692 = vmatprep.subr.mxu0 0.0
        %2693 = vmatpush1.msra.mxu0 0.0
        %2694 = vmatprep.subr.mxu0 0.0
        %2695 = vmatpush1.msra.mxu0 0.0
        %2696 = vmatprep.subr.mxu0 0.0
        %2697 = vmatpush1.msra.mxu0 0.0
        %2698 = vmatprep.subr.mxu0 0.0
        %2699 = vmatpush1.msra.mxu0 0.0
        %2700 = vmatprep.subr.mxu0 0.0
        %2701 = vmatpush1.msra.mxu0 0.0
        %2702 = vmatprep.subr.mxu0 0.0
        %2703 = vmatpush1.msra.mxu0 0.0
        %2704 = vmatprep.subr.mxu0 0.0
        %2705 = vmatpush1.msra.mxu0 0.0
        %2706 = vmatprep.subr.mxu0 0.0
        %2707 = vmatpush1.msra.mxu0 0.0
        %2708 = vmatprep.subr.mxu0 0.0
        %2709 = vmatpush1.msra.mxu0 0.0
        %2710 = vmatprep.subr.mxu0 0.0
        %2711 = vmatpush1.msra.mxu0 0.0
        %2712 = vmatprep.subr.mxu0 0.0
        %2713 = vmatpush1.msra.mxu0 0.0
        %2714 = vmatprep.subr.mxu0 0.0
        %2715 = vmatpush1.msra.mxu0 0.0
        %2716 = vmatprep.subr.mxu0 0.0
        %2717 = vmatpush1.msra.mxu0 0.0
        %2718 = vmatprep.subr.mxu0 0.0
        %2719 = vmatpush1.msra.mxu0 0.0
        %2720 = vmatprep.mubr.f32.mxu0 0.0
        %2721 = vmatmul.mubr.f32.gmra.mrb[0].mxu0 %v2651
        %v2722 = vpop.f32.mrb[0].mxu0
        %v2723 = vadd.f32 0.0, %v2722
        %v2724 = vpop.f32.mrb[0].mxu0
        %2725 = vmatprep.mubr.f32.mxu0 0.0
        %2726 = vmatmul.mubr.f32.gmra.mrb[0].mxu0 %v2654
        %v2727 = vpop.f32.mrb[0].mxu0
        %v2728 = vadd.f32 0.0, %v2727
        %v2729 = vpop.f32.mrb[0].mxu0
        %2730 = vdwg.mxu0
        %v2732 = vsel %vm2399, %v2486, 0
        %v2735 = vsel %vm2399, %v2487, 0
        %2737 = vmatprep.subr.mxu0 0.0
        %2738 = vmatpush1.msra.mxu0 %v1981
        %2739 = vmatprep.subr.mxu0 0.0
        %2740 = vmatpush1.msra.mxu0 %v2049
        %2741 = vmatprep.subr.mxu0 0.0
        %2742 = vmatpush1.msra.mxu0 0.0
        %2743 = vmatprep.subr.mxu0 0.0
        %2744 = vmatpush1.msra.mxu0 0.0
        %2745 = vmatprep.subr.mxu0 0.0
        %2746 = vmatpush1.msra.mxu0 0.0
        %2747 = vmatprep.subr.mxu0 0.0
        %2748 = vmatpush1.msra.mxu0 0.0
        %2749 = vmatprep.subr.mxu0 0.0
        %2750 = vmatpush1.msra.mxu0 0.0
        %2751 = vmatprep.subr.mxu0 0.0
        %2752 = vmatpush1.msra.mxu0 0.0
        %2753 = vmatprep.subr.mxu0 0.0
        %2754 = vmatpush1.msra.mxu0 0.0
        %2755 = vmatprep.subr.mxu0 0.0
        %2756 = vmatpush1.msra.mxu0 0.0
        %2757 = vmatprep.subr.mxu0 0.0
        %2758 = vmatpush1.msra.mxu0 0.0
        %2759 = vmatprep.subr.mxu0 0.0
        %2760 = vmatpush1.msra.mxu0 0.0
        %2761 = vmatprep.subr.mxu0 0.0
        %2762 = vmatpush1.msra.mxu0 0.0
        %2763 = vmatprep.subr.mxu0 0.0
        %2764 = vmatpush1.msra.mxu0 0.0
        %2765 = vmatprep.subr.mxu0 0.0
        %2766 = vmatpush1.msra.mxu0 0.0
        %2767 = vmatprep.subr.mxu0 0.0
        %2768 = vmatpush1.msra.mxu0 0.0
        %2769 = vmatprep.subr.mxu0 0.0
        %2770 = vmatpush1.msra.mxu0 0.0
        %2771 = vmatprep.subr.mxu0 0.0
        %2772 = vmatpush1.msra.mxu0 0.0
        %2773 = vmatprep.subr.mxu0 0.0
        %2774 = vmatpush1.msra.mxu0 0.0
        %2775 = vmatprep.subr.mxu0 0.0
        %2776 = vmatpush1.msra.mxu0 0.0
        %2777 = vmatprep.subr.mxu0 0.0
        %2778 = vmatpush1.msra.mxu0 0.0
        %2779 = vmatprep.subr.mxu0 0.0
        %2780 = vmatpush1.msra.mxu0 0.0
        %2781 = vmatprep.subr.mxu0 0.0
        %2782 = vmatpush1.msra.mxu0 0.0
        %2783 = vmatprep.subr.mxu0 0.0
        %2784 = vmatpush1.msra.mxu0 0.0
        %2785 = vmatprep.subr.mxu0 0.0
        %2786 = vmatpush1.msra.mxu0 0.0
        %2787 = vmatprep.subr.mxu0 0.0
        %2788 = vmatpush1.msra.mxu0 0.0
        %2789 = vmatprep.subr.mxu0 0.0
        %2790 = vmatpush1.msra.mxu0 0.0
        %2791 = vmatprep.subr.mxu0 0.0
        %2792 = vmatpush1.msra.mxu0 0.0
        %2793 = vmatprep.subr.mxu0 0.0
        %2794 = vmatpush1.msra.mxu0 0.0
        %2795 = vmatprep.subr.mxu0 0.0
        %2796 = vmatpush1.msra.mxu0 0.0
        %2797 = vmatprep.subr.mxu0 0.0
        %2798 = vmatpush1.msra.mxu0 0.0
        %2799 = vmatprep.subr.mxu0 0.0
        %2800 = vmatpush1.msra.mxu0 0.0
        %2801 = vmatprep.mubr.f32.mxu0 0.0
        %2802 = vmatmul.mubr.f32.gmra.mrb[0].mxu0 %v2732
        %v2803 = vpop.f32.mrb[0].mxu0
        %v2804 = vadd.f32 0.0, %v2803
        %v2805 = vpop.f32.mrb[0].mxu0
        %2806 = vmatprep.mubr.f32.mxu0 0.0
        %2807 = vmatmul.mubr.f32.gmra.mrb[0].mxu0 %v2735
        %v2808 = vpop.f32.mrb[0].mxu0
        %v2809 = vadd.f32 0.0, %v2808
        %v2810 = vpop.f32.mrb[0].mxu0
        %2811 = vdwg.mxu0
        %v2812 = vcombine.low %v2561, %v2723
        %v2813 = vcombine.high %v2561, %v2723
        %v2815 = vunpack.c.l.s4 1983009808
        %v2816 = vunpack.c.0.s8 %v2815
        %v2817 = vlaneseq
        %v2818 = vshrl.u32 %v2817, 7
        %v2819 = vsub.s32 %v2816, %v2818
        %v2820 = vrot.slane %v2812, %v2819
        %v2822 = vunpack.c.l.s4 1983009808
        %v2823 = vunpack.c.0.s8 %v2822
        %v2824 = vlaneseq
        %v2825 = vshrl.u32 %v2824, 7
        %v2826 = vsub.s32 %v2823, %v2825
        %v2827 = vrot.slane %v2813, %v2826
        %v2828 = vcombine.low %v2642, %v2804
        %v2829 = vcombine.high %v2642, %v2804
        %v2831 = vunpack.c.l.s4 1983009808
        %v2832 = vunpack.c.0.s8 %v2831
        %v2833 = vlaneseq
        %v2834 = vshrl.u32 %v2833, 7
        %v2835 = vsub.s32 %v2832, %v2834
        %v2836 = vrot.slane %v2828, %v2835
        %v2838 = vunpack.c.l.s4 1983009808
        %v2839 = vunpack.c.0.s8 %v2838
        %v2840 = vlaneseq
        %v2841 = vshrl.u32 %v2840, 7
        %v2842 = vsub.s32 %v2839, %v2841
        %v2843 = vrot.slane %v2829, %v2842
        %v2844 = vcombine.low %v2820, %v2836
        %v2845 = vcombine.high %v2820, %v2836
        %v2847 = vunpack.c.l.s4 1934713408
        %v2848 = vunpack.c.0.s8 %v2847
        %v2849 = vlaneseq
        %v2850 = vshrl.u32 %v2849, 7
        %v2851 = vsub.s32 %v2848, %v2850
        %v2852 = vrot.slane %v2844, %v2851
        %v2854 = vunpack.c.l.s4 1934713408
        %v2855 = vunpack.c.0.s8 %v2854
        %v2856 = vlaneseq
        %v2857 = vshrl.u32 %v2856, 7
        %v2858 = vsub.s32 %v2855, %v2857
        %v2859 = vrot.slane %v2845, %v2858
        %v2860 = vcombine.low %v2827, %v2843
        %v2861 = vcombine.high %v2827, %v2843
        %v2863 = vunpack.c.l.s4 1934713408
        %v2864 = vunpack.c.0.s8 %v2863
        %v2865 = vlaneseq
        %v2866 = vshrl.u32 %v2865, 7
        %v2867 = vsub.s32 %v2864, %v2866
        %v2868 = vrot.slane %v2860, %v2867
        %v2870 = vunpack.c.l.s4 1934713408
        %v2871 = vunpack.c.0.s8 %v2870
        %v2872 = vlaneseq
        %v2873 = vshrl.u32 %v2872, 7
        %v2874 = vsub.s32 %v2871, %v2873
        %v2875 = vrot.slane %v2861, %v2874
        %v2876 = vcombine.high %v2852, 0.0
        %v2877 = vcombine.high %v2859, 0.0
        %v2878 = vcombine.high %v2868, 0.0
        %v2879 = vcombine.high %v2875, 0.0
        %v2880 = vcombine.low %v2566, %v2728
        %v2881 = vcombine.high %v2566, %v2728
        %v2883 = vunpack.c.l.s4 1983009808
        %v2884 = vunpack.c.0.s8 %v2883
        %v2885 = vlaneseq
        %v2886 = vshrl.u32 %v2885, 7
        %v2887 = vsub.s32 %v2884, %v2886
        %v2888 = vrot.slane %v2880, %v2887
        %v2890 = vunpack.c.l.s4 1983009808
        %v2891 = vunpack.c.0.s8 %v2890
        %v2892 = vlaneseq
        %v2893 = vshrl.u32 %v2892, 7
        %v2894 = vsub.s32 %v2891, %v2893
        %v2895 = vrot.slane %v2881, %v2894
        %v2896 = vcombine.low %v2647, %v2809
        %v2897 = vcombine.high %v2647, %v2809
        %v2899 = vunpack.c.l.s4 1983009808
        %v2900 = vunpack.c.0.s8 %v2899
        %v2901 = vlaneseq
        %v2902 = vshrl.u32 %v2901, 7
        %v2903 = vsub.s32 %v2900, %v2902
        %v2904 = vrot.slane %v2896, %v2903
        %v2906 = vunpack.c.l.s4 1983009808
        %v2907 = vunpack.c.0.s8 %v2906
        %v2908 = vlaneseq
        %v2909 = vshrl.u32 %v2908, 7
        %v2910 = vsub.s32 %v2907, %v2909
        %v2911 = vrot.slane %v2897, %v2910
        %v2912 = vcombine.low %v2888, %v2904
        %v2913 = vcombine.high %v2888, %v2904
        %v2915 = vunpack.c.l.s4 1934713408
        %v2916 = vunpack.c.0.s8 %v2915
        %v2917 = vlaneseq
        %v2918 = vshrl.u32 %v2917, 7
        %v2919 = vsub.s32 %v2916, %v2918
        %v2920 = vrot.slane %v2912, %v2919
        %v2922 = vunpack.c.l.s4 1934713408
        %v2923 = vunpack.c.0.s8 %v2922
        %v2924 = vlaneseq
        %v2925 = vshrl.u32 %v2924, 7
        %v2926 = vsub.s32 %v2923, %v2925
        %v2927 = vrot.slane %v2913, %v2926
        %v2928 = vcombine.low %v2895, %v2911
        %v2929 = vcombine.high %v2895, %v2911
        %v2931 = vunpack.c.l.s4 1934713408
        %v2932 = vunpack.c.0.s8 %v2931
        %v2933 = vlaneseq
        %v2934 = vshrl.u32 %v2933, 7
        %v2935 = vsub.s32 %v2932, %v2934
        %v2936 = vrot.slane %v2928, %v2935
        %v2938 = vunpack.c.l.s4 1934713408
        %v2939 = vunpack.c.0.s8 %v2938
        %v2940 = vlaneseq
        %v2941 = vshrl.u32 %v2940, 7
        %v2942 = vsub.s32 %v2939, %v2941
        %v2943 = vrot.slane %v2929, %v2942
        %v2944 = vcombine.high %v2920, 0.0
        %v2945 = vcombine.high %v2927, 0.0
        %v2946 = vcombine.high %v2936, 0.0
        %v2947 = vcombine.high %v2943, 0.0
        %v2948 = vcombine.low %v2852, %v2859
        %v2950 = vunpack.c.l.s4 1983009808
        %v2951 = vunpack.c.0.s8 %v2950
        %v2952 = vlaneseq
        %v2953 = vshrl.u32 %v2952, 7
        %v2954 = vsub.s32 %v2951, %v2953
        %v2955 = vrot.slane %v2948, %v2954
        %v2956 = vcombine.low %v2876, %v2877
        %v2958 = vunpack.c.l.s4 1983009808
        %v2959 = vunpack.c.0.s8 %v2958
        %v2960 = vlaneseq
        %v2961 = vshrl.u32 %v2960, 7
        %v2962 = vsub.s32 %v2959, %v2961
        %v2963 = vrot.slane %v2956, %v2962
        %v2964 = vcombine.low %v2868, %v2875
        %v2966 = vunpack.c.l.s4 1983009808
        %v2967 = vunpack.c.0.s8 %v2966
        %v2968 = vlaneseq
        %v2969 = vshrl.u32 %v2968, 7
        %v2970 = vsub.s32 %v2967, %v2969
        %v2971 = vrot.slane %v2964, %v2970
        %v2972 = vcombine.low %v2878, %v2879
        %v2974 = vunpack.c.l.s4 1983009808
        %v2975 = vunpack.c.0.s8 %v2974
        %v2976 = vlaneseq
        %v2977 = vshrl.u32 %v2976, 7
        %v2978 = vsub.s32 %v2975, %v2977
        %v2979 = vrot.slane %v2972, %v2978
        %v2980 = vcombine.low %v2955, %v2963
        %v2981 = vcombine.high %v2955, %v2963
        %v2983 = vunpack.c.l.s4 1934713408
        %v2984 = vunpack.c.0.s8 %v2983
        %v2985 = vlaneseq
        %v2986 = vshrl.u32 %v2985, 7
        %v2987 = vsub.s32 %v2984, %v2986
        %v2988 = vrot.slane %v2980, %v2987
        %v2990 = vunpack.c.l.s4 1934713408
        %v2991 = vunpack.c.0.s8 %v2990
        %v2992 = vlaneseq
        %v2993 = vshrl.u32 %v2992, 7
        %v2994 = vsub.s32 %v2991, %v2993
        %v2995 = vrot.slane %v2981, %v2994
        %v2996 = vcombine.low %v2971, %v2979
        %v2997 = vcombine.high %v2971, %v2979
        %v2999 = vunpack.c.l.s4 1934713408
        %v3000 = vunpack.c.0.s8 %v2999
        %v3001 = vlaneseq
        %v3002 = vshrl.u32 %v3001, 7
        %v3003 = vsub.s32 %v3000, %v3002
        %v3004 = vrot.slane %v2996, %v3003
        %v3006 = vunpack.c.l.s4 1934713408
        %v3007 = vunpack.c.0.s8 %v3006
        %v3008 = vlaneseq
        %v3009 = vshrl.u32 %v3008, 7
        %v3010 = vsub.s32 %v3007, %v3009
        %v3011 = vrot.slane %v2997, %v3010
        %v3012 = vcombine.low %v2988, %v3004
        %v3013 = vcombine.high %v2988, %v3004
        %v3014 = vcombine.low %v2995, %v3011
        %v3015 = vcombine.high %v2995, %v3011
        %v3016 = vcombine.low %v2920, %v2927
        %v3018 = vunpack.c.l.s4 1983009808
        %v3019 = vunpack.c.0.s8 %v3018
        %v3020 = vlaneseq
        %v3021 = vshrl.u32 %v3020, 7
        %v3022 = vsub.s32 %v3019, %v3021
        %v3023 = vrot.slane %v3016, %v3022
        %v3024 = vcombine.low %v2944, %v2945
        %v3026 = vunpack.c.l.s4 1983009808
        %v3027 = vunpack.c.0.s8 %v3026
        %v3028 = vlaneseq
        %v3029 = vshrl.u32 %v3028, 7
        %v3030 = vsub.s32 %v3027, %v3029
        %v3031 = vrot.slane %v3024, %v3030
        %v3032 = vcombine.low %v2936, %v2943
        %v3034 = vunpack.c.l.s4 1983009808
        %v3035 = vunpack.c.0.s8 %v3034
        %v3036 = vlaneseq
        %v3037 = vshrl.u32 %v3036, 7
        %v3038 = vsub.s32 %v3035, %v3037
        %v3039 = vrot.slane %v3032, %v3038
        %v3040 = vcombine.low %v2946, %v2947
        %v3042 = vunpack.c.l.s4 1983009808
        %v3043 = vunpack.c.0.s8 %v3042
        %v3044 = vlaneseq
        %v3045 = vshrl.u32 %v3044, 7
        %v3046 = vsub.s32 %v3043, %v3045
        %v3047 = vrot.slane %v3040, %v3046
        %v3048 = vcombine.low %v3023, %v3031
        %v3049 = vcombine.high %v3023, %v3031
        %v3051 = vunpack.c.l.s4 1934713408
        %v3052 = vunpack.c.0.s8 %v3051
        %v3053 = vlaneseq
        %v3054 = vshrl.u32 %v3053, 7
        %v3055 = vsub.s32 %v3052, %v3054
        %v3056 = vrot.slane %v3048, %v3055
        %v3058 = vunpack.c.l.s4 1934713408
        %v3059 = vunpack.c.0.s8 %v3058
        %v3060 = vlaneseq
        %v3061 = vshrl.u32 %v3060, 7
        %v3062 = vsub.s32 %v3059, %v3061
        %v3063 = vrot.slane %v3049, %v3062
        %v3064 = vcombine.low %v3039, %v3047
        %v3065 = vcombine.high %v3039, %v3047
        %v3067 = vunpack.c.l.s4 1934713408
        %v3068 = vunpack.c.0.s8 %v3067
        %v3069 = vlaneseq
        %v3070 = vshrl.u32 %v3069, 7
        %v3071 = vsub.s32 %v3068, %v3070
        %v3072 = vrot.slane %v3064, %v3071
        %v3074 = vunpack.c.l.s4 1934713408
        %v3075 = vunpack.c.0.s8 %v3074
        %v3076 = vlaneseq
        %v3077 = vshrl.u32 %v3076, 7
        %v3078 = vsub.s32 %v3075, %v3077
        %v3079 = vrot.slane %v3065, %v3078
        %v3080 = vcombine.low %v3056, %v3072
        %v3081 = vcombine.high %v3056, %v3072
        %v3082 = vcombine.low %v3063, %v3079
        %v3083 = vcombine.high %v3063, %v3079
        %3086 = vrot.lane.b32.xlu0 %v3013, 8
        %v3087 = vpop.permute.xlu0 %3086
        %3088 = vrot.lane.b32.xlu0 %v3081, 8
        %v3089 = vpop.permute.xlu0 %3088
        %3094 = vrot.lane.b32.xlu0 %v3014, 16
        %v3095 = vpop.permute.xlu0 %3094
        %3096 = vrot.lane.b32.xlu0 %v3082, 16
        %v3097 = vpop.permute.xlu0 %3096
        %3102 = vrot.lane.b32.xlu0 %v3015, 24
        %v3103 = vpop.permute.xlu0 %3102
        %3104 = vrot.lane.b32.xlu0 %v3083, 24
        %v3105 = vpop.permute.xlu0 %3104
        %v3108 = vsel %vm2050, %v3012, %v3087
        %v3109 = vsel %vm2050, %v3080, %v3089
        %v3110 = vsel %vm2399, %v3108, %v3095
        %v3111 = vsel %vm2399, %v3109, %v3097
        %vm3112 = vcmask 195584
        %v3113 = vsel %vm3112, %v3110, %v3103
        %v3114 = vsel %vm3112, %v3111, %v3105
        %v3115 = vlaneseq
        %v3116 = vshrl.u32 %v3115, 7
        %v3117 = vsub.s32 3, %v3116
        %v3118 = vrot.slane %v1024, %v3117
        %v3120 = vsel %vm1030, %v3113, 0
        %v3123 = vsel %vm1030, %v3114, 0
        %3125 = vmatprep.subr.mxu0 0.0
        %3126 = vmatpush1.msra.mxu0 %v412
        %3127 = vmatprep.subr.mxu0 0.0
        %3128 = vmatpush1.msra.mxu0 %v413
        %3129 = vmatprep.subr.mxu0 0.0
        %3130 = vmatpush1.msra.mxu0 %v414
        %3131 = vmatprep.subr.mxu0 0.0
        %3132 = vmatpush1.msra.mxu0 %v415
        %3133 = vmatprep.subr.mxu0 0.0
        %3134 = vmatpush1.msra.mxu0 0.0
        %3135 = vmatprep.subr.mxu0 0.0
        %3136 = vmatpush1.msra.mxu0 0.0
        %3137 = vmatprep.subr.mxu0 0.0
        %3138 = vmatpush1.msra.mxu0 0.0
        %3139 = vmatprep.subr.mxu0 0.0
        %3140 = vmatpush1.msra.mxu0 0.0
        %3141 = vmatprep.subr.mxu0 0.0
        %3142 = vmatpush1.msra.mxu0 0.0
        %3143 = vmatprep.subr.mxu0 0.0
        %3144 = vmatpush1.msra.mxu0 0.0
        %3145 = vmatprep.subr.mxu0 0.0
        %3146 = vmatpush1.msra.mxu0 0.0
        %3147 = vmatprep.subr.mxu0 0.0
        %3148 = vmatpush1.msra.mxu0 0.0
        %3149 = vmatprep.subr.mxu0 0.0
        %3150 = vmatpush1.msra.mxu0 0.0
        %3151 = vmatprep.subr.mxu0 0.0
        %3152 = vmatpush1.msra.mxu0 0.0
        %3153 = vmatprep.subr.mxu0 0.0
        %3154 = vmatpush1.msra.mxu0 0.0
        %3155 = vmatprep.subr.mxu0 0.0
        %3156 = vmatpush1.msra.mxu0 0.0
        %3157 = vmatprep.subr.mxu0 0.0
        %3158 = vmatpush1.msra.mxu0 0.0
        %3159 = vmatprep.subr.mxu0 0.0
        %3160 = vmatpush1.msra.mxu0 0.0
        %3161 = vmatprep.subr.mxu0 0.0
        %3162 = vmatpush1.msra.mxu0 0.0
        %3163 = vmatprep.subr.mxu0 0.0
        %3164 = vmatpush1.msra.mxu0 0.0
        %3165 = vmatprep.subr.mxu0 0.0
        %3166 = vmatpush1.msra.mxu0 0.0
        %3167 = vmatprep.subr.mxu0 0.0
        %3168 = vmatpush1.msra.mxu0 0.0
        %3169 = vmatprep.subr.mxu0 0.0
        %3170 = vmatpush1.msra.mxu0 0.0
        %3171 = vmatprep.subr.mxu0 0.0
        %3172 = vmatpush1.msra.mxu0 0.0
        %3173 = vmatprep.subr.mxu0 0.0
        %3174 = vmatpush1.msra.mxu0 0.0
        %3175 = vmatprep.subr.mxu0 0.0
        %3176 = vmatpush1.msra.mxu0 0.0
        %3177 = vmatprep.subr.mxu0 0.0
        %3178 = vmatpush1.msra.mxu0 0.0
        %3179 = vmatprep.subr.mxu0 0.0
        %3180 = vmatpush1.msra.mxu0 0.0
        %3181 = vmatprep.subr.mxu0 0.0
        %3182 = vmatpush1.msra.mxu0 0.0
        %3183 = vmatprep.subr.mxu0 0.0
        %3184 = vmatpush1.msra.mxu0 0.0
        %3185 = vmatprep.subr.mxu0 0.0
        %3186 = vmatpush1.msra.mxu0 0.0
        %3187 = vmatprep.subr.mxu0 0.0
        %3188 = vmatpush1.msra.mxu0 0.0
        %3189 = vmatprep.mubr.f32.mxu0 0.0
        %3190 = vmatmul.mubr.f32.gmra.mrb[0].mxu0 %v3120
        %v3191 = vpop.f32.mrb[0].mxu0
        %v3192 = vadd.f32 %v3118, %v3191
        %v3193 = vpop.f32.mrb[0].mxu0
        %3194 = vmatprep.mubr.f32.mxu0 0.0
        %3195 = vmatmul.mubr.f32.gmra.mrb[0].mxu0 %v3123
        %v3196 = vpop.f32.mrb[0].mxu0
        %v3197 = vadd.f32 %v3118, %v3196
        %v3198 = vpop.f32.mrb[0].mxu0
        %3199 = vdwg.mxu0
        %v3200 = vadd.f32 %v398, %v3192
        %v3201 = vadd.f32 %v399, %v3197
        %v3202 = vsel %vm1030, %v3200, 0.0
        %3203 = vadd.xlane.f32.xlu0 %v3202
        %v3204 = vpop.xlane.xlu0 %3203
        %v3205 = vsel %vm1030, %v3201, 0.0
        %3206 = vadd.xlane.f32.xlu0 %v3205
        %v3207 = vpop.xlane.xlu0 %3206
        %v3208 = vrcp.pop 32.0
        %v3209 = vmul.f32 %v3204, %v3208
        %v3210 = vmul.f32 %v3207, %v3208
        %v3211 = vsub.f32 %v3200, %v3209
        %v3212 = vsub.f32 %v3201, %v3210
        %v3213 = vmul.f32 %v3211, %v3211
        %v3214 = vmul.f32 %v3212, %v3212
        %v3215 = vsel %vm1030, %v3213, 0.0
        %3216 = vadd.xlane.f32.xlu0 %v3215
        %v3217 = vpop.xlane.xlu0 %3216
        %v3218 = vsel %vm1030, %v3214, 0.0
        %3219 = vadd.xlane.f32.xlu0 %v3218
        %v3220 = vpop.xlane.xlu0 %3219
        %v3221 = vmul.f32 %v3217, %v3208
        %v3222 = vmul.f32 %v3220, %v3208
        %v3223 = vadd.f32 %v3221, 1e-05
        %v3224 = vadd.f32 %v3222, 1e-05
        %v3225 = vrsqrt.pop %v3223
        %v3226 = vrsqrt.pop %v3224
        %v3227 = vmul.f32 %v3211, %v3225
        %v3228 = vmul.f32 %v3212, %v3226
        %v3229 = vlaneseq
        %v3230 = vshrl.u32 %v3229, 7
        %v3231 = vsub.s32 5, %v3230
        %v3232 = vrot.slane %v1024, %v3231
        %v3233 = vmul.f32 %v3227, %v3232
        %v3234 = vmul.f32 %v3228, %v3232
        %v3235 = vlaneseq
        %v3236 = vshrl.u32 %v3235, 7
        %v3237 = vsub.s32 6, %v3236
        %v3238 = vrot.slane %v1024, %v3237
        %v3239 = vadd.f32 %v3233, %v3238
        %v3240 = vadd.f32 %v3234, %v3238
        %v3243 = vlaneseq
        %v3244 = vshrl.u32 %v3243, 7
        %v3245 = vsub.s32 0, %v3244
        %v3246 = vrot.slane %v1026, %v3245
        %v3247 = vlaneseq
        %v3248 = vshrl.u32 %v3247, 7
        %v3249 = vsub.s32 1, %v3248
        %v3250 = vrot.slane %v1026, %v3249
        %v3251 = vlaneseq
        %v3252 = vshrl.u32 %v3251, 7
        %v3253 = vsub.s32 2, %v3252
        %v3254 = vrot.slane %v1026, %v3253
        %v3255 = vlaneseq
        %v3256 = vshrl.u32 %v3255, 7
        %v3257 = vsub.s32 3, %v3256
        %v3258 = vrot.slane %v1026, %v3257
        %v3259 = vlaneseq
        %v3260 = vshrl.u32 %v3259, 7
        %v3261 = vsub.s32 4, %v3260
        %v3262 = vrot.slane %v1026, %v3261
        %v3263 = vlaneseq
        %v3264 = vshrl.u32 %v3263, 7
        %v3265 = vsub.s32 5, %v3264
        %v3266 = vrot.slane %v1026, %v3265
        %v3267 = vlaneseq
        %v3268 = vshrl.u32 %v3267, 7
        %v3269 = vsub.s32 6, %v3268
        %v3270 = vrot.slane %v1026, %v3269
        %v3271 = vlaneseq
        %v3272 = vshrl.u32 %v3271, 7
        %v3273 = vsub.s32 7, %v3272
        %v3274 = vrot.slane %v1026, %v3273
        %v3275 = vlaneseq
        %v3276 = vshrl.u32 %v3275, 7
        %v3277 = vsub.s32 0, %v3276
        %v3278 = vrot.slane %v1027, %v3277
        %v3279 = vlaneseq
        %v3280 = vshrl.u32 %v3279, 7
        %v3281 = vsub.s32 1, %v3280
        %v3282 = vrot.slane %v1027, %v3281
        %v3283 = vlaneseq
        %v3284 = vshrl.u32 %v3283, 7
        %v3285 = vsub.s32 2, %v3284
        %v3286 = vrot.slane %v1027, %v3285
        %v3287 = vlaneseq
        %v3288 = vshrl.u32 %v3287, 7
        %v3289 = vsub.s32 3, %v3288
        %v3290 = vrot.slane %v1027, %v3289
        %v3291 = vlaneseq
        %v3292 = vshrl.u32 %v3291, 7
        %v3293 = vsub.s32 4, %v3292
        %v3294 = vrot.slane %v1027, %v3293
        %v3295 = vlaneseq
        %v3296 = vshrl.u32 %v3295, 7
        %v3297 = vsub.s32 5, %v3296
        %v3298 = vrot.slane %v1027, %v3297
        %v3299 = vlaneseq
        %v3300 = vshrl.u32 %v3299, 7
        %v3301 = vsub.s32 6, %v3300
        %v3302 = vrot.slane %v1027, %v3301
        %v3303 = vlaneseq
        %v3304 = vshrl.u32 %v3303, 7
        %v3305 = vsub.s32 7, %v3304
        %v3306 = vrot.slane %v1027, %v3305
        %v3324 = vsel %vm1030, %v3239, 0
        %v3327 = vsel %vm1030, %v3240, 0
        %3329 = vmatprep.subr.mxu0 %v449
        %3330 = vmatpush1.msra.mxu0 %v448
        %3331 = vmatprep.subr.mxu0 %v465
        %3332 = vmatpush1.msra.mxu0 %v464
        %3333 = vmatprep.subr.mxu0 %v481
        %3334 = vmatpush1.msra.mxu0 %v480
        %3335 = vmatprep.subr.mxu0 %v497
        %3336 = vmatpush1.msra.mxu0 %v496
        %3337 = vmatprep.subr.mxu0 0.0
        %3338 = vmatpush1.msra.mxu0 0.0
        %3339 = vmatprep.subr.mxu0 0.0
        %3340 = vmatpush1.msra.mxu0 0.0
        %3341 = vmatprep.subr.mxu0 0.0
        %3342 = vmatpush1.msra.mxu0 0.0
        %3343 = vmatprep.subr.mxu0 0.0
        %3344 = vmatpush1.msra.mxu0 0.0
        %3345 = vmatprep.subr.mxu0 0.0
        %3346 = vmatpush1.msra.mxu0 0.0
        %3347 = vmatprep.subr.mxu0 0.0
        %3348 = vmatpush1.msra.mxu0 0.0
        %3349 = vmatprep.subr.mxu0 0.0
        %3350 = vmatpush1.msra.mxu0 0.0
        %3351 = vmatprep.subr.mxu0 0.0
        %3352 = vmatpush1.msra.mxu0 0.0
        %3353 = vmatprep.subr.mxu0 0.0
        %3354 = vmatpush1.msra.mxu0 0.0
        %3355 = vmatprep.subr.mxu0 0.0
        %3356 = vmatpush1.msra.mxu0 0.0
        %3357 = vmatprep.subr.mxu0 0.0
        %3358 = vmatpush1.msra.mxu0 0.0
        %3359 = vmatprep.subr.mxu0 0.0
        %3360 = vmatpush1.msra.mxu0 0.0
        %3361 = vmatprep.subr.mxu0 0.0
        %3362 = vmatpush1.msra.mxu0 0.0
        %3363 = vmatprep.subr.mxu0 0.0
        %3364 = vmatpush1.msra.mxu0 0.0
        %3365 = vmatprep.subr.mxu0 0.0
        %3366 = vmatpush1.msra.mxu0 0.0
        %3367 = vmatprep.subr.mxu0 0.0
        %3368 = vmatpush1.msra.mxu0 0.0
        %3369 = vmatprep.subr.mxu0 0.0
        %3370 = vmatpush1.msra.mxu0 0.0
        %3371 = vmatprep.subr.mxu0 0.0
        %3372 = vmatpush1.msra.mxu0 0.0
        %3373 = vmatprep.subr.mxu0 0.0
        %3374 = vmatpush1.msra.mxu0 0.0
        %3375 = vmatprep.subr.mxu0 0.0
        %3376 = vmatpush1.msra.mxu0 0.0
        %3377 = vmatprep.subr.mxu0 0.0
        %3378 = vmatpush1.msra.mxu0 0.0
        %3379 = vmatprep.subr.mxu0 0.0
        %3380 = vmatpush1.msra.mxu0 0.0
        %3381 = vmatprep.subr.mxu0 0.0
        %3382 = vmatpush1.msra.mxu0 0.0
        %3383 = vmatprep.subr.mxu0 0.0
        %3384 = vmatpush1.msra.mxu0 0.0
        %3385 = vmatprep.subr.mxu0 0.0
        %3386 = vmatpush1.msra.mxu0 0.0
        %3387 = vmatprep.subr.mxu0 0.0
        %3388 = vmatpush1.msra.mxu0 0.0
        %3389 = vmatprep.subr.mxu0 0.0
        %3390 = vmatpush1.msra.mxu0 0.0
        %3391 = vmatprep.subr.mxu0 0.0
        %3392 = vmatpush1.msra.mxu0 0.0
        %3393 = vmatprep.mubr.f32.mxu0 0.0
        %3394 = vmatmul.mubr.f32.gmra.mrb[0].mxu0 %v3324
        %v3395 = vpop.f32.mrb[0].mxu0
        %v3396 = vadd.f32 %v3246, %v3395
        %v3397 = vpop.f32.mrb[0].mxu0
        %v3398 = vadd.f32 %v3250, %v3397
        %3399 = vmatprep.mubr.f32.mxu0 0.0
        %3400 = vmatmul.mubr.f32.gmra.mrb[0].mxu0 %v3327
        %v3401 = vpop.f32.mrb[0].mxu0
        %v3402 = vadd.f32 %v3246, %v3401
        %v3403 = vpop.f32.mrb[0].mxu0
        %v3404 = vadd.f32 %v3250, %v3403
        %3405 = vdwg.mxu0
        %3406 = vmatprep.subr.mxu0 %v451
        %3407 = vmatpush1.msra.mxu0 %v450
        %3408 = vmatprep.subr.mxu0 %v467
        %3409 = vmatpush1.msra.mxu0 %v466
        %3410 = vmatprep.subr.mxu0 %v483
        %3411 = vmatpush1.msra.mxu0 %v482
        %3412 = vmatprep.subr.mxu0 %v499
        %3413 = vmatpush1.msra.mxu0 %v498
        %3414 = vmatprep.subr.mxu0 0.0
        %3415 = vmatpush1.msra.mxu0 0.0
        %3416 = vmatprep.subr.mxu0 0.0
        %3417 = vmatpush1.msra.mxu0 0.0
        %3418 = vmatprep.subr.mxu0 0.0
        %3419 = vmatpush1.msra.mxu0 0.0
        %3420 = vmatprep.subr.mxu0 0.0
        %3421 = vmatpush1.msra.mxu0 0.0
        %3422 = vmatprep.subr.mxu0 0.0
        %3423 = vmatpush1.msra.mxu0 0.0
        %3424 = vmatprep.subr.mxu0 0.0
        %3425 = vmatpush1.msra.mxu0 0.0
        %3426 = vmatprep.subr.mxu0 0.0
        %3427 = vmatpush1.msra.mxu0 0.0
        %3428 = vmatprep.subr.mxu0 0.0
        %3429 = vmatpush1.msra.mxu0 0.0
        %3430 = vmatprep.subr.mxu0 0.0
        %3431 = vmatpush1.msra.mxu0 0.0
        %3432 = vmatprep.subr.mxu0 0.0
        %3433 = vmatpush1.msra.mxu0 0.0
        %3434 = vmatprep.subr.mxu0 0.0
        %3435 = vmatpush1.msra.mxu0 0.0
        %3436 = vmatprep.subr.mxu0 0.0
        %3437 = vmatpush1.msra.mxu0 0.0
        %3438 = vmatprep.subr.mxu0 0.0
        %3439 = vmatpush1.msra.mxu0 0.0
        %3440 = vmatprep.subr.mxu0 0.0
        %3441 = vmatpush1.msra.mxu0 0.0
        %3442 = vmatprep.subr.mxu0 0.0
        %3443 = vmatpush1.msra.mxu0 0.0
        %3444 = vmatprep.subr.mxu0 0.0
        %3445 = vmatpush1.msra.mxu0 0.0
        %3446 = vmatprep.subr.mxu0 0.0
        %3447 = vmatpush1.msra.mxu0 0.0
        %3448 = vmatprep.subr.mxu0 0.0
        %3449 = vmatpush1.msra.mxu0 0.0
        %3450 = vmatprep.subr.mxu0 0.0
        %3451 = vmatpush1.msra.mxu0 0.0
        %3452 = vmatprep.subr.mxu0 0.0
        %3453 = vmatpush1.msra.mxu0 0.0
        %3454 = vmatprep.subr.mxu0 0.0
        %3455 = vmatpush1.msra.mxu0 0.0
        %3456 = vmatprep.subr.mxu0 0.0
        %3457 = vmatpush1.msra.mxu0 0.0
        %3458 = vmatprep.subr.mxu0 0.0
        %3459 = vmatpush1.msra.mxu0 0.0
        %3460 = vmatprep.subr.mxu0 0.0
        %3461 = vmatpush1.msra.mxu0 0.0
        %3462 = vmatprep.subr.mxu0 0.0
        %3463 = vmatpush1.msra.mxu0 0.0
        %3464 = vmatprep.subr.mxu0 0.0
        %3465 = vmatpush1.msra.mxu0 0.0
        %3466 = vmatprep.subr.mxu0 0.0
        %3467 = vmatpush1.msra.mxu0 0.0
        %3468 = vmatprep.subr.mxu0 0.0
        %3469 = vmatpush1.msra.mxu0 0.0
        %3470 = vmatprep.mubr.f32.mxu0 0.0
        %3471 = vmatmul.mubr.f32.gmra.mrb[0].mxu0 %v3324
        %v3472 = vpop.f32.mrb[0].mxu0
        %v3473 = vadd.f32 %v3254, %v3472
        %v3474 = vpop.f32.mrb[0].mxu0
        %v3475 = vadd.f32 %v3258, %v3474
        %3476 = vmatprep.mubr.f32.mxu0 0.0
        %3477 = vmatmul.mubr.f32.gmra.mrb[0].mxu0 %v3327
        %v3478 = vpop.f32.mrb[0].mxu0
        %v3479 = vadd.f32 %v3254, %v3478
        %v3480 = vpop.f32.mrb[0].mxu0
        %v3481 = vadd.f32 %v3258, %v3480
        %3482 = vdwg.mxu0
        %3483 = vmatprep.subr.mxu0 %v453
        %3484 = vmatpush1.msra.mxu0 %v452
        %3485 = vmatprep.subr.mxu0 %v469
        %3486 = vmatpush1.msra.mxu0 %v468
        %3487 = vmatprep.subr.mxu0 %v485
        %3488 = vmatpush1.msra.mxu0 %v484
        %3489 = vmatprep.subr.mxu0 %v501
        %3490 = vmatpush1.msra.mxu0 %v500
        %3491 = vmatprep.subr.mxu0 0.0
        %3492 = vmatpush1.msra.mxu0 0.0
        %3493 = vmatprep.subr.mxu0 0.0
        %3494 = vmatpush1.msra.mxu0 0.0
        %3495 = vmatprep.subr.mxu0 0.0
        %3496 = vmatpush1.msra.mxu0 0.0
        %3497 = vmatprep.subr.mxu0 0.0
        %3498 = vmatpush1.msra.mxu0 0.0
        %3499 = vmatprep.subr.mxu0 0.0
        %3500 = vmatpush1.msra.mxu0 0.0
        %3501 = vmatprep.subr.mxu0 0.0
        %3502 = vmatpush1.msra.mxu0 0.0
        %3503 = vmatprep.subr.mxu0 0.0
        %3504 = vmatpush1.msra.mxu0 0.0
        %3505 = vmatprep.subr.mxu0 0.0
        %3506 = vmatpush1.msra.mxu0 0.0
        %3507 = vmatprep.subr.mxu0 0.0
        %3508 = vmatpush1.msra.mxu0 0.0
        %3509 = vmatprep.subr.mxu0 0.0
        %3510 = vmatpush1.msra.mxu0 0.0
        %3511 = vmatprep.subr.mxu0 0.0
        %3512 = vmatpush1.msra.mxu0 0.0
        %3513 = vmatprep.subr.mxu0 0.0
        %3514 = vmatpush1.msra.mxu0 0.0
        %3515 = vmatprep.subr.mxu0 0.0
        %3516 = vmatpush1.msra.mxu0 0.0
        %3517 = vmatprep.subr.mxu0 0.0
        %3518 = vmatpush1.msra.mxu0 0.0
        %3519 = vmatprep.subr.mxu0 0.0
        %3520 = vmatpush1.msra.mxu0 0.0
        %3521 = vmatprep.subr.mxu0 0.0
        %3522 = vmatpush1.msra.mxu0 0.0
        %3523 = vmatprep.subr.mxu0 0.0
        %3524 = vmatpush1.msra.mxu0 0.0
        %3525 = vmatprep.subr.mxu0 0.0
        %3526 = vmatpush1.msra.mxu0 0.0
        %3527 = vmatprep.subr.mxu0 0.0
        %3528 = vmatpush1.msra.mxu0 0.0
        %3529 = vmatprep.subr.mxu0 0.0
        %3530 = vmatpush1.msra.mxu0 0.0
        %3531 = vmatprep.subr.mxu0 0.0
        %3532 = vmatpush1.msra.mxu0 0.0
        %3533 = vmatprep.subr.mxu0 0.0
        %3534 = vmatpush1.msra.mxu0 0.0
        %3535 = vmatprep.subr.mxu0 0.0
        %3536 = vmatpush1.msra.mxu0 0.0
        %3537 = vmatprep.subr.mxu0 0.0
        %3538 = vmatpush1.msra.mxu0 0.0
        %3539 = vmatprep.subr.mxu0 0.0
        %3540 = vmatpush1.msra.mxu0 0.0
        %3541 = vmatprep.subr.mxu0 0.0
        %3542 = vmatpush1.msra.mxu0 0.0
        %3543 = vmatprep.subr.mxu0 0.0
        %3544 = vmatpush1.msra.mxu0 0.0
        %3545 = vmatprep.subr.mxu0 0.0
        %3546 = vmatpush1.msra.mxu0 0.0
        %3547 = vmatprep.mubr.f32.mxu0 0.0
        %3548 = vmatmul.mubr.f32.gmra.mrb[0].mxu0 %v3324
        %v3549 = vpop.f32.mrb[0].mxu0
        %v3550 = vadd.f32 %v3262, %v3549
        %v3551 = vpop.f32.mrb[0].mxu0
        %v3552 = vadd.f32 %v3266, %v3551
        %3553 = vmatprep.mubr.f32.mxu0 0.0
        %3554 = vmatmul.mubr.f32.gmra.mrb[0].mxu0 %v3327
        %v3555 = vpop.f32.mrb[0].mxu0
        %v3556 = vadd.f32 %v3262, %v3555
        %v3557 = vpop.f32.mrb[0].mxu0
        %v3558 = vadd.f32 %v3266, %v3557
        %3559 = vdwg.mxu0
        %3560 = vmatprep.subr.mxu0 %v455
        %3561 = vmatpush1.msra.mxu0 %v454
        %3562 = vmatprep.subr.mxu0 %v471
        %3563 = vmatpush1.msra.mxu0 %v470
        %3564 = vmatprep.subr.mxu0 %v487
        %3565 = vmatpush1.msra.mxu0 %v486
        %3566 = vmatprep.subr.mxu0 %v503
        %3567 = vmatpush1.msra.mxu0 %v502
        %3568 = vmatprep.subr.mxu0 0.0
        %3569 = vmatpush1.msra.mxu0 0.0
        %3570 = vmatprep.subr.mxu0 0.0
        %3571 = vmatpush1.msra.mxu0 0.0
        %3572 = vmatprep.subr.mxu0 0.0
        %3573 = vmatpush1.msra.mxu0 0.0
        %3574 = vmatprep.subr.mxu0 0.0
        %3575 = vmatpush1.msra.mxu0 0.0
        %3576 = vmatprep.subr.mxu0 0.0
        %3577 = vmatpush1.msra.mxu0 0.0
        %3578 = vmatprep.subr.mxu0 0.0
        %3579 = vmatpush1.msra.mxu0 0.0
        %3580 = vmatprep.subr.mxu0 0.0
        %3581 = vmatpush1.msra.mxu0 0.0
        %3582 = vmatprep.subr.mxu0 0.0
        %3583 = vmatpush1.msra.mxu0 0.0
        %3584 = vmatprep.subr.mxu0 0.0
        %3585 = vmatpush1.msra.mxu0 0.0
        %3586 = vmatprep.subr.mxu0 0.0
        %3587 = vmatpush1.msra.mxu0 0.0
        %3588 = vmatprep.subr.mxu0 0.0
        %3589 = vmatpush1.msra.mxu0 0.0
        %3590 = vmatprep.subr.mxu0 0.0
        %3591 = vmatpush1.msra.mxu0 0.0
        %3592 = vmatprep.subr.mxu0 0.0
        %3593 = vmatpush1.msra.mxu0 0.0
        %3594 = vmatprep.subr.mxu0 0.0
        %3595 = vmatpush1.msra.mxu0 0.0
        %3596 = vmatprep.subr.mxu0 0.0
        %3597 = vmatpush1.msra.mxu0 0.0
        %3598 = vmatprep.subr.mxu0 0.0
        %3599 = vmatpush1.msra.mxu0 0.0
        %3600 = vmatprep.subr.mxu0 0.0
        %3601 = vmatpush1.msra.mxu0 0.0
        %3602 = vmatprep.subr.mxu0 0.0
        %3603 = vmatpush1.msra.mxu0 0.0
        %3604 = vmatprep.subr.mxu0 0.0
        %3605 = vmatpush1.msra.mxu0 0.0
        %3606 = vmatprep.subr.mxu0 0.0
        %3607 = vmatpush1.msra.mxu0 0.0
        %3608 = vmatprep.subr.mxu0 0.0
        %3609 = vmatpush1.msra.mxu0 0.0
        %3610 = vmatprep.subr.mxu0 0.0
        %3611 = vmatpush1.msra.mxu0 0.0
        %3612 = vmatprep.subr.mxu0 0.0
        %3613 = vmatpush1.msra.mxu0 0.0
        %3614 = vmatprep.subr.mxu0 0.0
        %3615 = vmatpush1.msra.mxu0 0.0
        %3616 = vmatprep.subr.mxu0 0.0
        %3617 = vmatpush1.msra.mxu0 0.0
        %3618 = vmatprep.subr.mxu0 0.0
        %3619 = vmatpush1.msra.mxu0 0.0
        %3620 = vmatprep.subr.mxu0 0.0
        %3621 = vmatpush1.msra.mxu0 0.0
        %3622 = vmatprep.subr.mxu0 0.0
        %3623 = vmatpush1.msra.mxu0 0.0
        %3624 = vmatprep.mubr.f32.mxu0 0.0
        %3625 = vmatmul.mubr.f32.gmra.mrb[0].mxu0 %v3324
        %v3626 = vpop.f32.mrb[0].mxu0
        %v3627 = vadd.f32 %v3270, %v3626
        %v3628 = vpop.f32.mrb[0].mxu0
        %v3629 = vadd.f32 %v3274, %v3628
        %3630 = vmatprep.mubr.f32.mxu0 0.0
        %3631 = vmatmul.mubr.f32.gmra.mrb[0].mxu0 %v3327
        %v3632 = vpop.f32.mrb[0].mxu0
        %v3633 = vadd.f32 %v3270, %v3632
        %v3634 = vpop.f32.mrb[0].mxu0
        %v3635 = vadd.f32 %v3274, %v3634
        %3636 = vdwg.mxu0
        %3637 = vmatprep.subr.mxu0 %v457
        %3638 = vmatpush1.msra.mxu0 %v456
        %3639 = vmatprep.subr.mxu0 %v473
        %3640 = vmatpush1.msra.mxu0 %v472
        %3641 = vmatprep.subr.mxu0 %v489
        %3642 = vmatpush1.msra.mxu0 %v488
        %3643 = vmatprep.subr.mxu0 %v505
        %3644 = vmatpush1.msra.mxu0 %v504
        %3645 = vmatprep.subr.mxu0 0.0
        %3646 = vmatpush1.msra.mxu0 0.0
        %3647 = vmatprep.subr.mxu0 0.0
        %3648 = vmatpush1.msra.mxu0 0.0
        %3649 = vmatprep.subr.mxu0 0.0
        %3650 = vmatpush1.msra.mxu0 0.0
        %3651 = vmatprep.subr.mxu0 0.0
        %3652 = vmatpush1.msra.mxu0 0.0
        %3653 = vmatprep.subr.mxu0 0.0
        %3654 = vmatpush1.msra.mxu0 0.0
        %3655 = vmatprep.subr.mxu0 0.0
        %3656 = vmatpush1.msra.mxu0 0.0
        %3657 = vmatprep.subr.mxu0 0.0
        %3658 = vmatpush1.msra.mxu0 0.0
        %3659 = vmatprep.subr.mxu0 0.0
        %3660 = vmatpush1.msra.mxu0 0.0
        %3661 = vmatprep.subr.mxu0 0.0
        %3662 = vmatpush1.msra.mxu0 0.0
        %3663 = vmatprep.subr.mxu0 0.0
        %3664 = vmatpush1.msra.mxu0 0.0
        %3665 = vmatprep.subr.mxu0 0.0
        %3666 = vmatpush1.msra.mxu0 0.0
        %3667 = vmatprep.subr.mxu0 0.0
        %3668 = vmatpush1.msra.mxu0 0.0
        %3669 = vmatprep.subr.mxu0 0.0
        %3670 = vmatpush1.msra.mxu0 0.0
        %3671 = vmatprep.subr.mxu0 0.0
        %3672 = vmatpush1.msra.mxu0 0.0
        %3673 = vmatprep.subr.mxu0 0.0
        %3674 = vmatpush1.msra.mxu0 0.0
        %3675 = vmatprep.subr.mxu0 0.0
        %3676 = vmatpush1.msra.mxu0 0.0
        %3677 = vmatprep.subr.mxu0 0.0
        %3678 = vmatpush1.msra.mxu0 0.0
        %3679 = vmatprep.subr.mxu0 0.0
        %3680 = vmatpush1.msra.mxu0 0.0
        %3681 = vmatprep.subr.mxu0 0.0
        %3682 = vmatpush1.msra.mxu0 0.0
        %3683 = vmatprep.subr.mxu0 0.0
        %3684 = vmatpush1.msra.mxu0 0.0
        %3685 = vmatprep.subr.mxu0 0.0
        %3686 = vmatpush1.msra.mxu0 0.0
        %3687 = vmatprep.subr.mxu0 0.0
        %3688 = vmatpush1.msra.mxu0 0.0
        %3689 = vmatprep.subr.mxu0 0.0
        %3690 = vmatpush1.msra.mxu0 0.0
        %3691 = vmatprep.subr.mxu0 0.0
        %3692 = vmatpush1.msra.mxu0 0.0
        %3693 = vmatprep.subr.mxu0 0.0
        %3694 = vmatpush1.msra.mxu0 0.0
        %3695 = vmatprep.subr.mxu0 0.0
        %3696 = vmatpush1.msra.mxu0 0.0
        %3697 = vmatprep.subr.mxu0 0.0
        %3698 = vmatpush1.msra.mxu0 0.0
        %3699 = vmatprep.subr.mxu0 0.0
        %3700 = vmatpush1.msra.mxu0 0.0
        %3701 = vmatprep.mubr.f32.mxu0 0.0
        %3702 = vmatmul.mubr.f32.gmra.mrb[0].mxu0 %v3324
        %v3703 = vpop.f32.mrb[0].mxu0
        %v3704 = vadd.f32 %v3278, %v3703
        %v3705 = vpop.f32.mrb[0].mxu0
        %v3706 = vadd.f32 %v3282, %v3705
        %3707 = vmatprep.mubr.f32.mxu0 0.0
        %3708 = vmatmul.mubr.f32.gmra.mrb[0].mxu0 %v3327
        %v3709 = vpop.f32.mrb[0].mxu0
        %v3710 = vadd.f32 %v3278, %v3709
        %v3711 = vpop.f32.mrb[0].mxu0
        %v3712 = vadd.f32 %v3282, %v3711
        %3713 = vdwg.mxu0
        %3714 = vmatprep.subr.mxu0 %v459
        %3715 = vmatpush1.msra.mxu0 %v458
        %3716 = vmatprep.subr.mxu0 %v475
        %3717 = vmatpush1.msra.mxu0 %v474
        %3718 = vmatprep.subr.mxu0 %v491
        %3719 = vmatpush1.msra.mxu0 %v490
        %3720 = vmatprep.subr.mxu0 %v507
        %3721 = vmatpush1.msra.mxu0 %v506
        %3722 = vmatprep.subr.mxu0 0.0
        %3723 = vmatpush1.msra.mxu0 0.0
        %3724 = vmatprep.subr.mxu0 0.0
        %3725 = vmatpush1.msra.mxu0 0.0
        %3726 = vmatprep.subr.mxu0 0.0
        %3727 = vmatpush1.msra.mxu0 0.0
        %3728 = vmatprep.subr.mxu0 0.0
        %3729 = vmatpush1.msra.mxu0 0.0
        %3730 = vmatprep.subr.mxu0 0.0
        %3731 = vmatpush1.msra.mxu0 0.0
        %3732 = vmatprep.subr.mxu0 0.0
        %3733 = vmatpush1.msra.mxu0 0.0
        %3734 = vmatprep.subr.mxu0 0.0
        %3735 = vmatpush1.msra.mxu0 0.0
        %3736 = vmatprep.subr.mxu0 0.0
        %3737 = vmatpush1.msra.mxu0 0.0
        %3738 = vmatprep.subr.mxu0 0.0
        %3739 = vmatpush1.msra.mxu0 0.0
        %3740 = vmatprep.subr.mxu0 0.0
        %3741 = vmatpush1.msra.mxu0 0.0
        %3742 = vmatprep.subr.mxu0 0.0
        %3743 = vmatpush1.msra.mxu0 0.0
        %3744 = vmatprep.subr.mxu0 0.0
        %3745 = vmatpush1.msra.mxu0 0.0
        %3746 = vmatprep.subr.mxu0 0.0
        %3747 = vmatpush1.msra.mxu0 0.0
        %3748 = vmatprep.subr.mxu0 0.0
        %3749 = vmatpush1.msra.mxu0 0.0
        %3750 = vmatprep.subr.mxu0 0.0
        %3751 = vmatpush1.msra.mxu0 0.0
        %3752 = vmatprep.subr.mxu0 0.0
        %3753 = vmatpush1.msra.mxu0 0.0
        %3754 = vmatprep.subr.mxu0 0.0
        %3755 = vmatpush1.msra.mxu0 0.0
        %3756 = vmatprep.subr.mxu0 0.0
        %3757 = vmatpush1.msra.mxu0 0.0
        %3758 = vmatprep.subr.mxu0 0.0
        %3759 = vmatpush1.msra.mxu0 0.0
        %3760 = vmatprep.subr.mxu0 0.0
        %3761 = vmatpush1.msra.mxu0 0.0
        %3762 = vmatprep.subr.mxu0 0.0
        %3763 = vmatpush1.msra.mxu0 0.0
        %3764 = vmatprep.subr.mxu0 0.0
        %3765 = vmatpush1.msra.mxu0 0.0
        %3766 = vmatprep.subr.mxu0 0.0
        %3767 = vmatpush1.msra.mxu0 0.0
        %3768 = vmatprep.subr.mxu0 0.0
        %3769 = vmatpush1.msra.mxu0 0.0
        %3770 = vmatprep.subr.mxu0 0.0
        %3771 = vmatpush1.msra.mxu0 0.0
        %3772 = vmatprep.subr.mxu0 0.0
        %3773 = vmatpush1.msra.mxu0 0.0
        %3774 = vmatprep.subr.mxu0 0.0
        %3775 = vmatpush1.msra.mxu0 0.0
        %3776 = vmatprep.subr.mxu0 0.0
        %3777 = vmatpush1.msra.mxu0 0.0
        %3778 = vmatprep.mubr.f32.mxu0 0.0
        %3779 = vmatmul.mubr.f32.gmra.mrb[0].mxu0 %v3324
        %v3780 = vpop.f32.mrb[0].mxu0
        %v3781 = vadd.f32 %v3286, %v3780
        %v3782 = vpop.f32.mrb[0].mxu0
        %v3783 = vadd.f32 %v3290, %v3782
        %3784 = vmatprep.mubr.f32.mxu0 0.0
        %3785 = vmatmul.mubr.f32.gmra.mrb[0].mxu0 %v3327
        %v3786 = vpop.f32.mrb[0].mxu0
        %v3787 = vadd.f32 %v3286, %v3786
        %v3788 = vpop.f32.mrb[0].mxu0
        %v3789 = vadd.f32 %v3290, %v3788
        %3790 = vdwg.mxu0
        %3791 = vmatprep.subr.mxu0 %v461
        %3792 = vmatpush1.msra.mxu0 %v460
        %3793 = vmatprep.subr.mxu0 %v477
        %3794 = vmatpush1.msra.mxu0 %v476
        %3795 = vmatprep.subr.mxu0 %v493
        %3796 = vmatpush1.msra.mxu0 %v492
        %3797 = vmatprep.subr.mxu0 %v509
        %3798 = vmatpush1.msra.mxu0 %v508
        %3799 = vmatprep.subr.mxu0 0.0
        %3800 = vmatpush1.msra.mxu0 0.0
        %3801 = vmatprep.subr.mxu0 0.0
        %3802 = vmatpush1.msra.mxu0 0.0
        %3803 = vmatprep.subr.mxu0 0.0
        %3804 = vmatpush1.msra.mxu0 0.0
        %3805 = vmatprep.subr.mxu0 0.0
        %3806 = vmatpush1.msra.mxu0 0.0
        %3807 = vmatprep.subr.mxu0 0.0
        %3808 = vmatpush1.msra.mxu0 0.0
        %3809 = vmatprep.subr.mxu0 0.0
        %3810 = vmatpush1.msra.mxu0 0.0
        %3811 = vmatprep.subr.mxu0 0.0
        %3812 = vmatpush1.msra.mxu0 0.0
        %3813 = vmatprep.subr.mxu0 0.0
        %3814 = vmatpush1.msra.mxu0 0.0
        %3815 = vmatprep.subr.mxu0 0.0
        %3816 = vmatpush1.msra.mxu0 0.0
        %3817 = vmatprep.subr.mxu0 0.0
        %3818 = vmatpush1.msra.mxu0 0.0
        %3819 = vmatprep.subr.mxu0 0.0
        %3820 = vmatpush1.msra.mxu0 0.0
        %3821 = vmatprep.subr.mxu0 0.0
        %3822 = vmatpush1.msra.mxu0 0.0
        %3823 = vmatprep.subr.mxu0 0.0
        %3824 = vmatpush1.msra.mxu0 0.0
        %3825 = vmatprep.subr.mxu0 0.0
        %3826 = vmatpush1.msra.mxu0 0.0
        %3827 = vmatprep.subr.mxu0 0.0
        %3828 = vmatpush1.msra.mxu0 0.0
        %3829 = vmatprep.subr.mxu0 0.0
        %3830 = vmatpush1.msra.mxu0 0.0
        %3831 = vmatprep.subr.mxu0 0.0
        %3832 = vmatpush1.msra.mxu0 0.0
        %3833 = vmatprep.subr.mxu0 0.0
        %3834 = vmatpush1.msra.mxu0 0.0
        %3835 = vmatprep.subr.mxu0 0.0
        %3836 = vmatpush1.msra.mxu0 0.0
        %3837 = vmatprep.subr.mxu0 0.0
        %3838 = vmatpush1.msra.mxu0 0.0
        %3839 = vmatprep.subr.mxu0 0.0
        %3840 = vmatpush1.msra.mxu0 0.0
        %3841 = vmatprep.subr.mxu0 0.0
        %3842 = vmatpush1.msra.mxu0 0.0
        %3843 = vmatprep.subr.mxu0 0.0
        %3844 = vmatpush1.msra.mxu0 0.0
        %3845 = vmatprep.subr.mxu0 0.0
        %3846 = vmatpush1.msra.mxu0 0.0
        %3847 = vmatprep.subr.mxu0 0.0
        %3848 = vmatpush1.msra.mxu0 0.0
        %3849 = vmatprep.subr.mxu0 0.0
        %3850 = vmatpush1.msra.mxu0 0.0
        %3851 = vmatprep.subr.mxu0 0.0
        %3852 = vmatpush1.msra.mxu0 0.0
        %3853 = vmatprep.subr.mxu0 0.0
        %3854 = vmatpush1.msra.mxu0 0.0
        %3855 = vmatprep.mubr.f32.mxu0 0.0
        %3856 = vmatmul.mubr.f32.gmra.mrb[0].mxu0 %v3324
        %v3857 = vpop.f32.mrb[0].mxu0
        %v3858 = vadd.f32 %v3294, %v3857
        %v3859 = vpop.f32.mrb[0].mxu0
        %v3860 = vadd.f32 %v3298, %v3859
        %3861 = vmatprep.mubr.f32.mxu0 0.0
        %3862 = vmatmul.mubr.f32.gmra.mrb[0].mxu0 %v3327
        %v3863 = vpop.f32.mrb[0].mxu0
        %v3864 = vadd.f32 %v3294, %v3863
        %v3865 = vpop.f32.mrb[0].mxu0
        %v3866 = vadd.f32 %v3298, %v3865
        %3867 = vdwg.mxu0
        %3868 = vmatprep.subr.mxu0 %v463
        %3869 = vmatpush1.msra.mxu0 %v462
        %3870 = vmatprep.subr.mxu0 %v479
        %3871 = vmatpush1.msra.mxu0 %v478
        %3872 = vmatprep.subr.mxu0 %v495
        %3873 = vmatpush1.msra.mxu0 %v494
        %3874 = vmatprep.subr.mxu0 %v511
        %3875 = vmatpush1.msra.mxu0 %v510
        %3876 = vmatprep.subr.mxu0 0.0
        %3877 = vmatpush1.msra.mxu0 0.0
        %3878 = vmatprep.subr.mxu0 0.0
        %3879 = vmatpush1.msra.mxu0 0.0
        %3880 = vmatprep.subr.mxu0 0.0
        %3881 = vmatpush1.msra.mxu0 0.0
        %3882 = vmatprep.subr.mxu0 0.0
        %3883 = vmatpush1.msra.mxu0 0.0
        %3884 = vmatprep.subr.mxu0 0.0
        %3885 = vmatpush1.msra.mxu0 0.0
        %3886 = vmatprep.subr.mxu0 0.0
        %3887 = vmatpush1.msra.mxu0 0.0
        %3888 = vmatprep.subr.mxu0 0.0
        %3889 = vmatpush1.msra.mxu0 0.0
        %3890 = vmatprep.subr.mxu0 0.0
        %3891 = vmatpush1.msra.mxu0 0.0
        %3892 = vmatprep.subr.mxu0 0.0
        %3893 = vmatpush1.msra.mxu0 0.0
        %3894 = vmatprep.subr.mxu0 0.0
        %3895 = vmatpush1.msra.mxu0 0.0
        %3896 = vmatprep.subr.mxu0 0.0
        %3897 = vmatpush1.msra.mxu0 0.0
        %3898 = vmatprep.subr.mxu0 0.0
        %3899 = vmatpush1.msra.mxu0 0.0
        %3900 = vmatprep.subr.mxu0 0.0
        %3901 = vmatpush1.msra.mxu0 0.0
        %3902 = vmatprep.subr.mxu0 0.0
        %3903 = vmatpush1.msra.mxu0 0.0
        %3904 = vmatprep.subr.mxu0 0.0
        %3905 = vmatpush1.msra.mxu0 0.0
        %3906 = vmatprep.subr.mxu0 0.0
        %3907 = vmatpush1.msra.mxu0 0.0
        %3908 = vmatprep.subr.mxu0 0.0
        %3909 = vmatpush1.msra.mxu0 0.0
        %3910 = vmatprep.subr.mxu0 0.0
        %3911 = vmatpush1.msra.mxu0 0.0
        %3912 = vmatprep.subr.mxu0 0.0
        %3913 = vmatpush1.msra.mxu0 0.0
        %3914 = vmatprep.subr.mxu0 0.0
        %3915 = vmatpush1.msra.mxu0 0.0
        %3916 = vmatprep.subr.mxu0 0.0
        %3917 = vmatpush1.msra.mxu0 0.0
        %3918 = vmatprep.subr.mxu0 0.0
        %3919 = vmatpush1.msra.mxu0 0.0
        %3920 = vmatprep.subr.mxu0 0.0
        %3921 = vmatpush1.msra.mxu0 0.0
        %3922 = vmatprep.subr.mxu0 0.0
        %3923 = vmatpush1.msra.mxu0 0.0
        %3924 = vmatprep.subr.mxu0 0.0
        %3925 = vmatpush1.msra.mxu0 0.0
        %3926 = vmatprep.subr.mxu0 0.0
        %3927 = vmatpush1.msra.mxu0 0.0
        %3928 = vmatprep.subr.mxu0 0.0
        %3929 = vmatpush1.msra.mxu0 0.0
        %3930 = vmatprep.subr.mxu0 0.0
        %3931 = vmatpush1.msra.mxu0 0.0
        %3932 = vmatprep.mubr.f32.mxu0 0.0
        %3933 = vmatmul.mubr.f32.gmra.mrb[0].mxu0 %v3324
        %v3934 = vpop.f32.mrb[0].mxu0
        %v3935 = vadd.f32 %v3302, %v3934
        %v3936 = vpop.f32.mrb[0].mxu0
        %v3937 = vadd.f32 %v3306, %v3936
        %3938 = vmatprep.mubr.f32.mxu0 0.0
        %3939 = vmatmul.mubr.f32.gmra.mrb[0].mxu0 %v3327
        %v3940 = vpop.f32.mrb[0].mxu0
        %v3941 = vadd.f32 %v3302, %v3940
        %v3942 = vpop.f32.mrb[0].mxu0
        %v3943 = vadd.f32 %v3306, %v3942
        %3944 = vdwg.mxu0
        %v3945 = vmax.f32 %v3396, 0.0
        %v3946 = vmax.f32 %v3398, 0.0
        %v3947 = vmax.f32 %v3473, 0.0
        %v3948 = vmax.f32 %v3475, 0.0
        %v3949 = vmax.f32 %v3550, 0.0
        %v3950 = vmax.f32 %v3552, 0.0
        %v3951 = vmax.f32 %v3627, 0.0
        %v3952 = vmax.f32 %v3629, 0.0
        %v3953 = vmax.f32 %v3704, 0.0
        %v3954 = vmax.f32 %v3706, 0.0
        %v3955 = vmax.f32 %v3781, 0.0
        %v3956 = vmax.f32 %v3783, 0.0
        %v3957 = vmax.f32 %v3858, 0.0
        %v3958 = vmax.f32 %v3860, 0.0
        %v3959 = vmax.f32 %v3935, 0.0
        %v3960 = vmax.f32 %v3937, 0.0
        %v3961 = vmax.f32 %v3402, 0.0
        %v3962 = vmax.f32 %v3404, 0.0
        %v3963 = vmax.f32 %v3479, 0.0
        %v3964 = vmax.f32 %v3481, 0.0
        %v3965 = vmax.f32 %v3556, 0.0
        %v3966 = vmax.f32 %v3558, 0.0
        %v3967 = vmax.f32 %v3633, 0.0
        %v3968 = vmax.f32 %v3635, 0.0
        %v3969 = vmax.f32 %v3710, 0.0
        %v3970 = vmax.f32 %v3712, 0.0
        %v3971 = vmax.f32 %v3787, 0.0
        %v3972 = vmax.f32 %v3789, 0.0
        %v3973 = vmax.f32 %v3864, 0.0
        %v3974 = vmax.f32 %v3866, 0.0
        %v3975 = vmax.f32 %v3941, 0.0
        %v3976 = vmax.f32 %v3943, 0.0
        %v3977 = vlaneseq
        %v3978 = vshrl.u32 %v3977, 7
        %v3979 = vsub.s32 4, %v3978
        %v3980 = vrot.slane %v1024, %v3979
        %3981 = vmatprep.subr.mxu0 0.0
        %3982 = vmatpush1.msra.mxu0 %v768
        %3983 = vmatprep.subr.mxu0 0.0
        %3984 = vmatpush1.msra.mxu0 %v769
        %3985 = vmatprep.subr.mxu0 0.0
        %3986 = vmatpush1.msra.mxu0 %v770
        %3987 = vmatprep.subr.mxu0 0.0
        %3988 = vmatpush1.msra.mxu0 %v771
        %3989 = vmatprep.subr.mxu0 0.0
        %3990 = vmatpush1.msra.mxu0 %v772
        %3991 = vmatprep.subr.mxu0 0.0
        %3992 = vmatpush1.msra.mxu0 %v773
        %3993 = vmatprep.subr.mxu0 0.0
        %3994 = vmatpush1.msra.mxu0 %v774
        %3995 = vmatprep.subr.mxu0 0.0
        %3996 = vmatpush1.msra.mxu0 %v775
        %3997 = vmatprep.subr.mxu0 0.0
        %3998 = vmatpush1.msra.mxu0 %v776
        %3999 = vmatprep.subr.mxu0 0.0
        %4000 = vmatpush1.msra.mxu0 %v777
        %4001 = vmatprep.subr.mxu0 0.0
        %4002 = vmatpush1.msra.mxu0 %v778
        %4003 = vmatprep.subr.mxu0 0.0
        %4004 = vmatpush1.msra.mxu0 %v779
        %4005 = vmatprep.subr.mxu0 0.0
        %4006 = vmatpush1.msra.mxu0 %v780
        %4007 = vmatprep.subr.mxu0 0.0
        %4008 = vmatpush1.msra.mxu0 %v781
        %4009 = vmatprep.subr.mxu0 0.0
        %4010 = vmatpush1.msra.mxu0 %v782
        %4011 = vmatprep.subr.mxu0 0.0
        %4012 = vmatpush1.msra.mxu0 %v783
        %4013 = vmatprep.subr.mxu0 0.0
        %4014 = vmatpush1.msra.mxu0 %v784
        %4015 = vmatprep.subr.mxu0 0.0
        %4016 = vmatpush1.msra.mxu0 %v785
        %4017 = vmatprep.subr.mxu0 0.0
        %4018 = vmatpush1.msra.mxu0 %v786
        %4019 = vmatprep.subr.mxu0 0.0
        %4020 = vmatpush1.msra.mxu0 %v787
        %4021 = vmatprep.subr.mxu0 0.0
        %4022 = vmatpush1.msra.mxu0 %v788
        %4023 = vmatprep.subr.mxu0 0.0
        %4024 = vmatpush1.msra.mxu0 %v789
        %4025 = vmatprep.subr.mxu0 0.0
        %4026 = vmatpush1.msra.mxu0 %v790
        %4027 = vmatprep.subr.mxu0 0.0
        %4028 = vmatpush1.msra.mxu0 %v791
        %4029 = vmatprep.subr.mxu0 0.0
        %4030 = vmatpush1.msra.mxu0 %v792
        %4031 = vmatprep.subr.mxu0 0.0
        %4032 = vmatpush1.msra.mxu0 %v793
        %4033 = vmatprep.subr.mxu0 0.0
        %4034 = vmatpush1.msra.mxu0 %v794
        %4035 = vmatprep.subr.mxu0 0.0
        %4036 = vmatpush1.msra.mxu0 %v795
        %4037 = vmatprep.subr.mxu0 0.0
        %4038 = vmatpush1.msra.mxu0 %v796
        %4039 = vmatprep.subr.mxu0 0.0
        %4040 = vmatpush1.msra.mxu0 %v797
        %4041 = vmatprep.subr.mxu0 0.0
        %4042 = vmatpush1.msra.mxu0 %v798
        %4043 = vmatprep.subr.mxu0 0.0
        %4044 = vmatpush1.msra.mxu0 %v799
        %4045 = vmatprep.mubr.f32.mxu0 %v3946
        %4046 = vmatmul.mubr.f32.gmra.mrb[0].mxu0 %v3945
        %v4047 = vpop.f32.mrb[0].mxu0
        %v4048 = vadd.f32 %v3980, %v4047
        %v4049 = vpop.f32.mrb[0].mxu0
        %4050 = vmatprep.mubr.f32.mxu0 %v3962
        %4051 = vmatmul.mubr.f32.gmra.mrb[0].mxu0 %v3961
        %v4052 = vpop.f32.mrb[0].mxu0
        %v4053 = vadd.f32 %v3980, %v4052
        %v4054 = vpop.f32.mrb[0].mxu0
        %4055 = vdwg.mxu0
        %4056 = vmatprep.subr.mxu0 0.0
        %4057 = vmatpush1.msra.mxu0 %v800
        %4058 = vmatprep.subr.mxu0 0.0
        %4059 = vmatpush1.msra.mxu0 %v801
        %4060 = vmatprep.subr.mxu0 0.0
        %4061 = vmatpush1.msra.mxu0 %v802
        %4062 = vmatprep.subr.mxu0 0.0
        %4063 = vmatpush1.msra.mxu0 %v803
        %4064 = vmatprep.subr.mxu0 0.0
        %4065 = vmatpush1.msra.mxu0 %v804
        %4066 = vmatprep.subr.mxu0 0.0
        %4067 = vmatpush1.msra.mxu0 %v805
        %4068 = vmatprep.subr.mxu0 0.0
        %4069 = vmatpush1.msra.mxu0 %v806
        %4070 = vmatprep.subr.mxu0 0.0
        %4071 = vmatpush1.msra.mxu0 %v807
        %4072 = vmatprep.subr.mxu0 0.0
        %4073 = vmatpush1.msra.mxu0 %v808
        %4074 = vmatprep.subr.mxu0 0.0
        %4075 = vmatpush1.msra.mxu0 %v809
        %4076 = vmatprep.subr.mxu0 0.0
        %4077 = vmatpush1.msra.mxu0 %v810
        %4078 = vmatprep.subr.mxu0 0.0
        %4079 = vmatpush1.msra.mxu0 %v811
        %4080 = vmatprep.subr.mxu0 0.0
        %4081 = vmatpush1.msra.mxu0 %v812
        %4082 = vmatprep.subr.mxu0 0.0
        %4083 = vmatpush1.msra.mxu0 %v813
        %4084 = vmatprep.subr.mxu0 0.0
        %4085 = vmatpush1.msra.mxu0 %v814
        %4086 = vmatprep.subr.mxu0 0.0
        %4087 = vmatpush1.msra.mxu0 %v815
        %4088 = vmatprep.subr.mxu0 0.0
        %4089 = vmatpush1.msra.mxu0 %v816
        %4090 = vmatprep.subr.mxu0 0.0
        %4091 = vmatpush1.msra.mxu0 %v817
        %4092 = vmatprep.subr.mxu0 0.0
        %4093 = vmatpush1.msra.mxu0 %v818
        %4094 = vmatprep.subr.mxu0 0.0
        %4095 = vmatpush1.msra.mxu0 %v819
        %4096 = vmatprep.subr.mxu0 0.0
        %4097 = vmatpush1.msra.mxu0 %v820
        %4098 = vmatprep.subr.mxu0 0.0
        %4099 = vmatpush1.msra.mxu0 %v821
        %4100 = vmatprep.subr.mxu0 0.0
        %4101 = vmatpush1.msra.mxu0 %v822
        %4102 = vmatprep.subr.mxu0 0.0
        %4103 = vmatpush1.msra.mxu0 %v823
        %4104 = vmatprep.subr.mxu0 0.0
        %4105 = vmatpush1.msra.mxu0 %v824
        %4106 = vmatprep.subr.mxu0 0.0
        %4107 = vmatpush1.msra.mxu0 %v825
        %4108 = vmatprep.subr.mxu0 0.0
        %4109 = vmatpush1.msra.mxu0 %v826
        %4110 = vmatprep.subr.mxu0 0.0
        %4111 = vmatpush1.msra.mxu0 %v827
        %4112 = vmatprep.subr.mxu0 0.0
        %4113 = vmatpush1.msra.mxu0 %v828
        %4114 = vmatprep.subr.mxu0 0.0
        %4115 = vmatpush1.msra.mxu0 %v829
        %4116 = vmatprep.subr.mxu0 0.0
        %4117 = vmatpush1.msra.mxu0 %v830
        %4118 = vmatprep.subr.mxu0 0.0
        %4119 = vmatpush1.msra.mxu0 %v831
        %4120 = vmatprep.mubr.f32.mxu0 %v3948
        %4121 = vmatmul.mubr.f32.gmra.mrb[0].mxu0 %v3947
        %v4122 = vpop.f32.mrb[0].mxu0
        %v4123 = vadd.f32 %v4048, %v4122
        %v4124 = vpop.f32.mrb[0].mxu0
        %4125 = vmatprep.mubr.f32.mxu0 %v3964
        %4126 = vmatmul.mubr.f32.gmra.mrb[0].mxu0 %v3963
        %v4127 = vpop.f32.mrb[0].mxu0
        %v4128 = vadd.f32 %v4053, %v4127
        %v4129 = vpop.f32.mrb[0].mxu0
        %4130 = vdwg.mxu0
        %4131 = vmatprep.subr.mxu0 0.0
        %4132 = vmatpush1.msra.mxu0 %v832
        %4133 = vmatprep.subr.mxu0 0.0
        %4134 = vmatpush1.msra.mxu0 %v833
        %4135 = vmatprep.subr.mxu0 0.0
        %4136 = vmatpush1.msra.mxu0 %v834
        %4137 = vmatprep.subr.mxu0 0.0
        %4138 = vmatpush1.msra.mxu0 %v835
        %4139 = vmatprep.subr.mxu0 0.0
        %4140 = vmatpush1.msra.mxu0 %v836
        %4141 = vmatprep.subr.mxu0 0.0
        %4142 = vmatpush1.msra.mxu0 %v837
        %4143 = vmatprep.subr.mxu0 0.0
        %4144 = vmatpush1.msra.mxu0 %v838
        %4145 = vmatprep.subr.mxu0 0.0
        %4146 = vmatpush1.msra.mxu0 %v839
        %4147 = vmatprep.subr.mxu0 0.0
        %4148 = vmatpush1.msra.mxu0 %v840
        %4149 = vmatprep.subr.mxu0 0.0
        %4150 = vmatpush1.msra.mxu0 %v841
        %4151 = vmatprep.subr.mxu0 0.0
        %4152 = vmatpush1.msra.mxu0 %v842
        %4153 = vmatprep.subr.mxu0 0.0
        %4154 = vmatpush1.msra.mxu0 %v843
        %4155 = vmatprep.subr.mxu0 0.0
        %4156 = vmatpush1.msra.mxu0 %v844
        %4157 = vmatprep.subr.mxu0 0.0
        %4158 = vmatpush1.msra.mxu0 %v845
        %4159 = vmatprep.subr.mxu0 0.0
        %4160 = vmatpush1.msra.mxu0 %v846
        %4161 = vmatprep.subr.mxu0 0.0
        %4162 = vmatpush1.msra.mxu0 %v847
        %4163 = vmatprep.subr.mxu0 0.0
        %4164 = vmatpush1.msra.mxu0 %v848
        %4165 = vmatprep.subr.mxu0 0.0
        %4166 = vmatpush1.msra.mxu0 %v849
        %4167 = vmatprep.subr.mxu0 0.0
        %4168 = vmatpush1.msra.mxu0 %v850
        %4169 = vmatprep.subr.mxu0 0.0
        %4170 = vmatpush1.msra.mxu0 %v851
        %4171 = vmatprep.subr.mxu0 0.0
        %4172 = vmatpush1.msra.mxu0 %v852
        %4173 = vmatprep.subr.mxu0 0.0
        %4174 = vmatpush1.msra.mxu0 %v853
        %4175 = vmatprep.subr.mxu0 0.0
        %4176 = vmatpush1.msra.mxu0 %v854
        %4177 = vmatprep.subr.mxu0 0.0
        %4178 = vmatpush1.msra.mxu0 %v855
        %4179 = vmatprep.subr.mxu0 0.0
        %4180 = vmatpush1.msra.mxu0 %v856
        %4181 = vmatprep.subr.mxu0 0.0
        %4182 = vmatpush1.msra.mxu0 %v857
        %4183 = vmatprep.subr.mxu0 0.0
        %4184 = vmatpush1.msra.mxu0 %v858
        %4185 = vmatprep.subr.mxu0 0.0
        %4186 = vmatpush1.msra.mxu0 %v859
        %4187 = vmatprep.subr.mxu0 0.0
        %4188 = vmatpush1.msra.mxu0 %v860
        %4189 = vmatprep.subr.mxu0 0.0
        %4190 = vmatpush1.msra.mxu0 %v861
        %4191 = vmatprep.subr.mxu0 0.0
        %4192 = vmatpush1.msra.mxu0 %v862
        %4193 = vmatprep.subr.mxu0 0.0
        %4194 = vmatpush1.msra.mxu0 %v863
        %4195 = vmatprep.mubr.f32.mxu0 %v3950
        %4196 = vmatmul.mubr.f32.gmra.mrb[0].mxu0 %v3949
        %v4197 = vpop.f32.mrb[0].mxu0
        %v4198 = vadd.f32 %v4123, %v4197
        %v4199 = vpop.f32.mrb[0].mxu0
        %4200 = vmatprep.mubr.f32.mxu0 %v3966
        %4201 = vmatmul.mubr.f32.gmra.mrb[0].mxu0 %v3965
        %v4202 = vpop.f32.mrb[0].mxu0
        %v4203 = vadd.f32 %v4128, %v4202
        %v4204 = vpop.f32.mrb[0].mxu0
        %4205 = vdwg.mxu0
        %4206 = vmatprep.subr.mxu0 0.0
        %4207 = vmatpush1.msra.mxu0 %v864
        %4208 = vmatprep.subr.mxu0 0.0
        %4209 = vmatpush1.msra.mxu0 %v865
        %4210 = vmatprep.subr.mxu0 0.0
        %4211 = vmatpush1.msra.mxu0 %v866
        %4212 = vmatprep.subr.mxu0 0.0
        %4213 = vmatpush1.msra.mxu0 %v867
        %4214 = vmatprep.subr.mxu0 0.0
        %4215 = vmatpush1.msra.mxu0 %v868
        %4216 = vmatprep.subr.mxu0 0.0
        %4217 = vmatpush1.msra.mxu0 %v869
        %4218 = vmatprep.subr.mxu0 0.0
        %4219 = vmatpush1.msra.mxu0 %v870
        %4220 = vmatprep.subr.mxu0 0.0
        %4221 = vmatpush1.msra.mxu0 %v871
        %4222 = vmatprep.subr.mxu0 0.0
        %4223 = vmatpush1.msra.mxu0 %v872
        %4224 = vmatprep.subr.mxu0 0.0
        %4225 = vmatpush1.msra.mxu0 %v873
        %4226 = vmatprep.subr.mxu0 0.0
        %4227 = vmatpush1.msra.mxu0 %v874
        %4228 = vmatprep.subr.mxu0 0.0
        %4229 = vmatpush1.msra.mxu0 %v875
        %4230 = vmatprep.subr.mxu0 0.0
        %4231 = vmatpush1.msra.mxu0 %v876
        %4232 = vmatprep.subr.mxu0 0.0
        %4233 = vmatpush1.msra.mxu0 %v877
        %4234 = vmatprep.subr.mxu0 0.0
        %4235 = vmatpush1.msra.mxu0 %v878
        %4236 = vmatprep.subr.mxu0 0.0
        %4237 = vmatpush1.msra.mxu0 %v879
        %4238 = vmatprep.subr.mxu0 0.0
        %4239 = vmatpush1.msra.mxu0 %v880
        %4240 = vmatprep.subr.mxu0 0.0
        %4241 = vmatpush1.msra.mxu0 %v881
        %4242 = vmatprep.subr.mxu0 0.0
        %4243 = vmatpush1.msra.mxu0 %v882
        %4244 = vmatprep.subr.mxu0 0.0
        %4245 = vmatpush1.msra.mxu0 %v883
        %4246 = vmatprep.subr.mxu0 0.0
        %4247 = vmatpush1.msra.mxu0 %v884
        %4248 = vmatprep.subr.mxu0 0.0
        %4249 = vmatpush1.msra.mxu0 %v885
        %4250 = vmatprep.subr.mxu0 0.0
        %4251 = vmatpush1.msra.mxu0 %v886
        %4252 = vmatprep.subr.mxu0 0.0
        %4253 = vmatpush1.msra.mxu0 %v887
        %4254 = vmatprep.subr.mxu0 0.0
        %4255 = vmatpush1.msra.mxu0 %v888
        %4256 = vmatprep.subr.mxu0 0.0
        %4257 = vmatpush1.msra.mxu0 %v889
        %4258 = vmatprep.subr.mxu0 0.0
        %4259 = vmatpush1.msra.mxu0 %v890
        %4260 = vmatprep.subr.mxu0 0.0
        %4261 = vmatpush1.msra.mxu0 %v891
        %4262 = vmatprep.subr.mxu0 0.0
        %4263 = vmatpush1.msra.mxu0 %v892
        %4264 = vmatprep.subr.mxu0 0.0
        %4265 = vmatpush1.msra.mxu0 %v893
        %4266 = vmatprep.subr.mxu0 0.0
        %4267 = vmatpush1.msra.mxu0 %v894
        %4268 = vmatprep.subr.mxu0 0.0
        %4269 = vmatpush1.msra.mxu0 %v895
        %4270 = vmatprep.mubr.f32.mxu0 %v3952
        %4271 = vmatmul.mubr.f32.gmra.mrb[0].mxu0 %v3951
        %v4272 = vpop.f32.mrb[0].mxu0
        %v4273 = vadd.f32 %v4198, %v4272
        %v4274 = vpop.f32.mrb[0].mxu0
        %4275 = vmatprep.mubr.f32.mxu0 %v3968
        %4276 = vmatmul.mubr.f32.gmra.mrb[0].mxu0 %v3967
        %v4277 = vpop.f32.mrb[0].mxu0
        %v4278 = vadd.f32 %v4203, %v4277
        %v4279 = vpop.f32.mrb[0].mxu0
        %4280 = vdwg.mxu0
        %4281 = vmatprep.subr.mxu0 0.0
        %4282 = vmatpush1.msra.mxu0 %v896
        %4283 = vmatprep.subr.mxu0 0.0
        %4284 = vmatpush1.msra.mxu0 %v897
        %4285 = vmatprep.subr.mxu0 0.0
        %4286 = vmatpush1.msra.mxu0 %v898
        %4287 = vmatprep.subr.mxu0 0.0
        %4288 = vmatpush1.msra.mxu0 %v899
        %4289 = vmatprep.subr.mxu0 0.0
        %4290 = vmatpush1.msra.mxu0 %v900
        %4291 = vmatprep.subr.mxu0 0.0
        %4292 = vmatpush1.msra.mxu0 %v901
        %4293 = vmatprep.subr.mxu0 0.0
        %4294 = vmatpush1.msra.mxu0 %v902
        %4295 = vmatprep.subr.mxu0 0.0
        %4296 = vmatpush1.msra.mxu0 %v903
        %4297 = vmatprep.subr.mxu0 0.0
        %4298 = vmatpush1.msra.mxu0 %v904
        %4299 = vmatprep.subr.mxu0 0.0
        %4300 = vmatpush1.msra.mxu0 %v905
        %4301 = vmatprep.subr.mxu0 0.0
        %4302 = vmatpush1.msra.mxu0 %v906
        %4303 = vmatprep.subr.mxu0 0.0
        %4304 = vmatpush1.msra.mxu0 %v907
        %4305 = vmatprep.subr.mxu0 0.0
        %4306 = vmatpush1.msra.mxu0 %v908
        %4307 = vmatprep.subr.mxu0 0.0
        %4308 = vmatpush1.msra.mxu0 %v909
        %4309 = vmatprep.subr.mxu0 0.0
        %4310 = vmatpush1.msra.mxu0 %v910
        %4311 = vmatprep.subr.mxu0 0.0
        %4312 = vmatpush1.msra.mxu0 %v911
        %4313 = vmatprep.subr.mxu0 0.0
        %4314 = vmatpush1.msra.mxu0 %v912
        %4315 = vmatprep.subr.mxu0 0.0
        %4316 = vmatpush1.msra.mxu0 %v913
        %4317 = vmatprep.subr.mxu0 0.0
        %4318 = vmatpush1.msra.mxu0 %v914
        %4319 = vmatprep.subr.mxu0 0.0
        %4320 = vmatpush1.msra.mxu0 %v915
        %4321 = vmatprep.subr.mxu0 0.0
        %4322 = vmatpush1.msra.mxu0 %v916
        %4323 = vmatprep.subr.mxu0 0.0
        %4324 = vmatpush1.msra.mxu0 %v917
        %4325 = vmatprep.subr.mxu0 0.0
        %4326 = vmatpush1.msra.mxu0 %v918
        %4327 = vmatprep.subr.mxu0 0.0
        %4328 = vmatpush1.msra.mxu0 %v919
        %4329 = vmatprep.subr.mxu0 0.0
        %4330 = vmatpush1.msra.mxu0 %v920
        %4331 = vmatprep.subr.mxu0 0.0
        %4332 = vmatpush1.msra.mxu0 %v921
        %4333 = vmatprep.subr.mxu0 0.0
        %4334 = vmatpush1.msra.mxu0 %v922
        %4335 = vmatprep.subr.mxu0 0.0
        %4336 = vmatpush1.msra.mxu0 %v923
        %4337 = vmatprep.subr.mxu0 0.0
        %4338 = vmatpush1.msra.mxu0 %v924
        %4339 = vmatprep.subr.mxu0 0.0
        %4340 = vmatpush1.msra.mxu0 %v925
        %4341 = vmatprep.subr.mxu0 0.0
        %4342 = vmatpush1.msra.mxu0 %v926
        %4343 = vmatprep.subr.mxu0 0.0
        %4344 = vmatpush1.msra.mxu0 %v927
        %4345 = vmatprep.mubr.f32.mxu0 %v3954
        %4346 = vmatmul.mubr.f32.gmra.mrb[0].mxu0 %v3953
        %v4347 = vpop.f32.mrb[0].mxu0
        %v4348 = vadd.f32 %v4273, %v4347
        %v4349 = vpop.f32.mrb[0].mxu0
        %4350 = vmatprep.mubr.f32.mxu0 %v3970
        %4351 = vmatmul.mubr.f32.gmra.mrb[0].mxu0 %v3969
        %v4352 = vpop.f32.mrb[0].mxu0
        %v4353 = vadd.f32 %v4278, %v4352
        %v4354 = vpop.f32.mrb[0].mxu0
        %4355 = vdwg.mxu0
        %4356 = vmatprep.subr.mxu0 0.0
        %4357 = vmatpush1.msra.mxu0 %v928
        %4358 = vmatprep.subr.mxu0 0.0
        %4359 = vmatpush1.msra.mxu0 %v929
        %4360 = vmatprep.subr.mxu0 0.0
        %4361 = vmatpush1.msra.mxu0 %v930
        %4362 = vmatprep.subr.mxu0 0.0
        %4363 = vmatpush1.msra.mxu0 %v931
        %4364 = vmatprep.subr.mxu0 0.0
        %4365 = vmatpush1.msra.mxu0 %v932
        %4366 = vmatprep.subr.mxu0 0.0
        %4367 = vmatpush1.msra.mxu0 %v933
        %4368 = vmatprep.subr.mxu0 0.0
        %4369 = vmatpush1.msra.mxu0 %v934
        %4370 = vmatprep.subr.mxu0 0.0
        %4371 = vmatpush1.msra.mxu0 %v935
        %4372 = vmatprep.subr.mxu0 0.0
        %4373 = vmatpush1.msra.mxu0 %v936
        %4374 = vmatprep.subr.mxu0 0.0
        %4375 = vmatpush1.msra.mxu0 %v937
        %4376 = vmatprep.subr.mxu0 0.0
        %4377 = vmatpush1.msra.mxu0 %v938
        %4378 = vmatprep.subr.mxu0 0.0
        %4379 = vmatpush1.msra.mxu0 %v939
        %4380 = vmatprep.subr.mxu0 0.0
        %4381 = vmatpush1.msra.mxu0 %v940
        %4382 = vmatprep.subr.mxu0 0.0
        %4383 = vmatpush1.msra.mxu0 %v941
        %4384 = vmatprep.subr.mxu0 0.0
        %4385 = vmatpush1.msra.mxu0 %v942
        %4386 = vmatprep.subr.mxu0 0.0
        %4387 = vmatpush1.msra.mxu0 %v943
        %4388 = vmatprep.subr.mxu0 0.0
        %4389 = vmatpush1.msra.mxu0 %v944
        %4390 = vmatprep.subr.mxu0 0.0
        %4391 = vmatpush1.msra.mxu0 %v945
        %4392 = vmatprep.subr.mxu0 0.0
        %4393 = vmatpush1.msra.mxu0 %v946
        %4394 = vmatprep.subr.mxu0 0.0
        %4395 = vmatpush1.msra.mxu0 %v947
        %4396 = vmatprep.subr.mxu0 0.0
        %4397 = vmatpush1.msra.mxu0 %v948
        %4398 = vmatprep.subr.mxu0 0.0
        %4399 = vmatpush1.msra.mxu0 %v949
        %4400 = vmatprep.subr.mxu0 0.0
        %4401 = vmatpush1.msra.mxu0 %v950
        %4402 = vmatprep.subr.mxu0 0.0
        %4403 = vmatpush1.msra.mxu0 %v951
        %4404 = vmatprep.subr.mxu0 0.0
        %4405 = vmatpush1.msra.mxu0 %v952
        %4406 = vmatprep.subr.mxu0 0.0
        %4407 = vmatpush1.msra.mxu0 %v953
        %4408 = vmatprep.subr.mxu0 0.0
        %4409 = vmatpush1.msra.mxu0 %v954
        %4410 = vmatprep.subr.mxu0 0.0
        %4411 = vmatpush1.msra.mxu0 %v955
        %4412 = vmatprep.subr.mxu0 0.0
        %4413 = vmatpush1.msra.mxu0 %v956
        %4414 = vmatprep.subr.mxu0 0.0
        %4415 = vmatpush1.msra.mxu0 %v957
        %4416 = vmatprep.subr.mxu0 0.0
        %4417 = vmatpush1.msra.mxu0 %v958
        %4418 = vmatprep.subr.mxu0 0.0
        %4419 = vmatpush1.msra.mxu0 %v959
        %4420 = vmatprep.mubr.f32.mxu0 %v3956
        %4421 = vmatmul.mubr.f32.gmra.mrb[0].mxu0 %v3955
        %v4422 = vpop.f32.mrb[0].mxu0
        %v4423 = vadd.f32 %v4348, %v4422
        %v4424 = vpop.f32.mrb[0].mxu0
        %4425 = vmatprep.mubr.f32.mxu0 %v3972
        %4426 = vmatmul.mubr.f32.gmra.mrb[0].mxu0 %v3971
        %v4427 = vpop.f32.mrb[0].mxu0
        %v4428 = vadd.f32 %v4353, %v4427
        %v4429 = vpop.f32.mrb[0].mxu0
        %4430 = vdwg.mxu0
        %4431 = vmatprep.subr.mxu0 0.0
        %4432 = vmatpush1.msra.mxu0 %v960
        %4433 = vmatprep.subr.mxu0 0.0
        %4434 = vmatpush1.msra.mxu0 %v961
        %4435 = vmatprep.subr.mxu0 0.0
        %4436 = vmatpush1.msra.mxu0 %v962
        %4437 = vmatprep.subr.mxu0 0.0
        %4438 = vmatpush1.msra.mxu0 %v963
        %4439 = vmatprep.subr.mxu0 0.0
        %4440 = vmatpush1.msra.mxu0 %v964
        %4441 = vmatprep.subr.mxu0 0.0
        %4442 = vmatpush1.msra.mxu0 %v965
        %4443 = vmatprep.subr.mxu0 0.0
        %4444 = vmatpush1.msra.mxu0 %v966
        %4445 = vmatprep.subr.mxu0 0.0
        %4446 = vmatpush1.msra.mxu0 %v967
        %4447 = vmatprep.subr.mxu0 0.0
        %4448 = vmatpush1.msra.mxu0 %v968
        %4449 = vmatprep.subr.mxu0 0.0
        %4450 = vmatpush1.msra.mxu0 %v969
        %4451 = vmatprep.subr.mxu0 0.0
        %4452 = vmatpush1.msra.mxu0 %v970
        %4453 = vmatprep.subr.mxu0 0.0
        %4454 = vmatpush1.msra.mxu0 %v971
        %4455 = vmatprep.subr.mxu0 0.0
        %4456 = vmatpush1.msra.mxu0 %v972
        %4457 = vmatprep.subr.mxu0 0.0
        %4458 = vmatpush1.msra.mxu0 %v973
        %4459 = vmatprep.subr.mxu0 0.0
        %4460 = vmatpush1.msra.mxu0 %v974
        %4461 = vmatprep.subr.mxu0 0.0
        %4462 = vmatpush1.msra.mxu0 %v975
        %4463 = vmatprep.subr.mxu0 0.0
        %4464 = vmatpush1.msra.mxu0 %v976
        %4465 = vmatprep.subr.mxu0 0.0
        %4466 = vmatpush1.msra.mxu0 %v977
        %4467 = vmatprep.subr.mxu0 0.0
        %4468 = vmatpush1.msra.mxu0 %v978
        %4469 = vmatprep.subr.mxu0 0.0
        %4470 = vmatpush1.msra.mxu0 %v979
        %4471 = vmatprep.subr.mxu0 0.0
        %4472 = vmatpush1.msra.mxu0 %v980
        %4473 = vmatprep.subr.mxu0 0.0
        %4474 = vmatpush1.msra.mxu0 %v981
        %4475 = vmatprep.subr.mxu0 0.0
        %4476 = vmatpush1.msra.mxu0 %v982
        %4477 = vmatprep.subr.mxu0 0.0
        %4478 = vmatpush1.msra.mxu0 %v983
        %4479 = vmatprep.subr.mxu0 0.0
        %4480 = vmatpush1.msra.mxu0 %v984
        %4481 = vmatprep.subr.mxu0 0.0
        %4482 = vmatpush1.msra.mxu0 %v985
        %4483 = vmatprep.subr.mxu0 0.0
        %4484 = vmatpush1.msra.mxu0 %v986
        %4485 = vmatprep.subr.mxu0 0.0
        %4486 = vmatpush1.msra.mxu0 %v987
        %4487 = vmatprep.subr.mxu0 0.0
        %4488 = vmatpush1.msra.mxu0 %v988
        %4489 = vmatprep.subr.mxu0 0.0
        %4490 = vmatpush1.msra.mxu0 %v989
        %4491 = vmatprep.subr.mxu0 0.0
        %4492 = vmatpush1.msra.mxu0 %v990
        %4493 = vmatprep.subr.mxu0 0.0
        %4494 = vmatpush1.msra.mxu0 %v991
        %4495 = vmatprep.mubr.f32.mxu0 %v3958
        %4496 = vmatmul.mubr.f32.gmra.mrb[0].mxu0 %v3957
        %v4497 = vpop.f32.mrb[0].mxu0
        %v4498 = vadd.f32 %v4423, %v4497
        %v4499 = vpop.f32.mrb[0].mxu0
        %4500 = vmatprep.mubr.f32.mxu0 %v3974
        %4501 = vmatmul.mubr.f32.gmra.mrb[0].mxu0 %v3973
        %v4502 = vpop.f32.mrb[0].mxu0
        %v4503 = vadd.f32 %v4428, %v4502
        %v4504 = vpop.f32.mrb[0].mxu0
        %4505 = vdwg.mxu0
        %4506 = vmatprep.subr.mxu0 0.0
        %4507 = vmatpush1.msra.mxu0 %v992
        %4508 = vmatprep.subr.mxu0 0.0
        %4509 = vmatpush1.msra.mxu0 %v993
        %4510 = vmatprep.subr.mxu0 0.0
        %4511 = vmatpush1.msra.mxu0 %v994
        %4512 = vmatprep.subr.mxu0 0.0
        %4513 = vmatpush1.msra.mxu0 %v995
        %4514 = vmatprep.subr.mxu0 0.0
        %4515 = vmatpush1.msra.mxu0 %v996
        %4516 = vmatprep.subr.mxu0 0.0
        %4517 = vmatpush1.msra.mxu0 %v997
        %4518 = vmatprep.subr.mxu0 0.0
        %4519 = vmatpush1.msra.mxu0 %v998
        %4520 = vmatprep.subr.mxu0 0.0
        %4521 = vmatpush1.msra.mxu0 %v999
        %4522 = vmatprep.subr.mxu0 0.0
        %4523 = vmatpush1.msra.mxu0 %v1000
        %4524 = vmatprep.subr.mxu0 0.0
        %4525 = vmatpush1.msra.mxu0 %v1001
        %4526 = vmatprep.subr.mxu0 0.0
        %4527 = vmatpush1.msra.mxu0 %v1002
        %4528 = vmatprep.subr.mxu0 0.0
        %4529 = vmatpush1.msra.mxu0 %v1003
        %4530 = vmatprep.subr.mxu0 0.0
        %4531 = vmatpush1.msra.mxu0 %v1004
        %4532 = vmatprep.subr.mxu0 0.0
        %4533 = vmatpush1.msra.mxu0 %v1005
        %4534 = vmatprep.subr.mxu0 0.0
        %4535 = vmatpush1.msra.mxu0 %v1006
        %4536 = vmatprep.subr.mxu0 0.0
        %4537 = vmatpush1.msra.mxu0 %v1007
        %4538 = vmatprep.subr.mxu0 0.0
        %4539 = vmatpush1.msra.mxu0 %v1008
        %4540 = vmatprep.subr.mxu0 0.0
        %4541 = vmatpush1.msra.mxu0 %v1009
        %4542 = vmatprep.subr.mxu0 0.0
        %4543 = vmatpush1.msra.mxu0 %v1010
        %4544 = vmatprep.subr.mxu0 0.0
        %4545 = vmatpush1.msra.mxu0 %v1011
        %4546 = vmatprep.subr.mxu0 0.0
        %4547 = vmatpush1.msra.mxu0 %v1012
        %4548 = vmatprep.subr.mxu0 0.0
        %4549 = vmatpush1.msra.mxu0 %v1013
        %4550 = vmatprep.subr.mxu0 0.0
        %4551 = vmatpush1.msra.mxu0 %v1014
        %4552 = vmatprep.subr.mxu0 0.0
        %4553 = vmatpush1.msra.mxu0 %v1015
        %4554 = vmatprep.subr.mxu0 0.0
        %4555 = vmatpush1.msra.mxu0 %v1016
        %4556 = vmatprep.subr.mxu0 0.0
        %4557 = vmatpush1.msra.mxu0 %v1017
        %4558 = vmatprep.subr.mxu0 0.0
        %4559 = vmatpush1.msra.mxu0 %v1018
        %4560 = vmatprep.subr.mxu0 0.0
        %4561 = vmatpush1.msra.mxu0 %v1019
        %4562 = vmatprep.subr.mxu0 0.0
        %4563 = vmatpush1.msra.mxu0 %v1020
        %4564 = vmatprep.subr.mxu0 0.0
        %4565 = vmatpush1.msra.mxu0 %v1021
        %4566 = vmatprep.subr.mxu0 0.0
        %4567 = vmatpush1.msra.mxu0 %v1022
        %4568 = vmatprep.subr.mxu0 0.0
        %4569 = vmatpush1.msra.mxu0 %v1023
        %4570 = vmatprep.mubr.f32.mxu0 %v3960
        %4571 = vmatmul.mubr.f32.gmra.mrb[0].mxu0 %v3959
        %v4572 = vpop.f32.mrb[0].mxu0
        %v4573 = vadd.f32 %v4498, %v4572
        %v4574 = vpop.f32.mrb[0].mxu0
        %4575 = vmatprep.mubr.f32.mxu0 %v3976
        %4576 = vmatmul.mubr.f32.gmra.mrb[0].mxu0 %v3975
        %v4577 = vpop.f32.mrb[0].mxu0
        %v4578 = vadd.f32 %v4503, %v4577
        %v4579 = vpop.f32.mrb[0].mxu0
        %4580 = vdwg.mxu0
        %v4581 = vadd.f32 %v3239, %v4573
        %v4582 = vadd.f32 %v3240, %v4578
        %v4583 = vsel %vm1030, %v4581, 0.0
        %4584 = vadd.xlane.f32.xlu0 %v4583
        %v4585 = vpop.xlane.xlu0 %4584
        %v4586 = vsel %vm1030, %v4582, 0.0
        %4587 = vadd.xlane.f32.xlu0 %v4586
        %v4588 = vpop.xlane.xlu0 %4587
        %v4589 = vmul.f32 %v4585, %v3208
        %v4590 = vmul.f32 %v4588, %v3208
        %v4591 = vsub.f32 %v4581, %v4589
        %v4592 = vsub.f32 %v4582, %v4590
        %v4593 = vmul.f32 %v4591, %v4591
        %v4594 = vmul.f32 %v4592, %v4592
        %v4595 = vsel %vm1030, %v4593, 0.0
        %4596 = vadd.xlane.f32.xlu0 %v4595
        %v4597 = vpop.xlane.xlu0 %4596
        %v4598 = vsel %vm1030, %v4594, 0.0
        %4599 = vadd.xlane.f32.xlu0 %v4598
        %v4600 = vpop.xlane.xlu0 %4599
        %v4601 = vmul.f32 %v4597, %v3208
        %v4602 = vmul.f32 %v4600, %v3208
        %v4603 = vadd.f32 %v4601, 1e-05
        %v4604 = vadd.f32 %v4602, 1e-05
        %v4605 = vrsqrt.pop %v4603
        %v4606 = vrsqrt.pop %v4604
        %v4607 = vmul.f32 %v4591, %v4605
        %v4608 = vmul.f32 %v4592, %v4606
        %v4609 = vlaneseq
        %v4610 = vshrl.u32 %v4609, 7
        %v4611 = vsub.s32 7, %v4610
        %v4612 = vrot.slane %v1024, %v4611
        %v4613 = vmul.f32 %v4607, %v4612
        %v4614 = vmul.f32 %v4608, %v4612
        %v4615 = vlaneseq
        %v4616 = vshrl.u32 %v4615, 7
        %v4617 = vsub.s32 0, %v4616
        %v4618 = vrot.slane %v1025, %v4617
        %v4619 = vadd.f32 %v4613, %v4618
        %v4620 = vadd.f32 %v4614, %v4618
        %4621 = vst.msk [vmem:[#allocation2] sm:$0xff] %vm1030, %v4619
        %4622 = vst.msk [vmem:[#allocation2 + $0x8] sm:$0xff] %vm1030, %v4620
        %p4623 = scmp.eq.s32.totalorder %s20, 1
        // Predicated region
        $region57: #{tpu_custom_call.1} parent=51 // pred_check
          %p4624 = pneg %p4623
        $region58: #{tpu_custom_call.1} parent=51 // pred_check_branch
          %4626 = sbr.rel (%p4624) target = $region60
        $region59: #{tpu_custom_call.1} parent=51 // pred_region
          %4627 = vst.msk [vmem:[#allocation3] sm:$0xff] %vm1030, %v4619
          %4628 = vst.msk [vmem:[#allocation3 + $0x8] sm:$0xff] %vm1030, %v4620
        $region60: #{tpu_custom_call.1} parent=51 // pred_fallthru
          _
        // Predicated region
        $region61: #{tpu_custom_call.1} parent=51 // pred_check
          %p4629 = pneg %p231
        $region62: #{tpu_custom_call.1} parent=51 // pred_check_branch
          %4631 = sbr.rel (%p4629) target = $region64
        $region63: #{tpu_custom_call.1} parent=51 // pred_region
          %s4633 = ssub.s32 256, 256
          %4634 = vsyncadd [#allocation4], %s4633
          %s4635 = sshll.u32 [#allocation3], 4
          %s4636 = int_to_ptr.vmem [resolvable:$true] %s4635
          %4641 = dma.vmem_to_hbm [thread:$0]  %s4636, 256, %s8, [#allocation4], 128, 128, 8
        $region64: #{tpu_custom_call.1} parent=51 // pred_fallthru
          _
        // Predicated region
        $region65: #{tpu_custom_call.1} parent=51 // pred_check
          %p4642 = pneg %p231
        $region66: #{tpu_custom_call.1} parent=51 // pred_check_branch
          %4644 = sbr.rel (%p4642) target = $region68
        $region67: #{tpu_custom_call.1} parent=51 // pred_region
          %4645 = dma.done [#allocation4], 256
        $region68: #{tpu_custom_call.1} parent=51 // pred_fallthru
          _
      $region52: #{tpu_custom_call.1} parent=5 // pred_fallthru
        _
      %p4646 = scmp.le.s32.totalorder 2, %s15
      // Predicated region
      $region69: #{tpu_custom_call.1} parent=5 // pred_check
        %p4647 = pneg %p4646
      $region70: #{tpu_custom_call.1} parent=5 // pred_check_branch
        %4649 = sbr.rel (%p4647) target = $region72
      $region71: #{tpu_custom_call.1} parent=5 // pred_region
        %s4650 = ssub.s32 %s15, 2
      $region72: #{tpu_custom_call.1} parent=5 // pred_fallthru
        _
    $region6: #{tpu_custom_call.1} parent=1 // loop_footer
      %s19 = sadd.s32 1, %s15
    $region7: #{tpu_custom_call.1} parent=1 // loop_footer_branch
      %14 = sbr.rel target = $region3
    $region8: #{tpu_custom_call.1} parent=1 // loop_exit
      _
    %4651 = vsyncpa [#allocation4], 1
    %s4652 = scalar_lea.sflag [#allocation4], 1
    %4653 = vsyncpa %s4652, 1

</llo_original>
